<compile_context>
chip_gen: v7x
topology: tpu7x:2x2x1
jax: 0.10.0
libtpu: 0.0.40
codegen_flags: <defaults>
</compile_context>

<pallas_src>
import functools
import math

import jax
import jax.numpy as jnp
from jax.experimental import pallas as pl
from jax.experimental.pallas import tpu as pltpu


# ---------------------------------------------------------------------------
# shared math helper
# ---------------------------------------------------------------------------
def _layer_norm(h, w, b, eps=1e-5):
    mu = jnp.mean(h, axis=-1, keepdims=True)
    var = jnp.mean((h - mu) ** 2, axis=-1, keepdims=True)
    return (h - mu) * jax.lax.rsqrt(var + eps) * w + b


# ---------------------------------------------------------------------------
# Pallas kernel: one batch-block (NB sequences) per grid step.
# ---------------------------------------------------------------------------
def cross_path_attention_kernel(
        n_heads,
        h_ref,
        wq_ref, wk_ref, wv_ref, bq_ref, bk_ref, bv_ref,   # (H,d,dh)/(H,1,dh)
        wo_ref, bo_ref,                                    # (H,dh,d)/(1,d)
        ln1w_ref, ln1b_ref,
        wff1_ref, bff1_ref, wff2_ref, bff2_ref,
        ln2w_ref, ln2b_ref,
        wp1_ref, bp1_ref, wp2_ref, bp2_ref,
        out_ref):
    h = h_ref[...]                                   # (nb, t, d)
    nb, t, d = h.shape
    dh = d // n_heads
    scale = 1.0 / math.sqrt(dh)

    hf = h.reshape(nb * t, d)                        # flatten batch*time rows

    # ---- multi-head self-attention ------------------------------------
    attn = jnp.zeros((nb * t, d), jnp.float32)
    for hi in range(n_heads):
        wq, wk, wv = wq_ref[hi], wk_ref[hi], wv_ref[hi]          # (d, dh)
        bq, bk, bv = bq_ref[hi], bk_ref[hi], bv_ref[hi]          # (1, dh)
        qh = (jnp.dot(hf, wq, preferred_element_type=jnp.float32) + bq
              ).reshape(nb, t, dh)
        kh = (jnp.dot(hf, wk, preferred_element_type=jnp.float32) + bk
              ).reshape(nb, t, dh)
        vh = (jnp.dot(hf, wv, preferred_element_type=jnp.float32) + bv
              ).reshape(nb, t, dh)

        s = jnp.einsum('bqd,bkd->bqk', qh, kh,
                       preferred_element_type=jnp.float32) * scale
        s = s - jnp.max(s, axis=-1, keepdims=True)
        p = jnp.exp(s)
        p = p * pl.reciprocal(jnp.sum(p, axis=-1, keepdims=True), approx=False)
        oh = jnp.einsum('bqk,bkd->bqd', p, vh,
                        preferred_element_type=jnp.float32)      # (nb, t, dh)

        # per-head slice of the output projection, accumulated full-width
        attn = attn + jnp.dot(oh.reshape(nb * t, dh), wo_ref[hi],
                              preferred_element_type=jnp.float32)
    attn = attn + bo_ref[...]
    h1 = _layer_norm(hf + attn, ln1w_ref[...], ln1b_ref[...])

    # ---- feed-forward ---------------------------------------------------
    ff = jnp.dot(h1, wff1_ref[...], preferred_element_type=jnp.float32) + bff1_ref[...]
    ff = jnp.maximum(ff, 0.0)
    ff = jnp.dot(ff, wff2_ref[...], preferred_element_type=jnp.float32) + bff2_ref[...]
    h2 = _layer_norm(h1 + ff, ln2w_ref[...], ln2b_ref[...])       # (nb*t, d)

    # ---- attention pooling ----------------------------------------------
    sc = jnp.tanh(jnp.dot(h2, wp1_ref[...], preferred_element_type=jnp.float32)
                  + bp1_ref[...])
    sc = jnp.dot(sc, wp2_ref[...], preferred_element_type=jnp.float32) + bp2_ref[...]
    sc = sc.reshape(nb, t, 1)                       # softmax over time (axis 1)
    sc = sc - jnp.max(sc, axis=1, keepdims=True)
    alpha = jnp.exp(sc)
    alpha = alpha * pl.reciprocal(jnp.sum(alpha, axis=1, keepdims=True),
                                  approx=False)

    z = jnp.sum(alpha * h2.reshape(nb, t, d), axis=1)             # (nb, d)
    out_ref[...] = z


# ---------------------------------------------------------------------------
# host-side weight packing (PyTorch layout -> kernel layout, done once)
# ---------------------------------------------------------------------------
def _pack_params(p, n_heads):
    d = p["out_proj_w"].shape[0]
    dh = d // n_heads
    in_w, in_b = p["in_proj_w"], p["in_proj_b"]

    def head_w(w):          # (d_out, d_in) -> (H, d_in, dh)
        return w.reshape(n_heads, dh, d).transpose(0, 2, 1)

    def head_b(b):          # (d,) -> (H, 1, dh)
        return b.reshape(n_heads, 1, dh)

    w_q, w_k, w_v = (head_w(in_w[i * d:(i + 1) * d]) for i in range(3))
    b_q, b_k, b_v = (head_b(in_b[i * d:(i + 1) * d]) for i in range(3))
    w_o = p["out_proj_w"].T.reshape(n_heads, dh, d)

    packed = [
        w_q, w_k, w_v, b_q, b_k, b_v, w_o,
        p["out_proj_b"].reshape(1, d),
        p["ln1_w"].reshape(1, d), p["ln1_b"].reshape(1, d),
        p["ff1_w"].T, p["ff1_b"].reshape(1, -1),
        p["ff2_w"].T, p["ff2_b"].reshape(1, d),
        p["ln2_w"].reshape(1, d), p["ln2_b"].reshape(1, d),
        p["pool1_w"].T, p["pool1_b"].reshape(1, d),
        p["pool2_w"].T, p["pool2_b"].reshape(1, 1),
    ]
    return [a.astype(jnp.float32) for a in packed]


def _pick_batch_block(B, cap=64):
    nb = min(B, cap)
    while B % nb:
        nb -= 1
    return nb


def cross_path_attention_forward(H, params, n_heads, batch_block=None):
    """H: (B, T, d_model) float32 -> (B, d_model) float32."""
    H = H.astype(jnp.float32)
    B, T, d = H.shape
    assert d % n_heads == 0
    nb = batch_block or _pick_batch_block(B)
    assert B % nb == 0

    weights = _pack_params(params, n_heads)

    in_specs = [pl.BlockSpec((nb, T, d), lambda i: (i, 0, 0))]
    in_specs += [pl.BlockSpec(w.shape, lambda i, nd=w.ndim: (0,) * nd)
                 for w in weights]
    out_spec = pl.BlockSpec((nb, d), lambda i: (i, 0))

    kernel = functools.partial(cross_path_attention_kernel, n_heads)
    return pl.pallas_call(
        kernel,
        out_shape=jax.ShapeDtypeStruct((B, d), jnp.float32),
        grid=(B // nb,),
        in_specs=in_specs,
        out_specs=out_spec,
        compiler_params=pltpu.CompilerParams(
            dimension_semantics=("parallel",)),
    )(H, *weights)


# ---------------------------------------------------------------------------
# Pure-JAX reference (PyTorch-layout weights) for a correctness check.
# ---------------------------------------------------------------------------
def cross_path_attention_reference(H, p, n_heads):
    B, T, d = H.shape
    dh = d // n_heads
    scale = 1.0 / math.sqrt(dh)

    qkv = jnp.einsum('btd,ed->bte', H, p["in_proj_w"]) + p["in_proj_b"]
    q, k, v = qkv[..., :d], qkv[..., d:2 * d], qkv[..., 2 * d:]

    def split_heads(m):
        return m.reshape(B, T, n_heads, dh).transpose(0, 2, 1, 3)

    qh, kh, vh = map(split_heads, (q, k, v))
    s = jnp.einsum('bhqd,bhkd->bhqk', qh, kh) * scale
    pr = jax.nn.softmax(s, axis=-1)
    o = jnp.einsum('bhqk,bhkd->bhqd', pr, vh)
    o = o.transpose(0, 2, 1, 3).reshape(B, T, d)
    attn = jnp.einsum('btd,ed->bte', o, p["out_proj_w"]) + p["out_proj_b"]
    h1 = _layer_norm(H + attn, p["ln1_w"], p["ln1_b"])

    ff = jnp.einsum('btd,fd->btf', h1, p["ff1_w"]) + p["ff1_b"]
    ff = jnp.maximum(ff, 0.0)
    ff = jnp.einsum('btf,df->btd', ff, p["ff2_w"]) + p["ff2_b"]
    h2 = _layer_norm(h1 + ff, p["ln2_w"], p["ln2_b"])

    sc = jnp.tanh(jnp.einsum('btd,ed->bte', h2, p["pool1_w"]) + p["pool1_b"])
    sc = (jnp.einsum('btd,od->bto', sc, p["pool2_w"]) + p["pool2_b"])[..., 0]
    alpha = jax.nn.softmax(sc, axis=1)
    return jnp.sum(alpha[..., None] * h2, axis=1)


# ---------------------------------------------------------------------------
# Deterministic parameter init (synthetic weights, PyTorch shapes).
# ---------------------------------------------------------------------------
def init_params(key, d_model, d_ff):
    def nrm(k, shape, scale=0.1):
        return (scale * jax.random.normal(k, shape)).astype(jnp.float32)

    ks = iter(jax.random.split(key, 12))
    return {
        "in_proj_w": nrm(next(ks), (3 * d_model, d_model)),
        "in_proj_b": nrm(next(ks), (3 * d_model,)),
        "out_proj_w": nrm(next(ks), (d_model, d_model)),
        "out_proj_b": nrm(next(ks), (d_model,)),
        "ln1_w": jnp.ones((d_model,), jnp.float32),
        "ln1_b": jnp.zeros((d_model,), jnp.float32),
        "ff1_w": nrm(next(ks), (d_ff, d_model)),
        "ff1_b": nrm(next(ks), (d_ff,)),
        "ff2_w": nrm(next(ks), (d_model, d_ff)),
        "ff2_b": nrm(next(ks), (d_model,)),
        "ln2_w": jnp.ones((d_model,), jnp.float32),
        "ln2_b": jnp.zeros((d_model,), jnp.float32),
        "pool1_w": nrm(next(ks), (d_model, d_model)),
        "pool1_b": nrm(next(ks), (d_model,)),
        "pool2_w": nrm(next(ks), (1, d_model)),
        "pool2_b": nrm(next(ks), (1,)),
    }


if __name__ == "__main__":
    d_model, n_heads, d_ff = 32, 4, 64
    B, T = 2, 8

    key = jax.random.PRNGKey(0)
    k_h, k_p = jax.random.split(key)
    H = jax.random.normal(k_h, (B, T, d_model), dtype=jnp.float32)
    params = init_params(k_p, d_model, d_ff)

    out = cross_path_attention_forward(H, params, n_heads)
    out = jax.block_until_ready(out)

    ref = jax.block_until_ready(cross_path_attention_reference(H, params, n_heads))
    assert out.shape == (B, d_model)
    assert bool(jnp.all(jnp.isfinite(out)))
    assert bool(jnp.allclose(out, ref, atol=2e-4, rtol=2e-4)), "mismatch vs reference"

    print("KERNEL_OK")
</pallas_src>

<mosaic_0001>
module attributes {stable_mosaic.version = 11 : i64} {
  func.func @cross_path_attention_kernel(%arg0: i32, %arg1: memref<2x8x32xf32, #tpu.memory_space<vmem>>, %arg2: memref<4x32x8xf32, #tpu.memory_space<vmem>>, %arg3: memref<4x32x8xf32, #tpu.memory_space<vmem>>, %arg4: memref<4x32x8xf32, #tpu.memory_space<vmem>>, %arg5: memref<4x1x8xf32, #tpu.memory_space<vmem>>, %arg6: memref<4x1x8xf32, #tpu.memory_space<vmem>>, %arg7: memref<4x1x8xf32, #tpu.memory_space<vmem>>, %arg8: memref<4x8x32xf32, #tpu.memory_space<vmem>>, %arg9: memref<1x32xf32, #tpu.memory_space<vmem>>, %arg10: memref<1x32xf32, #tpu.memory_space<vmem>>, %arg11: memref<1x32xf32, #tpu.memory_space<vmem>>, %arg12: memref<32x64xf32, #tpu.memory_space<vmem>>, %arg13: memref<1x64xf32, #tpu.memory_space<vmem>>, %arg14: memref<64x32xf32, #tpu.memory_space<vmem>>, %arg15: memref<1x32xf32, #tpu.memory_space<vmem>>, %arg16: memref<1x32xf32, #tpu.memory_space<vmem>>, %arg17: memref<1x32xf32, #tpu.memory_space<vmem>>, %arg18: memref<32x32xf32, #tpu.memory_space<vmem>>, %arg19: memref<1x32xf32, #tpu.memory_space<vmem>>, %arg20: memref<32x1xf32, #tpu.memory_space<vmem>>, %arg21: memref<1x1xf32, #tpu.memory_space<vmem>>, %arg22: memref<2x32xf32, #tpu.memory_space<vmem>>) attributes {dimension_semantics = [#tpu.dimension_semantics<parallel>], iteration_bounds = array<i64: 1>, scalar_prefetch = 0 : i64, scratch_operands = 0 : i64, tpu.core_type = #tpu.core_type<tc>, window_params = [{transform_indices = @transform_0, window_bounds = array<i64: 2, 8, 32>}, {pipeline_mode = #tpu.pipeline_mode<synchronous>, transform_indices = @transform_1, window_bounds = array<i64: 4, 32, 8>}, {pipeline_mode = #tpu.pipeline_mode<synchronous>, transform_indices = @transform_2, window_bounds = array<i64: 4, 32, 8>}, {pipeline_mode = #tpu.pipeline_mode<synchronous>, transform_indices = @transform_3, window_bounds = array<i64: 4, 32, 8>}, {pipeline_mode = #tpu.pipeline_mode<synchronous>, transform_indices = @transform_4, window_bounds = array<i64: 4, 1, 8>}, {pipeline_mode = #tpu.pipeline_mode<synchronous>, transform_indices = @transform_5, window_bounds = array<i64: 4, 1, 8>}, {pipeline_mode = #tpu.pipeline_mode<synchronous>, transform_indices = @transform_6, window_bounds = array<i64: 4, 1, 8>}, {pipeline_mode = #tpu.pipeline_mode<synchronous>, transform_indices = @transform_7, window_bounds = array<i64: 4, 8, 32>}, {pipeline_mode = #tpu.pipeline_mode<synchronous>, transform_indices = @transform_8, window_bounds = array<i64: 1, 32>}, {pipeline_mode = #tpu.pipeline_mode<synchronous>, transform_indices = @transform_9, window_bounds = array<i64: 1, 32>}, {pipeline_mode = #tpu.pipeline_mode<synchronous>, transform_indices = @transform_10, window_bounds = array<i64: 1, 32>}, {pipeline_mode = #tpu.pipeline_mode<synchronous>, transform_indices = @transform_11, window_bounds = array<i64: 32, 64>}, {pipeline_mode = #tpu.pipeline_mode<synchronous>, transform_indices = @transform_12, window_bounds = array<i64: 1, 64>}, {pipeline_mode = #tpu.pipeline_mode<synchronous>, transform_indices = @transform_13, window_bounds = array<i64: 64, 32>}, {pipeline_mode = #tpu.pipeline_mode<synchronous>, transform_indices = @transform_14, window_bounds = array<i64: 1, 32>}, {pipeline_mode = #tpu.pipeline_mode<synchronous>, transform_indices = @transform_15, window_bounds = array<i64: 1, 32>}, {pipeline_mode = #tpu.pipeline_mode<synchronous>, transform_indices = @transform_16, window_bounds = array<i64: 1, 32>}, {pipeline_mode = #tpu.pipeline_mode<synchronous>, transform_indices = @transform_17, window_bounds = array<i64: 32, 32>}, {pipeline_mode = #tpu.pipeline_mode<synchronous>, transform_indices = @transform_18, window_bounds = array<i64: 1, 32>}, {pipeline_mode = #tpu.pipeline_mode<synchronous>, transform_indices = @transform_19, window_bounds = array<i64: 32, 1>}, {pipeline_mode = #tpu.pipeline_mode<synchronous>, transform_indices = @transform_20, window_bounds = array<i64: 1, 1>}, {transform_indices = @transform_21, window_bounds = array<i64: 2, 32>}]} {
    %c0 = arith.constant 0 : index
    %c0_0 = arith.constant 0 : index
    %c0_1 = arith.constant 0 : index
    %0 = vector.load %arg1[%c0, %c0_0, %c0_1] : memref<2x8x32xf32, #tpu.memory_space<vmem>>, vector<2x8x32xf32>
    %1 = vector.shape_cast %0 : vector<2x8x32xf32> to vector<16x32xf32>
    %cst = arith.constant 0.000000e+00 : f32
    %2 = vector.broadcast %cst : f32 to vector<16x32xf32>
    %c0_2 = arith.constant 0 : index
    %c0_3 = arith.constant 0 : index
    %c0_4 = arith.constant 0 : index
    %3 = vector.load %arg2[%c0_2, %c0_3, %c0_4] : memref<4x32x8xf32, #tpu.memory_space<vmem>>, vector<1x32x8xf32>
    %4 = vector.shape_cast %3 : vector<1x32x8xf32> to vector<32x8xf32>
    %c0_5 = arith.constant 0 : index
    %c0_6 = arith.constant 0 : index
    %c0_7 = arith.constant 0 : index
    %5 = vector.load %arg3[%c0_5, %c0_6, %c0_7] : memref<4x32x8xf32, #tpu.memory_space<vmem>>, vector<1x32x8xf32>
    %6 = vector.shape_cast %5 : vector<1x32x8xf32> to vector<32x8xf32>
    %c0_8 = arith.constant 0 : index
    %c0_9 = arith.constant 0 : index
    %c0_10 = arith.constant 0 : index
    %7 = vector.load %arg4[%c0_8, %c0_9, %c0_10] : memref<4x32x8xf32, #tpu.memory_space<vmem>>, vector<1x32x8xf32>
    %8 = vector.shape_cast %7 : vector<1x32x8xf32> to vector<32x8xf32>
    %c0_11 = arith.constant 0 : index
    %c0_12 = arith.constant 0 : index
    %c0_13 = arith.constant 0 : index
    %9 = vector.load %arg5[%c0_11, %c0_12, %c0_13] : memref<4x1x8xf32, #tpu.memory_space<vmem>>, vector<1x1x8xf32>
    %10 = vector.shape_cast %9 : vector<1x1x8xf32> to vector<1x8xf32>
    %c0_14 = arith.constant 0 : index
    %c0_15 = arith.constant 0 : index
    %c0_16 = arith.constant 0 : index
    %11 = vector.load %arg6[%c0_14, %c0_15, %c0_16] : memref<4x1x8xf32, #tpu.memory_space<vmem>>, vector<1x1x8xf32>
    %12 = vector.shape_cast %11 : vector<1x1x8xf32> to vector<1x8xf32>
    %c0_17 = arith.constant 0 : index
    %c0_18 = arith.constant 0 : index
    %c0_19 = arith.constant 0 : index
    %13 = vector.load %arg7[%c0_17, %c0_18, %c0_19] : memref<4x1x8xf32, #tpu.memory_space<vmem>>, vector<1x1x8xf32>
    %14 = vector.shape_cast %13 : vector<1x1x8xf32> to vector<1x8xf32>
    %cst_20 = arith.constant dense<0.000000e+00> : vector<16x8xf32>
    %15 = tpu.matmul %1, %4, %cst_20 {dimension_numbers = #tpu.dot_dimension_numbers<[1], [0], [0], [1], [0, 0, 1, 1], [], []>} : vector<16x32xf32>, vector<32x8xf32>, vector<16x8xf32> -> vector<16x8xf32>
    %16 = vector.broadcast %10 : vector<1x8xf32> to vector<16x8xf32>
    %17 = arith.addf %15, %16 : vector<16x8xf32>
    %18 = vector.shape_cast %17 : vector<16x8xf32> to vector<2x8x8xf32>
    %cst_21 = arith.constant dense<0.000000e+00> : vector<16x8xf32>
    %19 = tpu.matmul %1, %6, %cst_21 {dimension_numbers = #tpu.dot_dimension_numbers<[1], [0], [0], [1], [0, 0, 1, 1], [], []>} : vector<16x32xf32>, vector<32x8xf32>, vector<16x8xf32> -> vector<16x8xf32>
    %20 = vector.broadcast %12 : vector<1x8xf32> to vector<16x8xf32>
    %21 = arith.addf %19, %20 : vector<16x8xf32>
    %22 = vector.shape_cast %21 : vector<16x8xf32> to vector<2x8x8xf32>
    %cst_22 = arith.constant dense<0.000000e+00> : vector<16x8xf32>
    %23 = tpu.matmul %1, %8, %cst_22 {dimension_numbers = #tpu.dot_dimension_numbers<[1], [0], [0], [1], [0, 0, 1, 1], [], []>} : vector<16x32xf32>, vector<32x8xf32>, vector<16x8xf32> -> vector<16x8xf32>
    %24 = vector.broadcast %14 : vector<1x8xf32> to vector<16x8xf32>
    %25 = arith.addf %23, %24 : vector<16x8xf32>
    %26 = vector.shape_cast %25 : vector<16x8xf32> to vector<2x8x8xf32>
    "tpu.trace_start"() <{level = 10 : i32, message = "bqd,bkd->bqk"}> : () -> ()
    %cst_23 = arith.constant dense<0.000000e+00> : vector<2x8x8xf32>
    %27 = tpu.matmul %18, %22, %cst_23 {dimension_numbers = #tpu.dot_dimension_numbers<[2], [2], [1], [1], [0, 0, 0, 1, 1, 1], [0], [0]>} : vector<2x8x8xf32>, vector<2x8x8xf32>, vector<2x8x8xf32> -> vector<2x8x8xf32>
    "tpu.trace_stop"() : () -> ()
    %cst_24 = arith.constant 0.353553385 : f32
    %28 = vector.broadcast %cst_24 : f32 to vector<2x8x8xf32>
    %29 = arith.mulf %27, %28 : vector<2x8x8xf32>
    %cst_25 = arith.constant dense<0xFF800000> : vector<2x8xf32>
    %30 = vector.multi_reduction <maximumf>, %29, %cst_25 [2] : vector<2x8x8xf32> to vector<2x8xf32>
    %31 = vector.shape_cast %30 : vector<2x8xf32> to vector<2x8x1xf32>
    %32 = vector.broadcast %31 : vector<2x8x1xf32> to vector<2x8x8xf32>
    %33 = arith.subf %29, %32 : vector<2x8x8xf32>
    %34 = math.exp %33 : vector<2x8x8xf32>
    %cst_26 = arith.constant dense<0.000000e+00> : vector<2x8xf32>
    %35 = vector.multi_reduction <add>, %34, %cst_26 [2] : vector<2x8x8xf32> to vector<2x8xf32>
    %36 = vector.shape_cast %35 : vector<2x8xf32> to vector<2x8x1xf32>
    %37 = tpu.reciprocal %36 : vector<2x8x1xf32> -> vector<2x8x1xf32>
    %38 = vector.broadcast %37 : vector<2x8x1xf32> to vector<2x8x8xf32>
    %39 = arith.mulf %34, %38 : vector<2x8x8xf32>
    "tpu.trace_start"() <{level = 10 : i32, message = "bqk,bkd->bqd"}> : () -> ()
    %cst_27 = arith.constant dense<0.000000e+00> : vector<2x8x8xf32>
    %40 = tpu.matmul %39, %26, %cst_27 {dimension_numbers = #tpu.dot_dimension_numbers<[2], [1], [1], [2], [0, 0, 0, 1, 1, 2], [0], [0]>} : vector<2x8x8xf32>, vector<2x8x8xf32>, vector<2x8x8xf32> -> vector<2x8x8xf32>
    "tpu.trace_stop"() : () -> ()
    %41 = vector.shape_cast %40 : vector<2x8x8xf32> to vector<16x8xf32>
    %c0_28 = arith.constant 0 : index
    %c0_29 = arith.constant 0 : index
    %c0_30 = arith.constant 0 : index
    %42 = vector.load %arg8[%c0_28, %c0_29, %c0_30] : memref<4x8x32xf32, #tpu.memory_space<vmem>>, vector<1x8x32xf32>
    %43 = vector.shape_cast %42 : vector<1x8x32xf32> to vector<8x32xf32>
    %cst_31 = arith.constant dense<0.000000e+00> : vector<16x32xf32>
    %44 = tpu.matmul %41, %43, %cst_31 {dimension_numbers = #tpu.dot_dimension_numbers<[1], [0], [0], [1], [0, 0, 1, 1], [], []>} : vector<16x8xf32>, vector<8x32xf32>, vector<16x32xf32> -> vector<16x32xf32>
    %45 = arith.addf %2, %44 : vector<16x32xf32>
    %c1 = arith.constant 1 : index
    %c0_32 = arith.constant 0 : index
    %c0_33 = arith.constant 0 : index
    %46 = vector.load %arg2[%c1, %c0_32, %c0_33] : memref<4x32x8xf32, #tpu.memory_space<vmem>>, vector<1x32x8xf32>
    %47 = vector.shape_cast %46 : vector<1x32x8xf32> to vector<32x8xf32>
    %c1_34 = arith.constant 1 : index
    %c0_35 = arith.constant 0 : index
    %c0_36 = arith.constant 0 : index
    %48 = vector.load %arg3[%c1_34, %c0_35, %c0_36] : memref<4x32x8xf32, #tpu.memory_space<vmem>>, vector<1x32x8xf32>
    %49 = vector.shape_cast %48 : vector<1x32x8xf32> to vector<32x8xf32>
    %c1_37 = arith.constant 1 : index
    %c0_38 = arith.constant 0 : index
    %c0_39 = arith.constant 0 : index
    %50 = vector.load %arg4[%c1_37, %c0_38, %c0_39] : memref<4x32x8xf32, #tpu.memory_space<vmem>>, vector<1x32x8xf32>
    %51 = vector.shape_cast %50 : vector<1x32x8xf32> to vector<32x8xf32>
    %c1_40 = arith.constant 1 : index
    %c0_41 = arith.constant 0 : index
    %c0_42 = arith.constant 0 : index
    %52 = vector.load %arg5[%c1_40, %c0_41, %c0_42] : memref<4x1x8xf32, #tpu.memory_space<vmem>>, vector<1x1x8xf32>
    %53 = vector.shape_cast %52 : vector<1x1x8xf32> to vector<1x8xf32>
    %c1_43 = arith.constant 1 : index
    %c0_44 = arith.constant 0 : index
    %c0_45 = arith.constant 0 : index
    %54 = vector.load %arg6[%c1_43, %c0_44, %c0_45] : memref<4x1x8xf32, #tpu.memory_space<vmem>>, vector<1x1x8xf32>
    %55 = vector.shape_cast %54 : vector<1x1x8xf32> to vector<1x8xf32>
    %c1_46 = arith.constant 1 : index
    %c0_47 = arith.constant 0 : index
    %c0_48 = arith.constant 0 : index
    %56 = vector.load %arg7[%c1_46, %c0_47, %c0_48] : memref<4x1x8xf32, #tpu.memory_space<vmem>>, vector<1x1x8xf32>
    %57 = vector.shape_cast %56 : vector<1x1x8xf32> to vector<1x8xf32>
    %cst_49 = arith.constant dense<0.000000e+00> : vector<16x8xf32>
    %58 = tpu.matmul %1, %47, %cst_49 {dimension_numbers = #tpu.dot_dimension_numbers<[1], [0], [0], [1], [0, 0, 1, 1], [], []>} : vector<16x32xf32>, vector<32x8xf32>, vector<16x8xf32> -> vector<16x8xf32>
    %59 = vector.broadcast %53 : vector<1x8xf32> to vector<16x8xf32>
    %60 = arith.addf %58, %59 : vector<16x8xf32>
    %61 = vector.shape_cast %60 : vector<16x8xf32> to vector<2x8x8xf32>
    %cst_50 = arith.constant dense<0.000000e+00> : vector<16x8xf32>
    %62 = tpu.matmul %1, %49, %cst_50 {dimension_numbers = #tpu.dot_dimension_numbers<[1], [0], [0], [1], [0, 0, 1, 1], [], []>} : vector<16x32xf32>, vector<32x8xf32>, vector<16x8xf32> -> vector<16x8xf32>
    %63 = vector.broadcast %55 : vector<1x8xf32> to vector<16x8xf32>
    %64 = arith.addf %62, %63 : vector<16x8xf32>
    %65 = vector.shape_cast %64 : vector<16x8xf32> to vector<2x8x8xf32>
    %cst_51 = arith.constant dense<0.000000e+00> : vector<16x8xf32>
    %66 = tpu.matmul %1, %51, %cst_51 {dimension_numbers = #tpu.dot_dimension_numbers<[1], [0], [0], [1], [0, 0, 1, 1], [], []>} : vector<16x32xf32>, vector<32x8xf32>, vector<16x8xf32> -> vector<16x8xf32>
    %67 = vector.broadcast %57 : vector<1x8xf32> to vector<16x8xf32>
    %68 = arith.addf %66, %67 : vector<16x8xf32>
    %69 = vector.shape_cast %68 : vector<16x8xf32> to vector<2x8x8xf32>
    "tpu.trace_start"() <{level = 10 : i32, message = "bqd,bkd->bqk"}> : () -> ()
    %cst_52 = arith.constant dense<0.000000e+00> : vector<2x8x8xf32>
    %70 = tpu.matmul %61, %65, %cst_52 {dimension_numbers = #tpu.dot_dimension_numbers<[2], [2], [1], [1], [0, 0, 0, 1, 1, 1], [0], [0]>} : vector<2x8x8xf32>, vector<2x8x8xf32>, vector<2x8x8xf32> -> vector<2x8x8xf32>
    "tpu.trace_stop"() : () -> ()
    %cst_53 = arith.constant 0.353553385 : f32
    %71 = vector.broadcast %cst_53 : f32 to vector<2x8x8xf32>
    %72 = arith.mulf %70, %71 : vector<2x8x8xf32>
    %cst_54 = arith.constant dense<0xFF800000> : vector<2x8xf32>
    %73 = vector.multi_reduction <maximumf>, %72, %cst_54 [2] : vector<2x8x8xf32> to vector<2x8xf32>
    %74 = vector.shape_cast %73 : vector<2x8xf32> to vector<2x8x1xf32>
    %75 = vector.broadcast %74 : vector<2x8x1xf32> to vector<2x8x8xf32>
    %76 = arith.subf %72, %75 : vector<2x8x8xf32>
    %77 = math.exp %76 : vector<2x8x8xf32>
    %cst_55 = arith.constant dense<0.000000e+00> : vector<2x8xf32>
    %78 = vector.multi_reduction <add>, %77, %cst_55 [2] : vector<2x8x8xf32> to vector<2x8xf32>
    %79 = vector.shape_cast %78 : vector<2x8xf32> to vector<2x8x1xf32>
    %80 = tpu.reciprocal %79 : vector<2x8x1xf32> -> vector<2x8x1xf32>
    %81 = vector.broadcast %80 : vector<2x8x1xf32> to vector<2x8x8xf32>
    %82 = arith.mulf %77, %81 : vector<2x8x8xf32>
    "tpu.trace_start"() <{level = 10 : i32, message = "bqk,bkd->bqd"}> : () -> ()
    %cst_56 = arith.constant dense<0.000000e+00> : vector<2x8x8xf32>
    %83 = tpu.matmul %82, %69, %cst_56 {dimension_numbers = #tpu.dot_dimension_numbers<[2], [1], [1], [2], [0, 0, 0, 1, 1, 2], [0], [0]>} : vector<2x8x8xf32>, vector<2x8x8xf32>, vector<2x8x8xf32> -> vector<2x8x8xf32>
    "tpu.trace_stop"() : () -> ()
    %84 = vector.shape_cast %83 : vector<2x8x8xf32> to vector<16x8xf32>
    %c1_57 = arith.constant 1 : index
    %c0_58 = arith.constant 0 : index
    %c0_59 = arith.constant 0 : index
    %85 = vector.load %arg8[%c1_57, %c0_58, %c0_59] : memref<4x8x32xf32, #tpu.memory_space<vmem>>, vector<1x8x32xf32>
    %86 = vector.shape_cast %85 : vector<1x8x32xf32> to vector<8x32xf32>
    %cst_60 = arith.constant dense<0.000000e+00> : vector<16x32xf32>
    %87 = tpu.matmul %84, %86, %cst_60 {dimension_numbers = #tpu.dot_dimension_numbers<[1], [0], [0], [1], [0, 0, 1, 1], [], []>} : vector<16x8xf32>, vector<8x32xf32>, vector<16x32xf32> -> vector<16x32xf32>
    %88 = arith.addf %45, %87 : vector<16x32xf32>
    %c2 = arith.constant 2 : index
    %c0_61 = arith.constant 0 : index
    %c0_62 = arith.constant 0 : index
    %89 = vector.load %arg2[%c2, %c0_61, %c0_62] : memref<4x32x8xf32, #tpu.memory_space<vmem>>, vector<1x32x8xf32>
    %90 = vector.shape_cast %89 : vector<1x32x8xf32> to vector<32x8xf32>
    %c2_63 = arith.constant 2 : index
    %c0_64 = arith.constant 0 : index
    %c0_65 = arith.constant 0 : index
    %91 = vector.load %arg3[%c2_63, %c0_64, %c0_65] : memref<4x32x8xf32, #tpu.memory_space<vmem>>, vector<1x32x8xf32>
    %92 = vector.shape_cast %91 : vector<1x32x8xf32> to vector<32x8xf32>
    %c2_66 = arith.constant 2 : index
    %c0_67 = arith.constant 0 : index
    %c0_68 = arith.constant 0 : index
    %93 = vector.load %arg4[%c2_66, %c0_67, %c0_68] : memref<4x32x8xf32, #tpu.memory_space<vmem>>, vector<1x32x8xf32>
    %94 = vector.shape_cast %93 : vector<1x32x8xf32> to vector<32x8xf32>
    %c2_69 = arith.constant 2 : index
    %c0_70 = arith.constant 0 : index
    %c0_71 = arith.constant 0 : index
    %95 = vector.load %arg5[%c2_69, %c0_70, %c0_71] : memref<4x1x8xf32, #tpu.memory_space<vmem>>, vector<1x1x8xf32>
    %96 = vector.shape_cast %95 : vector<1x1x8xf32> to vector<1x8xf32>
    %c2_72 = arith.constant 2 : index
    %c0_73 = arith.constant 0 : index
    %c0_74 = arith.constant 0 : index
    %97 = vector.load %arg6[%c2_72, %c0_73, %c0_74] : memref<4x1x8xf32, #tpu.memory_space<vmem>>, vector<1x1x8xf32>
    %98 = vector.shape_cast %97 : vector<1x1x8xf32> to vector<1x8xf32>
    %c2_75 = arith.constant 2 : index
    %c0_76 = arith.constant 0 : index
    %c0_77 = arith.constant 0 : index
    %99 = vector.load %arg7[%c2_75, %c0_76, %c0_77] : memref<4x1x8xf32, #tpu.memory_space<vmem>>, vector<1x1x8xf32>
    %100 = vector.shape_cast %99 : vector<1x1x8xf32> to vector<1x8xf32>
    %cst_78 = arith.constant dense<0.000000e+00> : vector<16x8xf32>
    %101 = tpu.matmul %1, %90, %cst_78 {dimension_numbers = #tpu.dot_dimension_numbers<[1], [0], [0], [1], [0, 0, 1, 1], [], []>} : vector<16x32xf32>, vector<32x8xf32>, vector<16x8xf32> -> vector<16x8xf32>
    %102 = vector.broadcast %96 : vector<1x8xf32> to vector<16x8xf32>
    %103 = arith.addf %101, %102 : vector<16x8xf32>
    %104 = vector.shape_cast %103 : vector<16x8xf32> to vector<2x8x8xf32>
    %cst_79 = arith.constant dense<0.000000e+00> : vector<16x8xf32>
    %105 = tpu.matmul %1, %92, %cst_79 {dimension_numbers = #tpu.dot_dimension_numbers<[1], [0], [0], [1], [0, 0, 1, 1], [], []>} : vector<16x32xf32>, vector<32x8xf32>, vector<16x8xf32> -> vector<16x8xf32>
    %106 = vector.broadcast %98 : vector<1x8xf32> to vector<16x8xf32>
    %107 = arith.addf %105, %106 : vector<16x8xf32>
    %108 = vector.shape_cast %107 : vector<16x8xf32> to vector<2x8x8xf32>
    %cst_80 = arith.constant dense<0.000000e+00> : vector<16x8xf32>
    %109 = tpu.matmul %1, %94, %cst_80 {dimension_numbers = #tpu.dot_dimension_numbers<[1], [0], [0], [1], [0, 0, 1, 1], [], []>} : vector<16x32xf32>, vector<32x8xf32>, vector<16x8xf32> -> vector<16x8xf32>
    %110 = vector.broadcast %100 : vector<1x8xf32> to vector<16x8xf32>
    %111 = arith.addf %109, %110 : vector<16x8xf32>
    %112 = vector.shape_cast %111 : vector<16x8xf32> to vector<2x8x8xf32>
    "tpu.trace_start"() <{level = 10 : i32, message = "bqd,bkd->bqk"}> : () -> ()
    %cst_81 = arith.constant dense<0.000000e+00> : vector<2x8x8xf32>
    %113 = tpu.matmul %104, %108, %cst_81 {dimension_numbers = #tpu.dot_dimension_numbers<[2], [2], [1], [1], [0, 0, 0, 1, 1, 1], [0], [0]>} : vector<2x8x8xf32>, vector<2x8x8xf32>, vector<2x8x8xf32> -> vector<2x8x8xf32>
    "tpu.trace_stop"() : () -> ()
    %cst_82 = arith.constant 0.353553385 : f32
    %114 = vector.broadcast %cst_82 : f32 to vector<2x8x8xf32>
    %115 = arith.mulf %113, %114 : vector<2x8x8xf32>
    %cst_83 = arith.constant dense<0xFF800000> : vector<2x8xf32>
    %116 = vector.multi_reduction <maximumf>, %115, %cst_83 [2] : vector<2x8x8xf32> to vector<2x8xf32>
    %117 = vector.shape_cast %116 : vector<2x8xf32> to vector<2x8x1xf32>
    %118 = vector.broadcast %117 : vector<2x8x1xf32> to vector<2x8x8xf32>
    %119 = arith.subf %115, %118 : vector<2x8x8xf32>
    %120 = math.exp %119 : vector<2x8x8xf32>
    %cst_84 = arith.constant dense<0.000000e+00> : vector<2x8xf32>
    %121 = vector.multi_reduction <add>, %120, %cst_84 [2] : vector<2x8x8xf32> to vector<2x8xf32>
    %122 = vector.shape_cast %121 : vector<2x8xf32> to vector<2x8x1xf32>
    %123 = tpu.reciprocal %122 : vector<2x8x1xf32> -> vector<2x8x1xf32>
    %124 = vector.broadcast %123 : vector<2x8x1xf32> to vector<2x8x8xf32>
    %125 = arith.mulf %120, %124 : vector<2x8x8xf32>
    "tpu.trace_start"() <{level = 10 : i32, message = "bqk,bkd->bqd"}> : () -> ()
    %cst_85 = arith.constant dense<0.000000e+00> : vector<2x8x8xf32>
    %126 = tpu.matmul %125, %112, %cst_85 {dimension_numbers = #tpu.dot_dimension_numbers<[2], [1], [1], [2], [0, 0, 0, 1, 1, 2], [0], [0]>} : vector<2x8x8xf32>, vector<2x8x8xf32>, vector<2x8x8xf32> -> vector<2x8x8xf32>
    "tpu.trace_stop"() : () -> ()
    %127 = vector.shape_cast %126 : vector<2x8x8xf32> to vector<16x8xf32>
    %c2_86 = arith.constant 2 : index
    %c0_87 = arith.constant 0 : index
    %c0_88 = arith.constant 0 : index
    %128 = vector.load %arg8[%c2_86, %c0_87, %c0_88] : memref<4x8x32xf32, #tpu.memory_space<vmem>>, vector<1x8x32xf32>
    %129 = vector.shape_cast %128 : vector<1x8x32xf32> to vector<8x32xf32>
    %cst_89 = arith.constant dense<0.000000e+00> : vector<16x32xf32>
    %130 = tpu.matmul %127, %129, %cst_89 {dimension_numbers = #tpu.dot_dimension_numbers<[1], [0], [0], [1], [0, 0, 1, 1], [], []>} : vector<16x8xf32>, vector<8x32xf32>, vector<16x32xf32> -> vector<16x32xf32>
    %131 = arith.addf %88, %130 : vector<16x32xf32>
    %c3 = arith.constant 3 : index
    %c0_90 = arith.constant 0 : index
    %c0_91 = arith.constant 0 : index
    %132 = vector.load %arg2[%c3, %c0_90, %c0_91] : memref<4x32x8xf32, #tpu.memory_space<vmem>>, vector<1x32x8xf32>
    %133 = vector.shape_cast %132 : vector<1x32x8xf32> to vector<32x8xf32>
    %c3_92 = arith.constant 3 : index
    %c0_93 = arith.constant 0 : index
    %c0_94 = arith.constant 0 : index
    %134 = vector.load %arg3[%c3_92, %c0_93, %c0_94] : memref<4x32x8xf32, #tpu.memory_space<vmem>>, vector<1x32x8xf32>
    %135 = vector.shape_cast %134 : vector<1x32x8xf32> to vector<32x8xf32>
    %c3_95 = arith.constant 3 : index
    %c0_96 = arith.constant 0 : index
    %c0_97 = arith.constant 0 : index
    %136 = vector.load %arg4[%c3_95, %c0_96, %c0_97] : memref<4x32x8xf32, #tpu.memory_space<vmem>>, vector<1x32x8xf32>
    %137 = vector.shape_cast %136 : vector<1x32x8xf32> to vector<32x8xf32>
    %c3_98 = arith.constant 3 : index
    %c0_99 = arith.constant 0 : index
    %c0_100 = arith.constant 0 : index
    %138 = vector.load %arg5[%c3_98, %c0_99, %c0_100] : memref<4x1x8xf32, #tpu.memory_space<vmem>>, vector<1x1x8xf32>
    %139 = vector.shape_cast %138 : vector<1x1x8xf32> to vector<1x8xf32>
    %c3_101 = arith.constant 3 : index
    %c0_102 = arith.constant 0 : index
    %c0_103 = arith.constant 0 : index
    %140 = vector.load %arg6[%c3_101, %c0_102, %c0_103] : memref<4x1x8xf32, #tpu.memory_space<vmem>>, vector<1x1x8xf32>
    %141 = vector.shape_cast %140 : vector<1x1x8xf32> to vector<1x8xf32>
    %c3_104 = arith.constant 3 : index
    %c0_105 = arith.constant 0 : index
    %c0_106 = arith.constant 0 : index
    %142 = vector.load %arg7[%c3_104, %c0_105, %c0_106] : memref<4x1x8xf32, #tpu.memory_space<vmem>>, vector<1x1x8xf32>
    %143 = vector.shape_cast %142 : vector<1x1x8xf32> to vector<1x8xf32>
    %cst_107 = arith.constant dense<0.000000e+00> : vector<16x8xf32>
    %144 = tpu.matmul %1, %133, %cst_107 {dimension_numbers = #tpu.dot_dimension_numbers<[1], [0], [0], [1], [0, 0, 1, 1], [], []>} : vector<16x32xf32>, vector<32x8xf32>, vector<16x8xf32> -> vector<16x8xf32>
    %145 = vector.broadcast %139 : vector<1x8xf32> to vector<16x8xf32>
    %146 = arith.addf %144, %145 : vector<16x8xf32>
    %147 = vector.shape_cast %146 : vector<16x8xf32> to vector<2x8x8xf32>
    %cst_108 = arith.constant dense<0.000000e+00> : vector<16x8xf32>
    %148 = tpu.matmul %1, %135, %cst_108 {dimension_numbers = #tpu.dot_dimension_numbers<[1], [0], [0], [1], [0, 0, 1, 1], [], []>} : vector<16x32xf32>, vector<32x8xf32>, vector<16x8xf32> -> vector<16x8xf32>
    %149 = vector.broadcast %141 : vector<1x8xf32> to vector<16x8xf32>
    %150 = arith.addf %148, %149 : vector<16x8xf32>
    %151 = vector.shape_cast %150 : vector<16x8xf32> to vector<2x8x8xf32>
    %cst_109 = arith.constant dense<0.000000e+00> : vector<16x8xf32>
    %152 = tpu.matmul %1, %137, %cst_109 {dimension_numbers = #tpu.dot_dimension_numbers<[1], [0], [0], [1], [0, 0, 1, 1], [], []>} : vector<16x32xf32>, vector<32x8xf32>, vector<16x8xf32> -> vector<16x8xf32>
    %153 = vector.broadcast %143 : vector<1x8xf32> to vector<16x8xf32>
    %154 = arith.addf %152, %153 : vector<16x8xf32>
    %155 = vector.shape_cast %154 : vector<16x8xf32> to vector<2x8x8xf32>
    "tpu.trace_start"() <{level = 10 : i32, message = "bqd,bkd->bqk"}> : () -> ()
    %cst_110 = arith.constant dense<0.000000e+00> : vector<2x8x8xf32>
    %156 = tpu.matmul %147, %151, %cst_110 {dimension_numbers = #tpu.dot_dimension_numbers<[2], [2], [1], [1], [0, 0, 0, 1, 1, 1], [0], [0]>} : vector<2x8x8xf32>, vector<2x8x8xf32>, vector<2x8x8xf32> -> vector<2x8x8xf32>
    "tpu.trace_stop"() : () -> ()
    %cst_111 = arith.constant 0.353553385 : f32
    %157 = vector.broadcast %cst_111 : f32 to vector<2x8x8xf32>
    %158 = arith.mulf %156, %157 : vector<2x8x8xf32>
    %cst_112 = arith.constant dense<0xFF800000> : vector<2x8xf32>
    %159 = vector.multi_reduction <maximumf>, %158, %cst_112 [2] : vector<2x8x8xf32> to vector<2x8xf32>
    %160 = vector.shape_cast %159 : vector<2x8xf32> to vector<2x8x1xf32>
    %161 = vector.broadcast %160 : vector<2x8x1xf32> to vector<2x8x8xf32>
    %162 = arith.subf %158, %161 : vector<2x8x8xf32>
    %163 = math.exp %162 : vector<2x8x8xf32>
    %cst_113 = arith.constant dense<0.000000e+00> : vector<2x8xf32>
    %164 = vector.multi_reduction <add>, %163, %cst_113 [2] : vector<2x8x8xf32> to vector<2x8xf32>
    %165 = vector.shape_cast %164 : vector<2x8xf32> to vector<2x8x1xf32>
    %166 = tpu.reciprocal %165 : vector<2x8x1xf32> -> vector<2x8x1xf32>
    %167 = vector.broadcast %166 : vector<2x8x1xf32> to vector<2x8x8xf32>
    %168 = arith.mulf %163, %167 : vector<2x8x8xf32>
    "tpu.trace_start"() <{level = 10 : i32, message = "bqk,bkd->bqd"}> : () -> ()
    %cst_114 = arith.constant dense<0.000000e+00> : vector<2x8x8xf32>
    %169 = tpu.matmul %168, %155, %cst_114 {dimension_numbers = #tpu.dot_dimension_numbers<[2], [1], [1], [2], [0, 0, 0, 1, 1, 2], [0], [0]>} : vector<2x8x8xf32>, vector<2x8x8xf32>, vector<2x8x8xf32> -> vector<2x8x8xf32>
    "tpu.trace_stop"() : () -> ()
    %170 = vector.shape_cast %169 : vector<2x8x8xf32> to vector<16x8xf32>
    %c3_115 = arith.constant 3 : index
    %c0_116 = arith.constant 0 : index
    %c0_117 = arith.constant 0 : index
    %171 = vector.load %arg8[%c3_115, %c0_116, %c0_117] : memref<4x8x32xf32, #tpu.memory_space<vmem>>, vector<1x8x32xf32>
    %172 = vector.shape_cast %171 : vector<1x8x32xf32> to vector<8x32xf32>
    %cst_118 = arith.constant dense<0.000000e+00> : vector<16x32xf32>
    %173 = tpu.matmul %170, %172, %cst_118 {dimension_numbers = #tpu.dot_dimension_numbers<[1], [0], [0], [1], [0, 0, 1, 1], [], []>} : vector<16x8xf32>, vector<8x32xf32>, vector<16x32xf32> -> vector<16x32xf32>
    %174 = arith.addf %131, %173 : vector<16x32xf32>
    %c0_119 = arith.constant 0 : index
    %c0_120 = arith.constant 0 : index
    %175 = vector.load %arg9[%c0_119, %c0_120] : memref<1x32xf32, #tpu.memory_space<vmem>>, vector<1x32xf32>
    %176 = vector.broadcast %175 : vector<1x32xf32> to vector<16x32xf32>
    %177 = arith.addf %174, %176 : vector<16x32xf32>
    %178 = arith.addf %1, %177 : vector<16x32xf32>
    %c0_121 = arith.constant 0 : index
    %c0_122 = arith.constant 0 : index
    %179 = vector.load %arg10[%c0_121, %c0_122] : memref<1x32xf32, #tpu.memory_space<vmem>>, vector<1x32xf32>
    %c0_123 = arith.constant 0 : index
    %c0_124 = arith.constant 0 : index
    %180 = vector.load %arg11[%c0_123, %c0_124] : memref<1x32xf32, #tpu.memory_space<vmem>>, vector<1x32xf32>
    %cst_125 = arith.constant dense<0.000000e+00> : vector<16xf32>
    %181 = vector.multi_reduction <add>, %178, %cst_125 [1] : vector<16x32xf32> to vector<16xf32>
    %182 = vector.shape_cast %181 : vector<16xf32> to vector<16x1xf32>
    %cst_126 = arith.constant 3.200000e+01 : f32
    %183 = vector.broadcast %cst_126 : f32 to vector<16x1xf32>
    %184 = arith.divf %182, %183 : vector<16x1xf32>
    %185 = vector.broadcast %184 : vector<16x1xf32> to vector<16x32xf32>
    %186 = arith.subf %178, %185 : vector<16x32xf32>
    %187 = arith.mulf %186, %186 : vector<16x32xf32>
    %cst_127 = arith.constant dense<0.000000e+00> : vector<16xf32>
    %188 = vector.multi_reduction <add>, %187, %cst_127 [1] : vector<16x32xf32> to vector<16xf32>
    %189 = vector.shape_cast %188 : vector<16xf32> to vector<16x1xf32>
    %cst_128 = arith.constant 3.200000e+01 : f32
    %190 = vector.broadcast %cst_128 : f32 to vector<16x1xf32>
    %191 = arith.divf %189, %190 : vector<16x1xf32>
    %192 = vector.broadcast %184 : vector<16x1xf32> to vector<16x32xf32>
    %193 = arith.subf %178, %192 : vector<16x32xf32>
    %cst_129 = arith.constant 9.99999974E-6 : f32
    %194 = vector.broadcast %cst_129 : f32 to vector<16x1xf32>
    %195 = arith.addf %191, %194 : vector<16x1xf32>
    %196 = math.rsqrt %195 : vector<16x1xf32>
    %197 = vector.broadcast %196 : vector<16x1xf32> to vector<16x32xf32>
    %198 = arith.mulf %193, %197 : vector<16x32xf32>
    %199 = vector.broadcast %179 : vector<1x32xf32> to vector<16x32xf32>
    %200 = arith.mulf %198, %199 : vector<16x32xf32>
    %201 = vector.broadcast %180 : vector<1x32xf32> to vector<16x32xf32>
    %202 = arith.addf %200, %201 : vector<16x32xf32>
    %c0_130 = arith.constant 0 : index
    %c0_131 = arith.constant 0 : index
    %203 = vector.load %arg12[%c0_130, %c0_131] : memref<32x64xf32, #tpu.memory_space<vmem>>, vector<32x64xf32>
    %cst_132 = arith.constant dense<0.000000e+00> : vector<16x64xf32>
    %204 = tpu.matmul %202, %203, %cst_132 {dimension_numbers = #tpu.dot_dimension_numbers<[1], [0], [0], [1], [0, 0, 1, 1], [], []>} : vector<16x32xf32>, vector<32x64xf32>, vector<16x64xf32> -> vector<16x64xf32>
    %c0_133 = arith.constant 0 : index
    %c0_134 = arith.constant 0 : index
    %205 = vector.load %arg13[%c0_133, %c0_134] : memref<1x64xf32, #tpu.memory_space<vmem>>, vector<1x64xf32>
    %206 = vector.broadcast %205 : vector<1x64xf32> to vector<16x64xf32>
    %207 = arith.addf %204, %206 : vector<16x64xf32>
    %cst_135 = arith.constant 0.000000e+00 : f32
    %208 = vector.broadcast %cst_135 : f32 to vector<16x64xf32>
    %209 = arith.maximumf %207, %208 : vector<16x64xf32>
    %c0_136 = arith.constant 0 : index
    %c0_137 = arith.constant 0 : index
    %210 = vector.load %arg14[%c0_136, %c0_137] : memref<64x32xf32, #tpu.memory_space<vmem>>, vector<64x32xf32>
    %cst_138 = arith.constant dense<0.000000e+00> : vector<16x32xf32>
    %211 = tpu.matmul %209, %210, %cst_138 {dimension_numbers = #tpu.dot_dimension_numbers<[1], [0], [0], [1], [0, 0, 1, 1], [], []>} : vector<16x64xf32>, vector<64x32xf32>, vector<16x32xf32> -> vector<16x32xf32>
    %c0_139 = arith.constant 0 : index
    %c0_140 = arith.constant 0 : index
    %212 = vector.load %arg15[%c0_139, %c0_140] : memref<1x32xf32, #tpu.memory_space<vmem>>, vector<1x32xf32>
    %213 = vector.broadcast %212 : vector<1x32xf32> to vector<16x32xf32>
    %214 = arith.addf %211, %213 : vector<16x32xf32>
    %215 = arith.addf %202, %214 : vector<16x32xf32>
    %c0_141 = arith.constant 0 : index
    %c0_142 = arith.constant 0 : index
    %216 = vector.load %arg16[%c0_141, %c0_142] : memref<1x32xf32, #tpu.memory_space<vmem>>, vector<1x32xf32>
    %c0_143 = arith.constant 0 : index
    %c0_144 = arith.constant 0 : index
    %217 = vector.load %arg17[%c0_143, %c0_144] : memref<1x32xf32, #tpu.memory_space<vmem>>, vector<1x32xf32>
    %cst_145 = arith.constant dense<0.000000e+00> : vector<16xf32>
    %218 = vector.multi_reduction <add>, %215, %cst_145 [1] : vector<16x32xf32> to vector<16xf32>
    %219 = vector.shape_cast %218 : vector<16xf32> to vector<16x1xf32>
    %cst_146 = arith.constant 3.200000e+01 : f32
    %220 = vector.broadcast %cst_146 : f32 to vector<16x1xf32>
    %221 = arith.divf %219, %220 : vector<16x1xf32>
    %222 = vector.broadcast %221 : vector<16x1xf32> to vector<16x32xf32>
    %223 = arith.subf %215, %222 : vector<16x32xf32>
    %224 = arith.mulf %223, %223 : vector<16x32xf32>
    %cst_147 = arith.constant dense<0.000000e+00> : vector<16xf32>
    %225 = vector.multi_reduction <add>, %224, %cst_147 [1] : vector<16x32xf32> to vector<16xf32>
    %226 = vector.shape_cast %225 : vector<16xf32> to vector<16x1xf32>
    %cst_148 = arith.constant 3.200000e+01 : f32
    %227 = vector.broadcast %cst_148 : f32 to vector<16x1xf32>
    %228 = arith.divf %226, %227 : vector<16x1xf32>
    %229 = vector.broadcast %221 : vector<16x1xf32> to vector<16x32xf32>
    %230 = arith.subf %215, %229 : vector<16x32xf32>
    %cst_149 = arith.constant 9.99999974E-6 : f32
    %231 = vector.broadcast %cst_149 : f32 to vector<16x1xf32>
    %232 = arith.addf %228, %231 : vector<16x1xf32>
    %233 = math.rsqrt %232 : vector<16x1xf32>
    %234 = vector.broadcast %233 : vector<16x1xf32> to vector<16x32xf32>
    %235 = arith.mulf %230, %234 : vector<16x32xf32>
    %236 = vector.broadcast %216 : vector<1x32xf32> to vector<16x32xf32>
    %237 = arith.mulf %235, %236 : vector<16x32xf32>
    %238 = vector.broadcast %217 : vector<1x32xf32> to vector<16x32xf32>
    %239 = arith.addf %237, %238 : vector<16x32xf32>
    %c0_150 = arith.constant 0 : index
    %c0_151 = arith.constant 0 : index
    %240 = vector.load %arg18[%c0_150, %c0_151] : memref<32x32xf32, #tpu.memory_space<vmem>>, vector<32x32xf32>
    %cst_152 = arith.constant dense<0.000000e+00> : vector<16x32xf32>
    %241 = tpu.matmul %239, %240, %cst_152 {dimension_numbers = #tpu.dot_dimension_numbers<[1], [0], [0], [1], [0, 0, 1, 1], [], []>} : vector<16x32xf32>, vector<32x32xf32>, vector<16x32xf32> -> vector<16x32xf32>
    %c0_153 = arith.constant 0 : index
    %c0_154 = arith.constant 0 : index
    %242 = vector.load %arg19[%c0_153, %c0_154] : memref<1x32xf32, #tpu.memory_space<vmem>>, vector<1x32xf32>
    %243 = vector.broadcast %242 : vector<1x32xf32> to vector<16x32xf32>
    %244 = arith.addf %241, %243 : vector<16x32xf32>
    %245 = math.tanh %244 : vector<16x32xf32>
    %c0_155 = arith.constant 0 : index
    %c0_156 = arith.constant 0 : index
    %246 = vector.load %arg20[%c0_155, %c0_156] : memref<32x1xf32, #tpu.memory_space<vmem>>, vector<32x1xf32>
    %cst_157 = arith.constant dense<0.000000e+00> : vector<16x1xf32>
    %247 = tpu.matmul %245, %246, %cst_157 {dimension_numbers = #tpu.dot_dimension_numbers<[1], [0], [0], [1], [0, 0, 1, 1], [], []>} : vector<16x32xf32>, vector<32x1xf32>, vector<16x1xf32> -> vector<16x1xf32>
    %c0_158 = arith.constant 0 : index
    %c0_159 = arith.constant 0 : index
    %248 = vector.load %arg21[%c0_158, %c0_159] : memref<1x1xf32, #tpu.memory_space<vmem>>, vector<1x1xf32>
    %249 = vector.broadcast %248 : vector<1x1xf32> to vector<16x1xf32>
    %250 = arith.addf %247, %249 : vector<16x1xf32>
    %251 = vector.shape_cast %250 : vector<16x1xf32> to vector<2x8x1xf32>
    %cst_160 = arith.constant dense<0xFF800000> : vector<2x1xf32>
    %252 = vector.multi_reduction <maximumf>, %251, %cst_160 [1] : vector<2x8x1xf32> to vector<2x1xf32>
    %253 = vector.shape_cast %252 : vector<2x1xf32> to vector<2x1x1xf32>
    %254 = vector.broadcast %253 : vector<2x1x1xf32> to vector<2x8x1xf32>
    %255 = arith.subf %251, %254 : vector<2x8x1xf32>
    %256 = math.exp %255 : vector<2x8x1xf32>
    %cst_161 = arith.constant dense<0.000000e+00> : vector<2x1xf32>
    %257 = vector.multi_reduction <add>, %256, %cst_161 [1] : vector<2x8x1xf32> to vector<2x1xf32>
    %258 = vector.shape_cast %257 : vector<2x1xf32> to vector<2x1x1xf32>
    %259 = tpu.reciprocal %258 : vector<2x1x1xf32> -> vector<2x1x1xf32>
    %260 = vector.broadcast %259 : vector<2x1x1xf32> to vector<2x8x1xf32>
    %261 = arith.mulf %256, %260 : vector<2x8x1xf32>
    %262 = vector.shape_cast %239 : vector<16x32xf32> to vector<2x8x32xf32>
    %263 = vector.broadcast %261 : vector<2x8x1xf32> to vector<2x8x32xf32>
    %264 = arith.mulf %263, %262 : vector<2x8x32xf32>
    %cst_162 = arith.constant dense<0.000000e+00> : vector<2x32xf32>
    %265 = vector.multi_reduction <add>, %264, %cst_162 [1] : vector<2x8x32xf32> to vector<2x32xf32>
    %c0_163 = arith.constant 0 : index
    %c0_164 = arith.constant 0 : index
    %266 = vector.load %arg22[%c0_163, %c0_164] : memref<2x32xf32, #tpu.memory_space<vmem>>, vector<2x32xf32>
    tpu.vector_store %arg22[%c0_163, %c0_164], %265 {strides = array<i32>} : memref<2x32xf32, #tpu.memory_space<vmem>>, vector<2x32xf32>,
    return
  }
  func.func @transform_0(%arg0: i32) -> (i32, i32, i32) {
    %c0_i32 = arith.constant 0 : i32
    %c0_i32_0 = arith.constant 0 : i32
    %c0_i32_1 = arith.constant 0 : i32
    return %arg0, %c0_i32, %c0_i32_0 : i32, i32, i32
  }
  func.func @transform_1(%arg0: i32) -> (i32, i32, i32) {
    %c0_i32 = arith.constant 0 : i32
    %c0_i32_0 = arith.constant 0 : i32
    %c0_i32_1 = arith.constant 0 : i32
    %c0_i32_2 = arith.constant 0 : i32
    return %c0_i32, %c0_i32_0, %c0_i32_1 : i32, i32, i32
  }
  func.func @transform_2(%arg0: i32) -> (i32, i32, i32) {
    %c0_i32 = arith.constant 0 : i32
    %c0_i32_0 = arith.constant 0 : i32
    %c0_i32_1 = arith.constant 0 : i32
    %c0_i32_2 = arith.constant 0 : i32
    return %c0_i32, %c0_i32_0, %c0_i32_1 : i32, i32, i32
  }
  func.func @transform_3(%arg0: i32) -> (i32, i32, i32) {
    %c0_i32 = arith.constant 0 : i32
    %c0_i32_0 = arith.constant 0 : i32
    %c0_i32_1 = arith.constant 0 : i32
    %c0_i32_2 = arith.constant 0 : i32
    return %c0_i32, %c0_i32_0, %c0_i32_1 : i32, i32, i32
  }
  func.func @transform_4(%arg0: i32) -> (i32, i32, i32) {
    %c0_i32 = arith.constant 0 : i32
    %c0_i32_0 = arith.constant 0 : i32
    %c0_i32_1 = arith.constant 0 : i32
    %c0_i32_2 = arith.constant 0 : i32
    return %c0_i32, %c0_i32_0, %c0_i32_1 : i32, i32, i32
  }
  func.func @transform_5(%arg0: i32) -> (i32, i32, i32) {
    %c0_i32 = arith.constant 0 : i32
    %c0_i32_0 = arith.constant 0 : i32
    %c0_i32_1 = arith.constant 0 : i32
    %c0_i32_2 = arith.constant 0 : i32
    return %c0_i32, %c0_i32_0, %c0_i32_1 : i32, i32, i32
  }
  func.func @transform_6(%arg0: i32) -> (i32, i32, i32) {
    %c0_i32 = arith.constant 0 : i32
    %c0_i32_0 = arith.constant 0 : i32
    %c0_i32_1 = arith.constant 0 : i32
    %c0_i32_2 = arith.constant 0 : i32
    return %c0_i32, %c0_i32_0, %c0_i32_1 : i32, i32, i32
  }
  func.func @transform_7(%arg0: i32) -> (i32, i32, i32) {
    %c0_i32 = arith.constant 0 : i32
    %c0_i32_0 = arith.constant 0 : i32
    %c0_i32_1 = arith.constant 0 : i32
    %c0_i32_2 = arith.constant 0 : i32
    return %c0_i32, %c0_i32_0, %c0_i32_1 : i32, i32, i32
  }
  func.func @transform_8(%arg0: i32) -> (i32, i32) {
    %c0_i32 = arith.constant 0 : i32
    %c0_i32_0 = arith.constant 0 : i32
    %c0_i32_1 = arith.constant 0 : i32
    return %c0_i32, %c0_i32_0 : i32, i32
  }
  func.func @transform_9(%arg0: i32) -> (i32, i32) {
    %c0_i32 = arith.constant 0 : i32
    %c0_i32_0 = arith.constant 0 : i32
    %c0_i32_1 = arith.constant 0 : i32
    return %c0_i32, %c0_i32_0 : i32, i32
  }
  func.func @transform_10(%arg0: i32) -> (i32, i32) {
    %c0_i32 = arith.constant 0 : i32
    %c0_i32_0 = arith.constant 0 : i32
    %c0_i32_1 = arith.constant 0 : i32
    return %c0_i32, %c0_i32_0 : i32, i32
  }
  func.func @transform_11(%arg0: i32) -> (i32, i32) {
    %c0_i32 = arith.constant 0 : i32
    %c0_i32_0 = arith.constant 0 : i32
    %c0_i32_1 = arith.constant 0 : i32
    return %c0_i32, %c0_i32_0 : i32, i32
  }
  func.func @transform_12(%arg0: i32) -> (i32, i32) {
    %c0_i32 = arith.constant 0 : i32
    %c0_i32_0 = arith.constant 0 : i32
    %c0_i32_1 = arith.constant 0 : i32
    return %c0_i32, %c0_i32_0 : i32, i32
  }
  func.func @transform_13(%arg0: i32) -> (i32, i32) {
    %c0_i32 = arith.constant 0 : i32
    %c0_i32_0 = arith.constant 0 : i32
    %c0_i32_1 = arith.constant 0 : i32
    return %c0_i32, %c0_i32_0 : i32, i32
  }
  func.func @transform_14(%arg0: i32) -> (i32, i32) {
    %c0_i32 = arith.constant 0 : i32
    %c0_i32_0 = arith.constant 0 : i32
    %c0_i32_1 = arith.constant 0 : i32
    return %c0_i32, %c0_i32_0 : i32, i32
  }
  func.func @transform_15(%arg0: i32) -> (i32, i32) {
    %c0_i32 = arith.constant 0 : i32
    %c0_i32_0 = arith.constant 0 : i32
    %c0_i32_1 = arith.constant 0 : i32
    return %c0_i32, %c0_i32_0 : i32, i32
  }
  func.func @transform_16(%arg0: i32) -> (i32, i32) {
    %c0_i32 = arith.constant 0 : i32
    %c0_i32_0 = arith.constant 0 : i32
    %c0_i32_1 = arith.constant 0 : i32
    return %c0_i32, %c0_i32_0 : i32, i32
  }
  func.func @transform_17(%arg0: i32) -> (i32, i32) {
    %c0_i32 = arith.constant 0 : i32
    %c0_i32_0 = arith.constant 0 : i32
    %c0_i32_1 = arith.constant 0 : i32
    return %c0_i32, %c0_i32_0 : i32, i32
  }
  func.func @transform_18(%arg0: i32) -> (i32, i32) {
    %c0_i32 = arith.constant 0 : i32
    %c0_i32_0 = arith.constant 0 : i32
    %c0_i32_1 = arith.constant 0 : i32
    return %c0_i32, %c0_i32_0 : i32, i32
  }
  func.func @transform_19(%arg0: i32) -> (i32, i32) {
    %c0_i32 = arith.constant 0 : i32
    %c0_i32_0 = arith.constant 0 : i32
    %c0_i32_1 = arith.constant 0 : i32
    return %c0_i32, %c0_i32_0 : i32, i32
  }
  func.func @transform_20(%arg0: i32) -> (i32, i32) {
    %c0_i32 = arith.constant 0 : i32
    %c0_i32_0 = arith.constant 0 : i32
    %c0_i32_1 = arith.constant 0 : i32
    return %c0_i32, %c0_i32_0 : i32, i32
  }
  func.func @transform_21(%arg0: i32) -> (i32, i32) {
    %c0_i32 = arith.constant 0 : i32
    %c0_i32_0 = arith.constant 0 : i32
    return %arg0, %c0_i32 : i32, i32
  }
}

</mosaic_0001>

<llo_original>
// kernel: tpu_custom_call.1
$region0: #{tpu_custom_call.1}
  #allocation0 [shape = 'u32[]', space=smem, size = 0x4, offset = 0x4, fixed_abs, tag = 'smem constant byte address 0x4 - core index']
  #allocation1 [shape = 'u32[144,128]{1,0:T(1,128)}', space=vmem, size = 0x12000, scoped, tag = 'internal scratch']
  #allocation2 [shape = 'f32[1,1]{1,0:T(1,128)S(1)}', space=vmem, size = 0x200, scoped, tag = 'scoped memory for tpu_custom_call.1']
  %s0 = inlined_call_operand.vmem [shape: f32[2,8,32], index: 0, kind: input, shape index: {}]
  %s1 = inlined_call_operand.vmem [shape: f32[4,32,8], index: 1, kind: input, shape index: {}]
  %s2 = inlined_call_operand.vmem [shape: f32[4,32,8], index: 2, kind: input, shape index: {}]
  %s3 = inlined_call_operand.vmem [shape: f32[4,32,8], index: 3, kind: input, shape index: {}]
  %s4 = inlined_call_operand.vmem [shape: f32[4,1,8], index: 4, kind: input, shape index: {}]
  %s5 = inlined_call_operand.vmem [shape: f32[4,1,8], index: 5, kind: input, shape index: {}]
  %s6 = inlined_call_operand.vmem [shape: f32[4,1,8], index: 6, kind: input, shape index: {}]
  %s7 = inlined_call_operand.vmem [shape: f32[4,8,32], index: 7, kind: input, shape index: {}]
  %s8 = inlined_call_operand.vmem [shape: f32[1,32], index: 8, kind: input, shape index: {}]
  %s9 = inlined_call_operand.vmem [shape: f32[1,32], index: 9, kind: input, shape index: {}]
  %s10 = inlined_call_operand.vmem [shape: f32[1,32], index: 10, kind: input, shape index: {}]
  %s11 = inlined_call_operand.vmem [shape: f32[32,64], index: 11, kind: input, shape index: {}]
  %s12 = inlined_call_operand.vmem [shape: f32[1,64], index: 12, kind: input, shape index: {}]
  %s13 = inlined_call_operand.vmem [shape: f32[64,32], index: 13, kind: input, shape index: {}]
  %s14 = inlined_call_operand.vmem [shape: f32[1,32], index: 14, kind: input, shape index: {}]
  %s15 = inlined_call_operand.vmem [shape: f32[1,32], index: 15, kind: input, shape index: {}]
  %s16 = inlined_call_operand.vmem [shape: f32[1,32], index: 16, kind: input, shape index: {}]
  %s17 = inlined_call_operand.vmem [shape: f32[32,32], index: 17, kind: input, shape index: {}]
  %s18 = inlined_call_operand.vmem [shape: f32[1,32], index: 18, kind: input, shape index: {}]
  %s19 = inlined_call_operand.vmem [shape: f32[32,1], index: 19, kind: input, shape index: {}]
  %s20 = inlined_call_operand.<no memory space> [shape: f32[1,1], index: 20, kind: input, shape index: {}]
  %s21 = inlined_call_operand.hbm [shape: f32[2,32], index: 21, kind: output, shape index: {}]
  %s22 = sld [smem:[#allocation0]]
  $region94: #{tpu_custom_call.1} parent=0
    _
  %s24 = ssub.s32 1, %s22
  %s25 = scalar_select 0, %s24, %s22
  %v26 = vstv %s20
  %27 = vst [vmem:[#allocation2] sm:$0x1] %v26
  $region1: #{tpu_custom_call.1} parent=0
    #allocation3 [shape = 'u8[1024]{0}', space=vmem, size = 0x400, scoped, tag = 'output window, operand 0, single buffered']
    #allocation4 [shape = 's32[1]{0}', space=sflag, size = 0x4, scoped, tag = 'scoped memory for tpu_custom_call.1']
    %28 = vsyncpa [#allocation4], 0
    // Predicated region
    $region2: #{tpu_custom_call.1} parent=1 // pred_check
      _
    $region3: #{tpu_custom_call.1} parent=1 // pred_check_branch
      %30 = sbr.rel (0) target = $region5
    $region4: #{tpu_custom_call.1} parent=1 // pred_region
      _
    $region5: #{tpu_custom_call.1} parent=1 // pred_fallthru
      _
    // Predicated region
    $region6: #{tpu_custom_call.1} parent=1 // pred_check
      _
    $region7: #{tpu_custom_call.1} parent=1 // pred_check_branch
      %32 = sbr.rel (0) target = $region9
    $region8: #{tpu_custom_call.1} parent=1 // pred_region
      _
    $region9: #{tpu_custom_call.1} parent=1 // pred_fallthru
      _
    // Predicated region
    $region10: #{tpu_custom_call.1} parent=1 // pred_check
      _
    $region11: #{tpu_custom_call.1} parent=1 // pred_check_branch
      %34 = sbr.rel (0) target = $region13
    $region12: #{tpu_custom_call.1} parent=1 // pred_region
      _
    $region13: #{tpu_custom_call.1} parent=1 // pred_fallthru
      _
    // Predicated region
    $region14: #{tpu_custom_call.1} parent=1 // pred_check
      _
    $region15: #{tpu_custom_call.1} parent=1 // pred_check_branch
      %36 = sbr.rel (0) target = $region17
    $region16: #{tpu_custom_call.1} parent=1 // pred_region
      _
    $region17: #{tpu_custom_call.1} parent=1 // pred_fallthru
      _
    // Predicated region
    $region18: #{tpu_custom_call.1} parent=1 // pred_check
      _
    $region19: #{tpu_custom_call.1} parent=1 // pred_check_branch
      %38 = sbr.rel (0) target = $region21
    $region20: #{tpu_custom_call.1} parent=1 // pred_region
      _
    $region21: #{tpu_custom_call.1} parent=1 // pred_fallthru
      _
    // Predicated region
    $region22: #{tpu_custom_call.1} parent=1 // pred_check
      _
    $region23: #{tpu_custom_call.1} parent=1 // pred_check_branch
      %40 = sbr.rel (0) target = $region25
    $region24: #{tpu_custom_call.1} parent=1 // pred_region
      _
    $region25: #{tpu_custom_call.1} parent=1 // pred_fallthru
      _
    // Predicated region
    $region26: #{tpu_custom_call.1} parent=1 // pred_check
      _
    $region27: #{tpu_custom_call.1} parent=1 // pred_check_branch
      %42 = sbr.rel (0) target = $region29
    $region28: #{tpu_custom_call.1} parent=1 // pred_region
      _
    $region29: #{tpu_custom_call.1} parent=1 // pred_fallthru
      _
    // Predicated region
    $region30: #{tpu_custom_call.1} parent=1 // pred_check
      _
    $region31: #{tpu_custom_call.1} parent=1 // pred_check_branch
      %44 = sbr.rel (0) target = $region33
    $region32: #{tpu_custom_call.1} parent=1 // pred_region
      _
    $region33: #{tpu_custom_call.1} parent=1 // pred_fallthru
      _
    // Predicated region
    $region34: #{tpu_custom_call.1} parent=1 // pred_check
      _
    $region35: #{tpu_custom_call.1} parent=1 // pred_check_branch
      %46 = sbr.rel (0) target = $region37
    $region36: #{tpu_custom_call.1} parent=1 // pred_region
      _
    $region37: #{tpu_custom_call.1} parent=1 // pred_fallthru
      _
    // Predicated region
    $region38: #{tpu_custom_call.1} parent=1 // pred_check
      _
    $region39: #{tpu_custom_call.1} parent=1 // pred_check_branch
      %48 = sbr.rel (0) target = $region41
    $region40: #{tpu_custom_call.1} parent=1 // pred_region
      _
    $region41: #{tpu_custom_call.1} parent=1 // pred_fallthru
      _
    // Predicated region
    $region42: #{tpu_custom_call.1} parent=1 // pred_check
      _
    $region43: #{tpu_custom_call.1} parent=1 // pred_check_branch
      %50 = sbr.rel (0) target = $region45
    $region44: #{tpu_custom_call.1} parent=1 // pred_region
      _
    $region45: #{tpu_custom_call.1} parent=1 // pred_fallthru
      _
    // Predicated region
    $region46: #{tpu_custom_call.1} parent=1 // pred_check
      _
    $region47: #{tpu_custom_call.1} parent=1 // pred_check_branch
      %52 = sbr.rel (0) target = $region49
    $region48: #{tpu_custom_call.1} parent=1 // pred_region
      _
    $region49: #{tpu_custom_call.1} parent=1 // pred_fallthru
      _
    // Predicated region
    $region50: #{tpu_custom_call.1} parent=1 // pred_check
      _
    $region51: #{tpu_custom_call.1} parent=1 // pred_check_branch
      %54 = sbr.rel (0) target = $region53
    $region52: #{tpu_custom_call.1} parent=1 // pred_region
      _
    $region53: #{tpu_custom_call.1} parent=1 // pred_fallthru
      _
    // Predicated region
    $region54: #{tpu_custom_call.1} parent=1 // pred_check
      _
    $region55: #{tpu_custom_call.1} parent=1 // pred_check_branch
      %56 = sbr.rel (0) target = $region57
    $region56: #{tpu_custom_call.1} parent=1 // pred_region
      _
    $region57: #{tpu_custom_call.1} parent=1 // pred_fallthru
      _
    // Predicated region
    $region58: #{tpu_custom_call.1} parent=1 // pred_check
      _
    $region59: #{tpu_custom_call.1} parent=1 // pred_check_branch
      %58 = sbr.rel (0) target = $region61
    $region60: #{tpu_custom_call.1} parent=1 // pred_region
      _
    $region61: #{tpu_custom_call.1} parent=1 // pred_fallthru
      _
    // Predicated region
    $region62: #{tpu_custom_call.1} parent=1 // pred_check
      _
    $region63: #{tpu_custom_call.1} parent=1 // pred_check_branch
      %60 = sbr.rel (0) target = $region65
    $region64: #{tpu_custom_call.1} parent=1 // pred_region
      _
    $region65: #{tpu_custom_call.1} parent=1 // pred_fallthru
      _
    // Predicated region
    $region66: #{tpu_custom_call.1} parent=1 // pred_check
      _
    $region67: #{tpu_custom_call.1} parent=1 // pred_check_branch
      %62 = sbr.rel (0) target = $region69
    $region68: #{tpu_custom_call.1} parent=1 // pred_region
      _
    $region69: #{tpu_custom_call.1} parent=1 // pred_fallthru
      _
    // Predicated region
    $region70: #{tpu_custom_call.1} parent=1 // pred_check
      _
    $region71: #{tpu_custom_call.1} parent=1 // pred_check_branch
      %64 = sbr.rel (0) target = $region73
    $region72: #{tpu_custom_call.1} parent=1 // pred_region
      _
    $region73: #{tpu_custom_call.1} parent=1 // pred_fallthru
      _
    // Predicated region
    $region74: #{tpu_custom_call.1} parent=1 // pred_check
      _
    $region75: #{tpu_custom_call.1} parent=1 // pred_check_branch
      %66 = sbr.rel (0) target = $region77
    $region76: #{tpu_custom_call.1} parent=1 // pred_region
      _
    $region77: #{tpu_custom_call.1} parent=1 // pred_fallthru
      _
    // Predicated region
    $region78: #{tpu_custom_call.1} parent=1 // pred_check
      _
    $region79: #{tpu_custom_call.1} parent=1 // pred_check_branch
      %68 = sbr.rel (0) target = $region81
    $region80: #{tpu_custom_call.1} parent=1 // pred_region
      _
    $region81: #{tpu_custom_call.1} parent=1 // pred_fallthru
      _
    // Predicated region
    $region82: #{tpu_custom_call.1} parent=1 // pred_check
      _
    $region83: #{tpu_custom_call.1} parent=1 // pred_check_branch
      %70 = sbr.rel (0) target = $region85
    $region84: #{tpu_custom_call.1} parent=1 // pred_region
      _
    $region85: #{tpu_custom_call.1} parent=1 // pred_fallthru
      _
    %v71 = vld [vmem:[%s0] sm:$0xff]
    %v72 = vld [vmem:[%s0 + $0x8] sm:$0xff]
    %v73 = vld [vmem:[%s1] sm:$0xff]
    %v74 = vld [vmem:[%s1 + $0x8] sm:$0xff]
    %v75 = vld [vmem:[%s1 + $0x10] sm:$0xff]
    %v76 = vld [vmem:[%s1 + $0x18] sm:$0xff]
    %v77 = vld [vmem:[%s2] sm:$0xff]
    %v78 = vld [vmem:[%s2 + $0x8] sm:$0xff]
    %v79 = vld [vmem:[%s2 + $0x10] sm:$0xff]
    %v80 = vld [vmem:[%s2 + $0x18] sm:$0xff]
    %v81 = vld [vmem:[%s3] sm:$0xff]
    %v82 = vld [vmem:[%s3 + $0x8] sm:$0xff]
    %v83 = vld [vmem:[%s3 + $0x10] sm:$0xff]
    %v84 = vld [vmem:[%s3 + $0x18] sm:$0xff]
    %v85 = vld [vmem:[%s4] sm:$0x1]
    %v86 = vld [vmem:[%s5] sm:$0x1]
    %v87 = vld [vmem:[%s6] sm:$0x1]
    %v89 = vlaneseq
    %v90 = vshrl.u32 %v89, 7
    %v91 = vsub.s32 0, %v90
    %v92 = vrot.slane %v85, %v91
    %vm94 = vcmask 261120
    %v96 = vsel %vm94, %v71, 0
    %v99 = vsel %vm94, %v72, 0
    %101 = vmatprep.subr.mxu0 0.0
    %102 = vmatpush1.msra.mxu0 %v73
    %103 = vmatprep.subr.mxu0 0.0
    %104 = vmatpush1.msra.mxu0 %v74
    %105 = vmatprep.subr.mxu0 0.0
    %106 = vmatpush1.msra.mxu0 %v75
    %107 = vmatprep.subr.mxu0 0.0
    %108 = vmatpush1.msra.mxu0 %v76
    %109 = vmatprep.subr.mxu0 0.0
    %110 = vmatpush1.msra.mxu0 0.0
    %111 = vmatprep.subr.mxu0 0.0
    %112 = vmatpush1.msra.mxu0 0.0
    %113 = vmatprep.subr.mxu0 0.0
    %114 = vmatpush1.msra.mxu0 0.0
    %115 = vmatprep.subr.mxu0 0.0
    %116 = vmatpush1.msra.mxu0 0.0
    %117 = vmatprep.subr.mxu0 0.0
    %118 = vmatpush1.msra.mxu0 0.0
    %119 = vmatprep.subr.mxu0 0.0
    %120 = vmatpush1.msra.mxu0 0.0
    %121 = vmatprep.subr.mxu0 0.0
    %122 = vmatpush1.msra.mxu0 0.0
    %123 = vmatprep.subr.mxu0 0.0
    %124 = vmatpush1.msra.mxu0 0.0
    %125 = vmatprep.subr.mxu0 0.0
    %126 = vmatpush1.msra.mxu0 0.0
    %127 = vmatprep.subr.mxu0 0.0
    %128 = vmatpush1.msra.mxu0 0.0
    %129 = vmatprep.subr.mxu0 0.0
    %130 = vmatpush1.msra.mxu0 0.0
    %131 = vmatprep.subr.mxu0 0.0
    %132 = vmatpush1.msra.mxu0 0.0
    %133 = vmatprep.subr.mxu0 0.0
    %134 = vmatpush1.msra.mxu0 0.0
    %135 = vmatprep.subr.mxu0 0.0
    %136 = vmatpush1.msra.mxu0 0.0
    %137 = vmatprep.subr.mxu0 0.0
    %138 = vmatpush1.msra.mxu0 0.0
    %139 = vmatprep.subr.mxu0 0.0
    %140 = vmatpush1.msra.mxu0 0.0
    %141 = vmatprep.subr.mxu0 0.0
    %142 = vmatpush1.msra.mxu0 0.0
    %143 = vmatprep.subr.mxu0 0.0
    %144 = vmatpush1.msra.mxu0 0.0
    %145 = vmatprep.subr.mxu0 0.0
    %146 = vmatpush1.msra.mxu0 0.0
    %147 = vmatprep.subr.mxu0 0.0
    %148 = vmatpush1.msra.mxu0 0.0
    %149 = vmatprep.subr.mxu0 0.0
    %150 = vmatpush1.msra.mxu0 0.0
    %151 = vmatprep.subr.mxu0 0.0
    %152 = vmatpush1.msra.mxu0 0.0
    %153 = vmatprep.subr.mxu0 0.0
    %154 = vmatpush1.msra.mxu0 0.0
    %155 = vmatprep.subr.mxu0 0.0
    %156 = vmatpush1.msra.mxu0 0.0
    %157 = vmatprep.subr.mxu0 0.0
    %158 = vmatpush1.msra.mxu0 0.0
    %159 = vmatprep.subr.mxu0 0.0
    %160 = vmatpush1.msra.mxu0 0.0
    %161 = vmatprep.subr.mxu0 0.0
    %162 = vmatpush1.msra.mxu0 0.0
    %163 = vmatprep.subr.mxu0 0.0
    %164 = vmatpush1.msra.mxu0 0.0
    %165 = vmatprep.mubr.f32.mxu0 0.0
    %166 = vmatmul.mubr.f32.gmra.mrb[0].mxu0 %v96
    %v167 = vpop.f32.mrb[0].mxu0
    %v168 = vadd.f32 %v92, %v167
    %v169 = vpop.f32.mrb[0].mxu0
    %170 = vmatprep.mubr.f32.mxu0 0.0
    %171 = vmatmul.mubr.f32.gmra.mrb[0].mxu0 %v99
    %v172 = vpop.f32.mrb[0].mxu0
    %v173 = vadd.f32 %v92, %v172
    %v174 = vpop.f32.mrb[0].mxu0
    %175 = vdwg.mxu0
    %v177 = vlaneseq
    %v178 = vshrl.u32 %v177, 7
    %v179 = vsub.s32 0, %v178
    %v180 = vrot.slane %v86, %v179
    %182 = vmatprep.subr.mxu0 0.0
    %183 = vmatpush1.msra.mxu0 %v77
    %184 = vmatprep.subr.mxu0 0.0
    %185 = vmatpush1.msra.mxu0 %v78
    %186 = vmatprep.subr.mxu0 0.0
    %187 = vmatpush1.msra.mxu0 %v79
    %188 = vmatprep.subr.mxu0 0.0
    %189 = vmatpush1.msra.mxu0 %v80
    %190 = vmatprep.subr.mxu0 0.0
    %191 = vmatpush1.msra.mxu0 0.0
    %192 = vmatprep.subr.mxu0 0.0
    %193 = vmatpush1.msra.mxu0 0.0
    %194 = vmatprep.subr.mxu0 0.0
    %195 = vmatpush1.msra.mxu0 0.0
    %196 = vmatprep.subr.mxu0 0.0
    %197 = vmatpush1.msra.mxu0 0.0
    %198 = vmatprep.subr.mxu0 0.0
    %199 = vmatpush1.msra.mxu0 0.0
    %200 = vmatprep.subr.mxu0 0.0
    %201 = vmatpush1.msra.mxu0 0.0
    %202 = vmatprep.subr.mxu0 0.0
    %203 = vmatpush1.msra.mxu0 0.0
    %204 = vmatprep.subr.mxu0 0.0
    %205 = vmatpush1.msra.mxu0 0.0
    %206 = vmatprep.subr.mxu0 0.0
    %207 = vmatpush1.msra.mxu0 0.0
    %208 = vmatprep.subr.mxu0 0.0
    %209 = vmatpush1.msra.mxu0 0.0
    %210 = vmatprep.subr.mxu0 0.0
    %211 = vmatpush1.msra.mxu0 0.0
    %212 = vmatprep.subr.mxu0 0.0
    %213 = vmatpush1.msra.mxu0 0.0
    %214 = vmatprep.subr.mxu0 0.0
    %215 = vmatpush1.msra.mxu0 0.0
    %216 = vmatprep.subr.mxu0 0.0
    %217 = vmatpush1.msra.mxu0 0.0
    %218 = vmatprep.subr.mxu0 0.0
    %219 = vmatpush1.msra.mxu0 0.0
    %220 = vmatprep.subr.mxu0 0.0
    %221 = vmatpush1.msra.mxu0 0.0
    %222 = vmatprep.subr.mxu0 0.0
    %223 = vmatpush1.msra.mxu0 0.0
    %224 = vmatprep.subr.mxu0 0.0
    %225 = vmatpush1.msra.mxu0 0.0
    %226 = vmatprep.subr.mxu0 0.0
    %227 = vmatpush1.msra.mxu0 0.0
    %228 = vmatprep.subr.mxu0 0.0
    %229 = vmatpush1.msra.mxu0 0.0
    %230 = vmatprep.subr.mxu0 0.0
    %231 = vmatpush1.msra.mxu0 0.0
    %232 = vmatprep.subr.mxu0 0.0
    %233 = vmatpush1.msra.mxu0 0.0
    %234 = vmatprep.subr.mxu0 0.0
    %235 = vmatpush1.msra.mxu0 0.0
    %236 = vmatprep.subr.mxu0 0.0
    %237 = vmatpush1.msra.mxu0 0.0
    %238 = vmatprep.subr.mxu0 0.0
    %239 = vmatpush1.msra.mxu0 0.0
    %240 = vmatprep.subr.mxu0 0.0
    %241 = vmatpush1.msra.mxu0 0.0
    %242 = vmatprep.subr.mxu0 0.0
    %243 = vmatpush1.msra.mxu0 0.0
    %244 = vmatprep.subr.mxu0 0.0
    %245 = vmatpush1.msra.mxu0 0.0
    %246 = vmatprep.mubr.f32.mxu0 0.0
    %247 = vmatmul.mubr.f32.gmra.mrb[0].mxu0 %v96
    %v248 = vpop.f32.mrb[0].mxu0
    %v249 = vadd.f32 %v180, %v248
    %v250 = vpop.f32.mrb[0].mxu0
    %251 = vmatprep.mubr.f32.mxu0 0.0
    %252 = vmatmul.mubr.f32.gmra.mrb[0].mxu0 %v99
    %v253 = vpop.f32.mrb[0].mxu0
    %v254 = vadd.f32 %v180, %v253
    %v255 = vpop.f32.mrb[0].mxu0
    %256 = vdwg.mxu0
    %v258 = vlaneseq
    %v259 = vshrl.u32 %v258, 7
    %v260 = vsub.s32 0, %v259
    %v261 = vrot.slane %v87, %v260
    %263 = vmatprep.subr.mxu0 0.0
    %264 = vmatpush1.msra.mxu0 %v81
    %265 = vmatprep.subr.mxu0 0.0
    %266 = vmatpush1.msra.mxu0 %v82
    %267 = vmatprep.subr.mxu0 0.0
    %268 = vmatpush1.msra.mxu0 %v83
    %269 = vmatprep.subr.mxu0 0.0
    %270 = vmatpush1.msra.mxu0 %v84
    %271 = vmatprep.subr.mxu0 0.0
    %272 = vmatpush1.msra.mxu0 0.0
    %273 = vmatprep.subr.mxu0 0.0
    %274 = vmatpush1.msra.mxu0 0.0
    %275 = vmatprep.subr.mxu0 0.0
    %276 = vmatpush1.msra.mxu0 0.0
    %277 = vmatprep.subr.mxu0 0.0
    %278 = vmatpush1.msra.mxu0 0.0
    %279 = vmatprep.subr.mxu0 0.0
    %280 = vmatpush1.msra.mxu0 0.0
    %281 = vmatprep.subr.mxu0 0.0
    %282 = vmatpush1.msra.mxu0 0.0
    %283 = vmatprep.subr.mxu0 0.0
    %284 = vmatpush1.msra.mxu0 0.0
    %285 = vmatprep.subr.mxu0 0.0
    %286 = vmatpush1.msra.mxu0 0.0
    %287 = vmatprep.subr.mxu0 0.0
    %288 = vmatpush1.msra.mxu0 0.0
    %289 = vmatprep.subr.mxu0 0.0
    %290 = vmatpush1.msra.mxu0 0.0
    %291 = vmatprep.subr.mxu0 0.0
    %292 = vmatpush1.msra.mxu0 0.0
    %293 = vmatprep.subr.mxu0 0.0
    %294 = vmatpush1.msra.mxu0 0.0
    %295 = vmatprep.subr.mxu0 0.0
    %296 = vmatpush1.msra.mxu0 0.0
    %297 = vmatprep.subr.mxu0 0.0
    %298 = vmatpush1.msra.mxu0 0.0
    %299 = vmatprep.subr.mxu0 0.0
    %300 = vmatpush1.msra.mxu0 0.0
    %301 = vmatprep.subr.mxu0 0.0
    %302 = vmatpush1.msra.mxu0 0.0
    %303 = vmatprep.subr.mxu0 0.0
    %304 = vmatpush1.msra.mxu0 0.0
    %305 = vmatprep.subr.mxu0 0.0
    %306 = vmatpush1.msra.mxu0 0.0
    %307 = vmatprep.subr.mxu0 0.0
    %308 = vmatpush1.msra.mxu0 0.0
    %309 = vmatprep.subr.mxu0 0.0
    %310 = vmatpush1.msra.mxu0 0.0
    %311 = vmatprep.subr.mxu0 0.0
    %312 = vmatpush1.msra.mxu0 0.0
    %313 = vmatprep.subr.mxu0 0.0
    %314 = vmatpush1.msra.mxu0 0.0
    %315 = vmatprep.subr.mxu0 0.0
    %316 = vmatpush1.msra.mxu0 0.0
    %317 = vmatprep.subr.mxu0 0.0
    %318 = vmatpush1.msra.mxu0 0.0
    %319 = vmatprep.subr.mxu0 0.0
    %320 = vmatpush1.msra.mxu0 0.0
    %321 = vmatprep.subr.mxu0 0.0
    %322 = vmatpush1.msra.mxu0 0.0
    %323 = vmatprep.subr.mxu0 0.0
    %324 = vmatpush1.msra.mxu0 0.0
    %325 = vmatprep.subr.mxu0 0.0
    %326 = vmatpush1.msra.mxu0 0.0
    %327 = vmatprep.mubr.f32.mxu0 0.0
    %328 = vmatmul.mubr.f32.gmra.mrb[0].mxu0 %v96
    %v329 = vpop.f32.mrb[0].mxu0
    %v330 = vadd.f32 %v261, %v329
    %v331 = vpop.f32.mrb[0].mxu0
    %332 = vmatprep.mubr.f32.mxu0 0.0
    %333 = vmatmul.mubr.f32.gmra.mrb[0].mxu0 %v99
    %v334 = vpop.f32.mrb[0].mxu0
    %v335 = vadd.f32 %v261, %v334
    %v336 = vpop.f32.mrb[0].mxu0
    %337 = vdwg.mxu0
    %vm338 = vcmask 64512
    %v340 = vsel %vm338, %v168, 0
    %v343 = vsel %vm338, %v249, 0
    %345 = vmatprep.subr.mxu0 0.0
    %346 = vmatpush1.xpose.msra.mxu0 %v343
    %347 = vmatprep.subr.mxu0 0.0
    %348 = vmatpush1.xpose.msra.mxu0 0.0
    %349 = vmatprep.subr.mxu0 0.0
    %350 = vmatpush1.xpose.msra.mxu0 0.0
    %351 = vmatprep.subr.mxu0 0.0
    %352 = vmatpush1.xpose.msra.mxu0 0.0
    %353 = vmatprep.subr.mxu0 0.0
    %354 = vmatpush1.xpose.msra.mxu0 0.0
    %355 = vmatprep.subr.mxu0 0.0
    %356 = vmatpush1.xpose.msra.mxu0 0.0
    %357 = vmatprep.subr.mxu0 0.0
    %358 = vmatpush1.xpose.msra.mxu0 0.0
    %359 = vmatprep.subr.mxu0 0.0
    %360 = vmatpush1.xpose.msra.mxu0 0.0
    %361 = vmatprep.subr.mxu0 0.0
    %362 = vmatpush1.xpose.msra.mxu0 0.0
    %363 = vmatprep.subr.mxu0 0.0
    %364 = vmatpush1.xpose.msra.mxu0 0.0
    %365 = vmatprep.subr.mxu0 0.0
    %366 = vmatpush1.xpose.msra.mxu0 0.0
    %367 = vmatprep.subr.mxu0 0.0
    %368 = vmatpush1.xpose.msra.mxu0 0.0
    %369 = vmatprep.subr.mxu0 0.0
    %370 = vmatpush1.xpose.msra.mxu0 0.0
    %371 = vmatprep.subr.mxu0 0.0
    %372 = vmatpush1.xpose.msra.mxu0 0.0
    %373 = vmatprep.subr.mxu0 0.0
    %374 = vmatpush1.xpose.msra.mxu0 0.0
    %375 = vmatprep.subr.mxu0 0.0
    %376 = vmatpush1.xpose.msra.mxu0 0.0
    %377 = vmatprep.subr.mxu0 0.0
    %378 = vmatpush1.xpose.msra.mxu0 0.0
    %379 = vmatprep.subr.mxu0 0.0
    %380 = vmatpush1.xpose.msra.mxu0 0.0
    %381 = vmatprep.subr.mxu0 0.0
    %382 = vmatpush1.xpose.msra.mxu0 0.0
    %383 = vmatprep.subr.mxu0 0.0
    %384 = vmatpush1.xpose.msra.mxu0 0.0
    %385 = vmatprep.subr.mxu0 0.0
    %386 = vmatpush1.xpose.msra.mxu0 0.0
    %387 = vmatprep.subr.mxu0 0.0
    %388 = vmatpush1.xpose.msra.mxu0 0.0
    %389 = vmatprep.subr.mxu0 0.0
    %390 = vmatpush1.xpose.msra.mxu0 0.0
    %391 = vmatprep.subr.mxu0 0.0
    %392 = vmatpush1.xpose.msra.mxu0 0.0
    %393 = vmatprep.subr.mxu0 0.0
    %394 = vmatpush1.xpose.msra.mxu0 0.0
    %395 = vmatprep.subr.mxu0 0.0
    %396 = vmatpush1.xpose.msra.mxu0 0.0
    %397 = vmatprep.subr.mxu0 0.0
    %398 = vmatpush1.xpose.msra.mxu0 0.0
    %399 = vmatprep.subr.mxu0 0.0
    %400 = vmatpush1.xpose.msra.mxu0 0.0
    %401 = vmatprep.subr.mxu0 0.0
    %402 = vmatpush1.xpose.msra.mxu0 0.0
    %403 = vmatprep.subr.mxu0 0.0
    %404 = vmatpush1.xpose.msra.mxu0 0.0
    %405 = vmatprep.subr.mxu0 0.0
    %406 = vmatpush1.xpose.msra.mxu0 0.0
    %407 = vmatprep.subr.mxu0 0.0
    %408 = vmatpush1.xpose.msra.mxu0 0.0
    %409 = vmatprep.mubr.f32.mxu0 0.0
    %410 = vmatmul.mubr.f32.gmra.mrb[0].mxu0 %v340
    %v411 = vpop.f32.mrb[0].mxu0
    %v412 = vadd.f32 0.0, %v411
    %v413 = vpop.f32.mrb[0].mxu0
    %414 = vdwg.mxu0
    %v416 = vsel %vm338, %v173, 0
    %v419 = vsel %vm338, %v254, 0
    %421 = vmatprep.subr.mxu0 0.0
    %422 = vmatpush1.xpose.msra.mxu0 %v419
    %423 = vmatprep.subr.mxu0 0.0
    %424 = vmatpush1.xpose.msra.mxu0 0.0
    %425 = vmatprep.subr.mxu0 0.0
    %426 = vmatpush1.xpose.msra.mxu0 0.0
    %427 = vmatprep.subr.mxu0 0.0
    %428 = vmatpush1.xpose.msra.mxu0 0.0
    %429 = vmatprep.subr.mxu0 0.0
    %430 = vmatpush1.xpose.msra.mxu0 0.0
    %431 = vmatprep.subr.mxu0 0.0
    %432 = vmatpush1.xpose.msra.mxu0 0.0
    %433 = vmatprep.subr.mxu0 0.0
    %434 = vmatpush1.xpose.msra.mxu0 0.0
    %435 = vmatprep.subr.mxu0 0.0
    %436 = vmatpush1.xpose.msra.mxu0 0.0
    %437 = vmatprep.subr.mxu0 0.0
    %438 = vmatpush1.xpose.msra.mxu0 0.0
    %439 = vmatprep.subr.mxu0 0.0
    %440 = vmatpush1.xpose.msra.mxu0 0.0
    %441 = vmatprep.subr.mxu0 0.0
    %442 = vmatpush1.xpose.msra.mxu0 0.0
    %443 = vmatprep.subr.mxu0 0.0
    %444 = vmatpush1.xpose.msra.mxu0 0.0
    %445 = vmatprep.subr.mxu0 0.0
    %446 = vmatpush1.xpose.msra.mxu0 0.0
    %447 = vmatprep.subr.mxu0 0.0
    %448 = vmatpush1.xpose.msra.mxu0 0.0
    %449 = vmatprep.subr.mxu0 0.0
    %450 = vmatpush1.xpose.msra.mxu0 0.0
    %451 = vmatprep.subr.mxu0 0.0
    %452 = vmatpush1.xpose.msra.mxu0 0.0
    %453 = vmatprep.subr.mxu0 0.0
    %454 = vmatpush1.xpose.msra.mxu0 0.0
    %455 = vmatprep.subr.mxu0 0.0
    %456 = vmatpush1.xpose.msra.mxu0 0.0
    %457 = vmatprep.subr.mxu0 0.0
    %458 = vmatpush1.xpose.msra.mxu0 0.0
    %459 = vmatprep.subr.mxu0 0.0
    %460 = vmatpush1.xpose.msra.mxu0 0.0
    %461 = vmatprep.subr.mxu0 0.0
    %462 = vmatpush1.xpose.msra.mxu0 0.0
    %463 = vmatprep.subr.mxu0 0.0
    %464 = vmatpush1.xpose.msra.mxu0 0.0
    %465 = vmatprep.subr.mxu0 0.0
    %466 = vmatpush1.xpose.msra.mxu0 0.0
    %467 = vmatprep.subr.mxu0 0.0
    %468 = vmatpush1.xpose.msra.mxu0 0.0
    %469 = vmatprep.subr.mxu0 0.0
    %470 = vmatpush1.xpose.msra.mxu0 0.0
    %471 = vmatprep.subr.mxu0 0.0
    %472 = vmatpush1.xpose.msra.mxu0 0.0
    %473 = vmatprep.subr.mxu0 0.0
    %474 = vmatpush1.xpose.msra.mxu0 0.0
    %475 = vmatprep.subr.mxu0 0.0
    %476 = vmatpush1.xpose.msra.mxu0 0.0
    %477 = vmatprep.subr.mxu0 0.0
    %478 = vmatpush1.xpose.msra.mxu0 0.0
    %479 = vmatprep.subr.mxu0 0.0
    %480 = vmatpush1.xpose.msra.mxu0 0.0
    %481 = vmatprep.subr.mxu0 0.0
    %482 = vmatpush1.xpose.msra.mxu0 0.0
    %483 = vmatprep.subr.mxu0 0.0
    %484 = vmatpush1.xpose.msra.mxu0 0.0
    %485 = vmatprep.mubr.f32.mxu0 0.0
    %486 = vmatmul.mubr.f32.gmra.mrb[0].mxu0 %v416
    %v487 = vpop.f32.mrb[0].mxu0
    %v488 = vadd.f32 0.0, %v487
    %v489 = vpop.f32.mrb[0].mxu0
    %490 = vdwg.mxu0
    %v491 = vmul.f32 %v412, 0.35355338
    %v492 = vmul.f32 %v488, 0.35355338
    %v493 = vsel %vm338, %v491, -inf
    %494 = vmax.xlane.f32.xlu0 %v493
    %v495 = vpop.xlane.xlu0 %494
    %v496 = vsel %vm338, %v492, -inf
    %497 = vmax.xlane.f32.xlu0 %v496
    %v498 = vpop.xlane.xlu0 %497
    %v499 = vsub.f32 %v491, %v495
    %v500 = vsub.f32 %v492, %v498
    %v501 = vmul.f32 %v499, 1.442695
    %v502 = vpow.pop %v501
    %v503 = vmul.f32 %v500, 1.442695
    %v504 = vpow.pop %v503
    %v505 = vsel %vm338, %v502, 0.0
    %506 = vadd.xlane.f32.xlu0 %v505
    %v507 = vpop.xlane.xlu0 %506
    %v508 = vsel %vm338, %v504, 0.0
    %509 = vadd.xlane.f32.xlu0 %v508
    %v510 = vpop.xlane.xlu0 %509
    %v511 = vrcp.pop %v507
    %v512 = vrcp.pop %v510
    %v513 = vmul.f32 %v502, %v511
    %v514 = vmul.f32 %v504, %v512
    %v516 = vsel %vm338, %v513, 0
    %518 = vmatprep.subr.mxu0 0.0
    %519 = vmatpush1.msra.mxu0 %v330
    %520 = vmatprep.subr.mxu0 0.0
    %521 = vmatpush1.msra.mxu0 0.0
    %522 = vmatprep.subr.mxu0 0.0
    %523 = vmatpush1.msra.mxu0 0.0
    %524 = vmatprep.subr.mxu0 0.0
    %525 = vmatpush1.msra.mxu0 0.0
    %526 = vmatprep.subr.mxu0 0.0
    %527 = vmatpush1.msra.mxu0 0.0
    %528 = vmatprep.subr.mxu0 0.0
    %529 = vmatpush1.msra.mxu0 0.0
    %530 = vmatprep.subr.mxu0 0.0
    %531 = vmatpush1.msra.mxu0 0.0
    %532 = vmatprep.subr.mxu0 0.0
    %533 = vmatpush1.msra.mxu0 0.0
    %534 = vmatprep.subr.mxu0 0.0
    %535 = vmatpush1.msra.mxu0 0.0
    %536 = vmatprep.subr.mxu0 0.0
    %537 = vmatpush1.msra.mxu0 0.0
    %538 = vmatprep.subr.mxu0 0.0
    %539 = vmatpush1.msra.mxu0 0.0
    %540 = vmatprep.subr.mxu0 0.0
    %541 = vmatpush1.msra.mxu0 0.0
    %542 = vmatprep.subr.mxu0 0.0
    %543 = vmatpush1.msra.mxu0 0.0
    %544 = vmatprep.subr.mxu0 0.0
    %545 = vmatpush1.msra.mxu0 0.0
    %546 = vmatprep.subr.mxu0 0.0
    %547 = vmatpush1.msra.mxu0 0.0
    %548 = vmatprep.subr.mxu0 0.0
    %549 = vmatpush1.msra.mxu0 0.0
    %550 = vmatprep.subr.mxu0 0.0
    %551 = vmatpush1.msra.mxu0 0.0
    %552 = vmatprep.subr.mxu0 0.0
    %553 = vmatpush1.msra.mxu0 0.0
    %554 = vmatprep.subr.mxu0 0.0
    %555 = vmatpush1.msra.mxu0 0.0
    %556 = vmatprep.subr.mxu0 0.0
    %557 = vmatpush1.msra.mxu0 0.0
    %558 = vmatprep.subr.mxu0 0.0
    %559 = vmatpush1.msra.mxu0 0.0
    %560 = vmatprep.subr.mxu0 0.0
    %561 = vmatpush1.msra.mxu0 0.0
    %562 = vmatprep.subr.mxu0 0.0
    %563 = vmatpush1.msra.mxu0 0.0
    %564 = vmatprep.subr.mxu0 0.0
    %565 = vmatpush1.msra.mxu0 0.0
    %566 = vmatprep.subr.mxu0 0.0
    %567 = vmatpush1.msra.mxu0 0.0
    %568 = vmatprep.subr.mxu0 0.0
    %569 = vmatpush1.msra.mxu0 0.0
    %570 = vmatprep.subr.mxu0 0.0
    %571 = vmatpush1.msra.mxu0 0.0
    %572 = vmatprep.subr.mxu0 0.0
    %573 = vmatpush1.msra.mxu0 0.0
    %574 = vmatprep.subr.mxu0 0.0
    %575 = vmatpush1.msra.mxu0 0.0
    %576 = vmatprep.subr.mxu0 0.0
    %577 = vmatpush1.msra.mxu0 0.0
    %578 = vmatprep.subr.mxu0 0.0
    %579 = vmatpush1.msra.mxu0 0.0
    %580 = vmatprep.subr.mxu0 0.0
    %581 = vmatpush1.msra.mxu0 0.0
    %582 = vmatprep.mubr.f32.mxu0 0.0
    %583 = vmatmul.mubr.f32.gmra.mrb[0].mxu0 %v516
    %v584 = vpop.f32.mrb[0].mxu0
    %v585 = vadd.f32 0.0, %v584
    %v586 = vpop.f32.mrb[0].mxu0
    %587 = vdwg.mxu0
    %v589 = vsel %vm338, %v514, 0
    %591 = vmatprep.subr.mxu0 0.0
    %592 = vmatpush1.msra.mxu0 %v335
    %593 = vmatprep.subr.mxu0 0.0
    %594 = vmatpush1.msra.mxu0 0.0
    %595 = vmatprep.subr.mxu0 0.0
    %596 = vmatpush1.msra.mxu0 0.0
    %597 = vmatprep.subr.mxu0 0.0
    %598 = vmatpush1.msra.mxu0 0.0
    %599 = vmatprep.subr.mxu0 0.0
    %600 = vmatpush1.msra.mxu0 0.0
    %601 = vmatprep.subr.mxu0 0.0
    %602 = vmatpush1.msra.mxu0 0.0
    %603 = vmatprep.subr.mxu0 0.0
    %604 = vmatpush1.msra.mxu0 0.0
    %605 = vmatprep.subr.mxu0 0.0
    %606 = vmatpush1.msra.mxu0 0.0
    %607 = vmatprep.subr.mxu0 0.0
    %608 = vmatpush1.msra.mxu0 0.0
    %609 = vmatprep.subr.mxu0 0.0
    %610 = vmatpush1.msra.mxu0 0.0
    %611 = vmatprep.subr.mxu0 0.0
    %612 = vmatpush1.msra.mxu0 0.0
    %613 = vmatprep.subr.mxu0 0.0
    %614 = vmatpush1.msra.mxu0 0.0
    %615 = vmatprep.subr.mxu0 0.0
    %616 = vmatpush1.msra.mxu0 0.0
    %617 = vmatprep.subr.mxu0 0.0
    %618 = vmatpush1.msra.mxu0 0.0
    %619 = vmatprep.subr.mxu0 0.0
    %620 = vmatpush1.msra.mxu0 0.0
    %621 = vmatprep.subr.mxu0 0.0
    %622 = vmatpush1.msra.mxu0 0.0
    %623 = vmatprep.subr.mxu0 0.0
    %624 = vmatpush1.msra.mxu0 0.0
    %625 = vmatprep.subr.mxu0 0.0
    %626 = vmatpush1.msra.mxu0 0.0
    %627 = vmatprep.subr.mxu0 0.0
    %628 = vmatpush1.msra.mxu0 0.0
    %629 = vmatprep.subr.mxu0 0.0
    %630 = vmatpush1.msra.mxu0 0.0
    %631 = vmatprep.subr.mxu0 0.0
    %632 = vmatpush1.msra.mxu0 0.0
    %633 = vmatprep.subr.mxu0 0.0
    %634 = vmatpush1.msra.mxu0 0.0
    %635 = vmatprep.subr.mxu0 0.0
    %636 = vmatpush1.msra.mxu0 0.0
    %637 = vmatprep.subr.mxu0 0.0
    %638 = vmatpush1.msra.mxu0 0.0
    %639 = vmatprep.subr.mxu0 0.0
    %640 = vmatpush1.msra.mxu0 0.0
    %641 = vmatprep.subr.mxu0 0.0
    %642 = vmatpush1.msra.mxu0 0.0
    %643 = vmatprep.subr.mxu0 0.0
    %644 = vmatpush1.msra.mxu0 0.0
    %645 = vmatprep.subr.mxu0 0.0
    %646 = vmatpush1.msra.mxu0 0.0
    %647 = vmatprep.subr.mxu0 0.0
    %648 = vmatpush1.msra.mxu0 0.0
    %649 = vmatprep.subr.mxu0 0.0
    %650 = vmatpush1.msra.mxu0 0.0
    %651 = vmatprep.subr.mxu0 0.0
    %652 = vmatpush1.msra.mxu0 0.0
    %653 = vmatprep.subr.mxu0 0.0
    %654 = vmatpush1.msra.mxu0 0.0
    %655 = vmatprep.mubr.f32.mxu0 0.0
    %656 = vmatmul.mubr.f32.gmra.mrb[0].mxu0 %v589
    %v657 = vpop.f32.mrb[0].mxu0
    %v658 = vadd.f32 0.0, %v657
    %v659 = vpop.f32.mrb[0].mxu0
    %660 = vdwg.mxu0
    %v661 = vld [vmem:[%s7] sm:$0xff]
    %s662 = scalar_lea.vmem %s1, 32
    %v663 = vld [vmem:[%s662] sm:$0xff]
    %v664 = vld [vmem:[%s662 + $0x8] sm:$0xff]
    %v665 = vld [vmem:[%s662 + $0x10] sm:$0xff]
    %v666 = vld [vmem:[%s662 + $0x18] sm:$0xff]
    %s667 = scalar_lea.vmem %s2, 32
    %v668 = vld [vmem:[%s667] sm:$0xff]
    %v669 = vld [vmem:[%s667 + $0x8] sm:$0xff]
    %v670 = vld [vmem:[%s667 + $0x10] sm:$0xff]
    %v671 = vld [vmem:[%s667 + $0x18] sm:$0xff]
    %s672 = scalar_lea.vmem %s3, 32
    %v673 = vld [vmem:[%s672] sm:$0xff]
    %v674 = vld [vmem:[%s672 + $0x8] sm:$0xff]
    %v675 = vld [vmem:[%s672 + $0x10] sm:$0xff]
    %v676 = vld [vmem:[%s672 + $0x18] sm:$0xff]
    %s677 = scalar_lea.vmem %s4, 1
    %v678 = vld [vmem:[%s677] sm:$0x1]
    %s679 = scalar_lea.vmem %s5, 1
    %v680 = vld [vmem:[%s679] sm:$0x1]
    %s681 = scalar_lea.vmem %s6, 1
    %v682 = vld [vmem:[%s681] sm:$0x1]
    %v684 = vlaneseq
    %v685 = vshrl.u32 %v684, 7
    %v686 = vsub.s32 0, %v685
    %v687 = vrot.slane %v678, %v686
    %689 = vmatprep.subr.mxu0 0.0
    %690 = vmatpush1.msra.mxu0 %v663
    %691 = vmatprep.subr.mxu0 0.0
    %692 = vmatpush1.msra.mxu0 %v664
    %693 = vmatprep.subr.mxu0 0.0
    %694 = vmatpush1.msra.mxu0 %v665
    %695 = vmatprep.subr.mxu0 0.0
    %696 = vmatpush1.msra.mxu0 %v666
    %697 = vmatprep.subr.mxu0 0.0
    %698 = vmatpush1.msra.mxu0 0.0
    %699 = vmatprep.subr.mxu0 0.0
    %700 = vmatpush1.msra.mxu0 0.0
    %701 = vmatprep.subr.mxu0 0.0
    %702 = vmatpush1.msra.mxu0 0.0
    %703 = vmatprep.subr.mxu0 0.0
    %704 = vmatpush1.msra.mxu0 0.0
    %705 = vmatprep.subr.mxu0 0.0
    %706 = vmatpush1.msra.mxu0 0.0
    %707 = vmatprep.subr.mxu0 0.0
    %708 = vmatpush1.msra.mxu0 0.0
    %709 = vmatprep.subr.mxu0 0.0
    %710 = vmatpush1.msra.mxu0 0.0
    %711 = vmatprep.subr.mxu0 0.0
    %712 = vmatpush1.msra.mxu0 0.0
    %713 = vmatprep.subr.mxu0 0.0
    %714 = vmatpush1.msra.mxu0 0.0
    %715 = vmatprep.subr.mxu0 0.0
    %716 = vmatpush1.msra.mxu0 0.0
    %717 = vmatprep.subr.mxu0 0.0
    %718 = vmatpush1.msra.mxu0 0.0
    %719 = vmatprep.subr.mxu0 0.0
    %720 = vmatpush1.msra.mxu0 0.0
    %721 = vmatprep.subr.mxu0 0.0
    %722 = vmatpush1.msra.mxu0 0.0
    %723 = vmatprep.subr.mxu0 0.0
    %724 = vmatpush1.msra.mxu0 0.0
    %725 = vmatprep.subr.mxu0 0.0
    %726 = vmatpush1.msra.mxu0 0.0
    %727 = vmatprep.subr.mxu0 0.0
    %728 = vmatpush1.msra.mxu0 0.0
    %729 = vmatprep.subr.mxu0 0.0
    %730 = vmatpush1.msra.mxu0 0.0
    %731 = vmatprep.subr.mxu0 0.0
    %732 = vmatpush1.msra.mxu0 0.0
    %733 = vmatprep.subr.mxu0 0.0
    %734 = vmatpush1.msra.mxu0 0.0
    %735 = vmatprep.subr.mxu0 0.0
    %736 = vmatpush1.msra.mxu0 0.0
    %737 = vmatprep.subr.mxu0 0.0
    %738 = vmatpush1.msra.mxu0 0.0
    %739 = vmatprep.subr.mxu0 0.0
    %740 = vmatpush1.msra.mxu0 0.0
    %741 = vmatprep.subr.mxu0 0.0
    %742 = vmatpush1.msra.mxu0 0.0
    %743 = vmatprep.subr.mxu0 0.0
    %744 = vmatpush1.msra.mxu0 0.0
    %745 = vmatprep.subr.mxu0 0.0
    %746 = vmatpush1.msra.mxu0 0.0
    %747 = vmatprep.subr.mxu0 0.0
    %748 = vmatpush1.msra.mxu0 0.0
    %749 = vmatprep.subr.mxu0 0.0
    %750 = vmatpush1.msra.mxu0 0.0
    %751 = vmatprep.subr.mxu0 0.0
    %752 = vmatpush1.msra.mxu0 0.0
    %753 = vmatprep.mubr.f32.mxu0 0.0
    %754 = vmatmul.mubr.f32.gmra.mrb[0].mxu0 %v96
    %v755 = vpop.f32.mrb[0].mxu0
    %v756 = vadd.f32 %v687, %v755
    %v757 = vpop.f32.mrb[0].mxu0
    %758 = vmatprep.mubr.f32.mxu0 0.0
    %759 = vmatmul.mubr.f32.gmra.mrb[0].mxu0 %v99
    %v760 = vpop.f32.mrb[0].mxu0
    %v761 = vadd.f32 %v687, %v760
    %v762 = vpop.f32.mrb[0].mxu0
    %763 = vdwg.mxu0
    %v765 = vlaneseq
    %v766 = vshrl.u32 %v765, 7
    %v767 = vsub.s32 0, %v766
    %v768 = vrot.slane %v680, %v767
    %770 = vmatprep.subr.mxu0 0.0
    %771 = vmatpush1.msra.mxu0 %v668
    %772 = vmatprep.subr.mxu0 0.0
    %773 = vmatpush1.msra.mxu0 %v669
    %774 = vmatprep.subr.mxu0 0.0
    %775 = vmatpush1.msra.mxu0 %v670
    %776 = vmatprep.subr.mxu0 0.0
    %777 = vmatpush1.msra.mxu0 %v671
    %778 = vmatprep.subr.mxu0 0.0
    %779 = vmatpush1.msra.mxu0 0.0
    %780 = vmatprep.subr.mxu0 0.0
    %781 = vmatpush1.msra.mxu0 0.0
    %782 = vmatprep.subr.mxu0 0.0
    %783 = vmatpush1.msra.mxu0 0.0
    %784 = vmatprep.subr.mxu0 0.0
    %785 = vmatpush1.msra.mxu0 0.0
    %786 = vmatprep.subr.mxu0 0.0
    %787 = vmatpush1.msra.mxu0 0.0
    %788 = vmatprep.subr.mxu0 0.0
    %789 = vmatpush1.msra.mxu0 0.0
    %790 = vmatprep.subr.mxu0 0.0
    %791 = vmatpush1.msra.mxu0 0.0
    %792 = vmatprep.subr.mxu0 0.0
    %793 = vmatpush1.msra.mxu0 0.0
    %794 = vmatprep.subr.mxu0 0.0
    %795 = vmatpush1.msra.mxu0 0.0
    %796 = vmatprep.subr.mxu0 0.0
    %797 = vmatpush1.msra.mxu0 0.0
    %798 = vmatprep.subr.mxu0 0.0
    %799 = vmatpush1.msra.mxu0 0.0
    %800 = vmatprep.subr.mxu0 0.0
    %801 = vmatpush1.msra.mxu0 0.0
    %802 = vmatprep.subr.mxu0 0.0
    %803 = vmatpush1.msra.mxu0 0.0
    %804 = vmatprep.subr.mxu0 0.0
    %805 = vmatpush1.msra.mxu0 0.0
    %806 = vmatprep.subr.mxu0 0.0
    %807 = vmatpush1.msra.mxu0 0.0
    %808 = vmatprep.subr.mxu0 0.0
    %809 = vmatpush1.msra.mxu0 0.0
    %810 = vmatprep.subr.mxu0 0.0
    %811 = vmatpush1.msra.mxu0 0.0
    %812 = vmatprep.subr.mxu0 0.0
    %813 = vmatpush1.msra.mxu0 0.0
    %814 = vmatprep.subr.mxu0 0.0
    %815 = vmatpush1.msra.mxu0 0.0
    %816 = vmatprep.subr.mxu0 0.0
    %817 = vmatpush1.msra.mxu0 0.0
    %818 = vmatprep.subr.mxu0 0.0
    %819 = vmatpush1.msra.mxu0 0.0
    %820 = vmatprep.subr.mxu0 0.0
    %821 = vmatpush1.msra.mxu0 0.0
    %822 = vmatprep.subr.mxu0 0.0
    %823 = vmatpush1.msra.mxu0 0.0
    %824 = vmatprep.subr.mxu0 0.0
    %825 = vmatpush1.msra.mxu0 0.0
    %826 = vmatprep.subr.mxu0 0.0
    %827 = vmatpush1.msra.mxu0 0.0
    %828 = vmatprep.subr.mxu0 0.0
    %829 = vmatpush1.msra.mxu0 0.0
    %830 = vmatprep.subr.mxu0 0.0
    %831 = vmatpush1.msra.mxu0 0.0
    %832 = vmatprep.subr.mxu0 0.0
    %833 = vmatpush1.msra.mxu0 0.0
    %834 = vmatprep.mubr.f32.mxu0 0.0
    %835 = vmatmul.mubr.f32.gmra.mrb[0].mxu0 %v96
    %v836 = vpop.f32.mrb[0].mxu0
    %v837 = vadd.f32 %v768, %v836
    %v838 = vpop.f32.mrb[0].mxu0
    %839 = vmatprep.mubr.f32.mxu0 0.0
    %840 = vmatmul.mubr.f32.gmra.mrb[0].mxu0 %v99
    %v841 = vpop.f32.mrb[0].mxu0
    %v842 = vadd.f32 %v768, %v841
    %v843 = vpop.f32.mrb[0].mxu0
    %844 = vdwg.mxu0
    %v846 = vlaneseq
    %v847 = vshrl.u32 %v846, 7
    %v848 = vsub.s32 0, %v847
    %v849 = vrot.slane %v682, %v848
    %851 = vmatprep.subr.mxu0 0.0
    %852 = vmatpush1.msra.mxu0 %v673
    %853 = vmatprep.subr.mxu0 0.0
    %854 = vmatpush1.msra.mxu0 %v674
    %855 = vmatprep.subr.mxu0 0.0
    %856 = vmatpush1.msra.mxu0 %v675
    %857 = vmatprep.subr.mxu0 0.0
    %858 = vmatpush1.msra.mxu0 %v676
    %859 = vmatprep.subr.mxu0 0.0
    %860 = vmatpush1.msra.mxu0 0.0
    %861 = vmatprep.subr.mxu0 0.0
    %862 = vmatpush1.msra.mxu0 0.0
    %863 = vmatprep.subr.mxu0 0.0
    %864 = vmatpush1.msra.mxu0 0.0
    %865 = vmatprep.subr.mxu0 0.0
    %866 = vmatpush1.msra.mxu0 0.0
    %867 = vmatprep.subr.mxu0 0.0
    %868 = vmatpush1.msra.mxu0 0.0
    %869 = vmatprep.subr.mxu0 0.0
    %870 = vmatpush1.msra.mxu0 0.0
    %871 = vmatprep.subr.mxu0 0.0
    %872 = vmatpush1.msra.mxu0 0.0
    %873 = vmatprep.subr.mxu0 0.0
    %874 = vmatpush1.msra.mxu0 0.0
    %875 = vmatprep.subr.mxu0 0.0
    %876 = vmatpush1.msra.mxu0 0.0
    %877 = vmatprep.subr.mxu0 0.0
    %878 = vmatpush1.msra.mxu0 0.0
    %879 = vmatprep.subr.mxu0 0.0
    %880 = vmatpush1.msra.mxu0 0.0
    %881 = vmatprep.subr.mxu0 0.0
    %882 = vmatpush1.msra.mxu0 0.0
    %883 = vmatprep.subr.mxu0 0.0
    %884 = vmatpush1.msra.mxu0 0.0
    %885 = vmatprep.subr.mxu0 0.0
    %886 = vmatpush1.msra.mxu0 0.0
    %887 = vmatprep.subr.mxu0 0.0
    %888 = vmatpush1.msra.mxu0 0.0
    %889 = vmatprep.subr.mxu0 0.0
    %890 = vmatpush1.msra.mxu0 0.0
    %891 = vmatprep.subr.mxu0 0.0
    %892 = vmatpush1.msra.mxu0 0.0
    %893 = vmatprep.subr.mxu0 0.0
    %894 = vmatpush1.msra.mxu0 0.0
    %895 = vmatprep.subr.mxu0 0.0
    %896 = vmatpush1.msra.mxu0 0.0
    %897 = vmatprep.subr.mxu0 0.0
    %898 = vmatpush1.msra.mxu0 0.0
    %899 = vmatprep.subr.mxu0 0.0
    %900 = vmatpush1.msra.mxu0 0.0
    %901 = vmatprep.subr.mxu0 0.0
    %902 = vmatpush1.msra.mxu0 0.0
    %903 = vmatprep.subr.mxu0 0.0
    %904 = vmatpush1.msra.mxu0 0.0
    %905 = vmatprep.subr.mxu0 0.0
    %906 = vmatpush1.msra.mxu0 0.0
    %907 = vmatprep.subr.mxu0 0.0
    %908 = vmatpush1.msra.mxu0 0.0
    %909 = vmatprep.subr.mxu0 0.0
    %910 = vmatpush1.msra.mxu0 0.0
    %911 = vmatprep.subr.mxu0 0.0
    %912 = vmatpush1.msra.mxu0 0.0
    %913 = vmatprep.subr.mxu0 0.0
    %914 = vmatpush1.msra.mxu0 0.0
    %915 = vmatprep.mubr.f32.mxu0 0.0
    %916 = vmatmul.mubr.f32.gmra.mrb[0].mxu0 %v96
    %v917 = vpop.f32.mrb[0].mxu0
    %v918 = vadd.f32 %v849, %v917
    %v919 = vpop.f32.mrb[0].mxu0
    %920 = vmatprep.mubr.f32.mxu0 0.0
    %921 = vmatmul.mubr.f32.gmra.mrb[0].mxu0 %v99
    %v922 = vpop.f32.mrb[0].mxu0
    %v923 = vadd.f32 %v849, %v922
    %v924 = vpop.f32.mrb[0].mxu0
    %925 = vdwg.mxu0
    %v927 = vsel %vm338, %v756, 0
    %v930 = vsel %vm338, %v837, 0
    %932 = vmatprep.subr.mxu0 0.0
    %933 = vmatpush1.xpose.msra.mxu0 %v930
    %934 = vmatprep.subr.mxu0 0.0
    %935 = vmatpush1.xpose.msra.mxu0 0.0
    %936 = vmatprep.subr.mxu0 0.0
    %937 = vmatpush1.xpose.msra.mxu0 0.0
    %938 = vmatprep.subr.mxu0 0.0
    %939 = vmatpush1.xpose.msra.mxu0 0.0
    %940 = vmatprep.subr.mxu0 0.0
    %941 = vmatpush1.xpose.msra.mxu0 0.0
    %942 = vmatprep.subr.mxu0 0.0
    %943 = vmatpush1.xpose.msra.mxu0 0.0
    %944 = vmatprep.subr.mxu0 0.0
    %945 = vmatpush1.xpose.msra.mxu0 0.0
    %946 = vmatprep.subr.mxu0 0.0
    %947 = vmatpush1.xpose.msra.mxu0 0.0
    %948 = vmatprep.subr.mxu0 0.0
    %949 = vmatpush1.xpose.msra.mxu0 0.0
    %950 = vmatprep.subr.mxu0 0.0
    %951 = vmatpush1.xpose.msra.mxu0 0.0
    %952 = vmatprep.subr.mxu0 0.0
    %953 = vmatpush1.xpose.msra.mxu0 0.0
    %954 = vmatprep.subr.mxu0 0.0
    %955 = vmatpush1.xpose.msra.mxu0 0.0
    %956 = vmatprep.subr.mxu0 0.0
    %957 = vmatpush1.xpose.msra.mxu0 0.0
    %958 = vmatprep.subr.mxu0 0.0
    %959 = vmatpush1.xpose.msra.mxu0 0.0
    %960 = vmatprep.subr.mxu0 0.0
    %961 = vmatpush1.xpose.msra.mxu0 0.0
    %962 = vmatprep.subr.mxu0 0.0
    %963 = vmatpush1.xpose.msra.mxu0 0.0
    %964 = vmatprep.subr.mxu0 0.0
    %965 = vmatpush1.xpose.msra.mxu0 0.0
    %966 = vmatprep.subr.mxu0 0.0
    %967 = vmatpush1.xpose.msra.mxu0 0.0
    %968 = vmatprep.subr.mxu0 0.0
    %969 = vmatpush1.xpose.msra.mxu0 0.0
    %970 = vmatprep.subr.mxu0 0.0
    %971 = vmatpush1.xpose.msra.mxu0 0.0
    %972 = vmatprep.subr.mxu0 0.0
    %973 = vmatpush1.xpose.msra.mxu0 0.0
    %974 = vmatprep.subr.mxu0 0.0
    %975 = vmatpush1.xpose.msra.mxu0 0.0
    %976 = vmatprep.subr.mxu0 0.0
    %977 = vmatpush1.xpose.msra.mxu0 0.0
    %978 = vmatprep.subr.mxu0 0.0
    %979 = vmatpush1.xpose.msra.mxu0 0.0
    %980 = vmatprep.subr.mxu0 0.0
    %981 = vmatpush1.xpose.msra.mxu0 0.0
    %982 = vmatprep.subr.mxu0 0.0
    %983 = vmatpush1.xpose.msra.mxu0 0.0
    %984 = vmatprep.subr.mxu0 0.0
    %985 = vmatpush1.xpose.msra.mxu0 0.0
    %986 = vmatprep.subr.mxu0 0.0
    %987 = vmatpush1.xpose.msra.mxu0 0.0
    %988 = vmatprep.subr.mxu0 0.0
    %989 = vmatpush1.xpose.msra.mxu0 0.0
    %990 = vmatprep.subr.mxu0 0.0
    %991 = vmatpush1.xpose.msra.mxu0 0.0
    %992 = vmatprep.subr.mxu0 0.0
    %993 = vmatpush1.xpose.msra.mxu0 0.0
    %994 = vmatprep.subr.mxu0 0.0
    %995 = vmatpush1.xpose.msra.mxu0 0.0
    %996 = vmatprep.mubr.f32.mxu0 0.0
    %997 = vmatmul.mubr.f32.gmra.mrb[0].mxu0 %v927
    %v998 = vpop.f32.mrb[0].mxu0
    %v999 = vadd.f32 0.0, %v998
    %v1000 = vpop.f32.mrb[0].mxu0
    %1001 = vdwg.mxu0
    %v1003 = vsel %vm338, %v761, 0
    %v1006 = vsel %vm338, %v842, 0
    %1008 = vmatprep.subr.mxu0 0.0
    %1009 = vmatpush1.xpose.msra.mxu0 %v1006
    %1010 = vmatprep.subr.mxu0 0.0
    %1011 = vmatpush1.xpose.msra.mxu0 0.0
    %1012 = vmatprep.subr.mxu0 0.0
    %1013 = vmatpush1.xpose.msra.mxu0 0.0
    %1014 = vmatprep.subr.mxu0 0.0
    %1015 = vmatpush1.xpose.msra.mxu0 0.0
    %1016 = vmatprep.subr.mxu0 0.0
    %1017 = vmatpush1.xpose.msra.mxu0 0.0
    %1018 = vmatprep.subr.mxu0 0.0
    %1019 = vmatpush1.xpose.msra.mxu0 0.0
    %1020 = vmatprep.subr.mxu0 0.0
    %1021 = vmatpush1.xpose.msra.mxu0 0.0
    %1022 = vmatprep.subr.mxu0 0.0
    %1023 = vmatpush1.xpose.msra.mxu0 0.0
    %1024 = vmatprep.subr.mxu0 0.0
    %1025 = vmatpush1.xpose.msra.mxu0 0.0
    %1026 = vmatprep.subr.mxu0 0.0
    %1027 = vmatpush1.xpose.msra.mxu0 0.0
    %1028 = vmatprep.subr.mxu0 0.0
    %1029 = vmatpush1.xpose.msra.mxu0 0.0
    %1030 = vmatprep.subr.mxu0 0.0
    %1031 = vmatpush1.xpose.msra.mxu0 0.0
    %1032 = vmatprep.subr.mxu0 0.0
    %1033 = vmatpush1.xpose.msra.mxu0 0.0
    %1034 = vmatprep.subr.mxu0 0.0
    %1035 = vmatpush1.xpose.msra.mxu0 0.0
    %1036 = vmatprep.subr.mxu0 0.0
    %1037 = vmatpush1.xpose.msra.mxu0 0.0
    %1038 = vmatprep.subr.mxu0 0.0
    %1039 = vmatpush1.xpose.msra.mxu0 0.0
    %1040 = vmatprep.subr.mxu0 0.0
    %1041 = vmatpush1.xpose.msra.mxu0 0.0
    %1042 = vmatprep.subr.mxu0 0.0
    %1043 = vmatpush1.xpose.msra.mxu0 0.0
    %1044 = vmatprep.subr.mxu0 0.0
    %1045 = vmatpush1.xpose.msra.mxu0 0.0
    %1046 = vmatprep.subr.mxu0 0.0
    %1047 = vmatpush1.xpose.msra.mxu0 0.0
    %1048 = vmatprep.subr.mxu0 0.0
    %1049 = vmatpush1.xpose.msra.mxu0 0.0
    %1050 = vmatprep.subr.mxu0 0.0
    %1051 = vmatpush1.xpose.msra.mxu0 0.0
    %1052 = vmatprep.subr.mxu0 0.0
    %1053 = vmatpush1.xpose.msra.mxu0 0.0
    %1054 = vmatprep.subr.mxu0 0.0
    %1055 = vmatpush1.xpose.msra.mxu0 0.0
    %1056 = vmatprep.subr.mxu0 0.0
    %1057 = vmatpush1.xpose.msra.mxu0 0.0
    %1058 = vmatprep.subr.mxu0 0.0
    %1059 = vmatpush1.xpose.msra.mxu0 0.0
    %1060 = vmatprep.subr.mxu0 0.0
    %1061 = vmatpush1.xpose.msra.mxu0 0.0
    %1062 = vmatprep.subr.mxu0 0.0
    %1063 = vmatpush1.xpose.msra.mxu0 0.0
    %1064 = vmatprep.subr.mxu0 0.0
    %1065 = vmatpush1.xpose.msra.mxu0 0.0
    %1066 = vmatprep.subr.mxu0 0.0
    %1067 = vmatpush1.xpose.msra.mxu0 0.0
    %1068 = vmatprep.subr.mxu0 0.0
    %1069 = vmatpush1.xpose.msra.mxu0 0.0
    %1070 = vmatprep.subr.mxu0 0.0
    %1071 = vmatpush1.xpose.msra.mxu0 0.0
    %1072 = vmatprep.mubr.f32.mxu0 0.0
    %1073 = vmatmul.mubr.f32.gmra.mrb[0].mxu0 %v1003
    %v1074 = vpop.f32.mrb[0].mxu0
    %v1075 = vadd.f32 0.0, %v1074
    %v1076 = vpop.f32.mrb[0].mxu0
    %1077 = vdwg.mxu0
    %v1078 = vmul.f32 %v999, 0.35355338
    %v1079 = vmul.f32 %v1075, 0.35355338
    %v1080 = vsel %vm338, %v1078, -inf
    %1081 = vmax.xlane.f32.xlu0 %v1080
    %v1082 = vpop.xlane.xlu0 %1081
    %v1083 = vsel %vm338, %v1079, -inf
    %1084 = vmax.xlane.f32.xlu0 %v1083
    %v1085 = vpop.xlane.xlu0 %1084
    %v1086 = vsub.f32 %v1078, %v1082
    %v1087 = vsub.f32 %v1079, %v1085
    %v1088 = vmul.f32 %v1086, 1.442695
    %v1089 = vpow.pop %v1088
    %v1090 = vmul.f32 %v1087, 1.442695
    %v1091 = vpow.pop %v1090
    %v1092 = vsel %vm338, %v1089, 0.0
    %1093 = vadd.xlane.f32.xlu0 %v1092
    %v1094 = vpop.xlane.xlu0 %1093
    %v1095 = vsel %vm338, %v1091, 0.0
    %1096 = vadd.xlane.f32.xlu0 %v1095
    %v1097 = vpop.xlane.xlu0 %1096
    %v1098 = vrcp.pop %v1094
    %v1099 = vrcp.pop %v1097
    %v1100 = vmul.f32 %v1089, %v1098
    %v1101 = vmul.f32 %v1091, %v1099
    %v1103 = vsel %vm338, %v1100, 0
    %1105 = vmatprep.subr.mxu0 0.0
    %1106 = vmatpush1.msra.mxu0 %v918
    %1107 = vmatprep.subr.mxu0 0.0
    %1108 = vmatpush1.msra.mxu0 0.0
    %1109 = vmatprep.subr.mxu0 0.0
    %1110 = vmatpush1.msra.mxu0 0.0
    %1111 = vmatprep.subr.mxu0 0.0
    %1112 = vmatpush1.msra.mxu0 0.0
    %1113 = vmatprep.subr.mxu0 0.0
    %1114 = vmatpush1.msra.mxu0 0.0
    %1115 = vmatprep.subr.mxu0 0.0
    %1116 = vmatpush1.msra.mxu0 0.0
    %1117 = vmatprep.subr.mxu0 0.0
    %1118 = vmatpush1.msra.mxu0 0.0
    %1119 = vmatprep.subr.mxu0 0.0
    %1120 = vmatpush1.msra.mxu0 0.0
    %1121 = vmatprep.subr.mxu0 0.0
    %1122 = vmatpush1.msra.mxu0 0.0
    %1123 = vmatprep.subr.mxu0 0.0
    %1124 = vmatpush1.msra.mxu0 0.0
    %1125 = vmatprep.subr.mxu0 0.0
    %1126 = vmatpush1.msra.mxu0 0.0
    %1127 = vmatprep.subr.mxu0 0.0
    %1128 = vmatpush1.msra.mxu0 0.0
    %1129 = vmatprep.subr.mxu0 0.0
    %1130 = vmatpush1.msra.mxu0 0.0
    %1131 = vmatprep.subr.mxu0 0.0
    %1132 = vmatpush1.msra.mxu0 0.0
    %1133 = vmatprep.subr.mxu0 0.0
    %1134 = vmatpush1.msra.mxu0 0.0
    %1135 = vmatprep.subr.mxu0 0.0
    %1136 = vmatpush1.msra.mxu0 0.0
    %1137 = vmatprep.subr.mxu0 0.0
    %1138 = vmatpush1.msra.mxu0 0.0
    %1139 = vmatprep.subr.mxu0 0.0
    %1140 = vmatpush1.msra.mxu0 0.0
    %1141 = vmatprep.subr.mxu0 0.0
    %1142 = vmatpush1.msra.mxu0 0.0
    %1143 = vmatprep.subr.mxu0 0.0
    %1144 = vmatpush1.msra.mxu0 0.0
    %1145 = vmatprep.subr.mxu0 0.0
    %1146 = vmatpush1.msra.mxu0 0.0
    %1147 = vmatprep.subr.mxu0 0.0
    %1148 = vmatpush1.msra.mxu0 0.0
    %1149 = vmatprep.subr.mxu0 0.0
    %1150 = vmatpush1.msra.mxu0 0.0
    %1151 = vmatprep.subr.mxu0 0.0
    %1152 = vmatpush1.msra.mxu0 0.0
    %1153 = vmatprep.subr.mxu0 0.0
    %1154 = vmatpush1.msra.mxu0 0.0
    %1155 = vmatprep.subr.mxu0 0.0
    %1156 = vmatpush1.msra.mxu0 0.0
    %1157 = vmatprep.subr.mxu0 0.0
    %1158 = vmatpush1.msra.mxu0 0.0
    %1159 = vmatprep.subr.mxu0 0.0
    %1160 = vmatpush1.msra.mxu0 0.0
    %1161 = vmatprep.subr.mxu0 0.0
    %1162 = vmatpush1.msra.mxu0 0.0
    %1163 = vmatprep.subr.mxu0 0.0
    %1164 = vmatpush1.msra.mxu0 0.0
    %1165 = vmatprep.subr.mxu0 0.0
    %1166 = vmatpush1.msra.mxu0 0.0
    %1167 = vmatprep.subr.mxu0 0.0
    %1168 = vmatpush1.msra.mxu0 0.0
    %1169 = vmatprep.mubr.f32.mxu0 0.0
    %1170 = vmatmul.mubr.f32.gmra.mrb[0].mxu0 %v1103
    %v1171 = vpop.f32.mrb[0].mxu0
    %v1172 = vadd.f32 0.0, %v1171
    %v1173 = vpop.f32.mrb[0].mxu0
    %1174 = vdwg.mxu0
    %v1176 = vsel %vm338, %v1101, 0
    %1178 = vmatprep.subr.mxu0 0.0
    %1179 = vmatpush1.msra.mxu0 %v923
    %1180 = vmatprep.subr.mxu0 0.0
    %1181 = vmatpush1.msra.mxu0 0.0
    %1182 = vmatprep.subr.mxu0 0.0
    %1183 = vmatpush1.msra.mxu0 0.0
    %1184 = vmatprep.subr.mxu0 0.0
    %1185 = vmatpush1.msra.mxu0 0.0
    %1186 = vmatprep.subr.mxu0 0.0
    %1187 = vmatpush1.msra.mxu0 0.0
    %1188 = vmatprep.subr.mxu0 0.0
    %1189 = vmatpush1.msra.mxu0 0.0
    %1190 = vmatprep.subr.mxu0 0.0
    %1191 = vmatpush1.msra.mxu0 0.0
    %1192 = vmatprep.subr.mxu0 0.0
    %1193 = vmatpush1.msra.mxu0 0.0
    %1194 = vmatprep.subr.mxu0 0.0
    %1195 = vmatpush1.msra.mxu0 0.0
    %1196 = vmatprep.subr.mxu0 0.0
    %1197 = vmatpush1.msra.mxu0 0.0
    %1198 = vmatprep.subr.mxu0 0.0
    %1199 = vmatpush1.msra.mxu0 0.0
    %1200 = vmatprep.subr.mxu0 0.0
    %1201 = vmatpush1.msra.mxu0 0.0
    %1202 = vmatprep.subr.mxu0 0.0
    %1203 = vmatpush1.msra.mxu0 0.0
    %1204 = vmatprep.subr.mxu0 0.0
    %1205 = vmatpush1.msra.mxu0 0.0
    %1206 = vmatprep.subr.mxu0 0.0
    %1207 = vmatpush1.msra.mxu0 0.0
    %1208 = vmatprep.subr.mxu0 0.0
    %1209 = vmatpush1.msra.mxu0 0.0
    %1210 = vmatprep.subr.mxu0 0.0
    %1211 = vmatpush1.msra.mxu0 0.0
    %1212 = vmatprep.subr.mxu0 0.0
    %1213 = vmatpush1.msra.mxu0 0.0
    %1214 = vmatprep.subr.mxu0 0.0
    %1215 = vmatpush1.msra.mxu0 0.0
    %1216 = vmatprep.subr.mxu0 0.0
    %1217 = vmatpush1.msra.mxu0 0.0
    %1218 = vmatprep.subr.mxu0 0.0
    %1219 = vmatpush1.msra.mxu0 0.0
    %1220 = vmatprep.subr.mxu0 0.0
    %1221 = vmatpush1.msra.mxu0 0.0
    %1222 = vmatprep.subr.mxu0 0.0
    %1223 = vmatpush1.msra.mxu0 0.0
    %1224 = vmatprep.subr.mxu0 0.0
    %1225 = vmatpush1.msra.mxu0 0.0
    %1226 = vmatprep.subr.mxu0 0.0
    %1227 = vmatpush1.msra.mxu0 0.0
    %1228 = vmatprep.subr.mxu0 0.0
    %1229 = vmatpush1.msra.mxu0 0.0
    %1230 = vmatprep.subr.mxu0 0.0
    %1231 = vmatpush1.msra.mxu0 0.0
    %1232 = vmatprep.subr.mxu0 0.0
    %1233 = vmatpush1.msra.mxu0 0.0
    %1234 = vmatprep.subr.mxu0 0.0
    %1235 = vmatpush1.msra.mxu0 0.0
    %1236 = vmatprep.subr.mxu0 0.0
    %1237 = vmatpush1.msra.mxu0 0.0
    %1238 = vmatprep.subr.mxu0 0.0
    %1239 = vmatpush1.msra.mxu0 0.0
    %1240 = vmatprep.subr.mxu0 0.0
    %1241 = vmatpush1.msra.mxu0 0.0
    %1242 = vmatprep.mubr.f32.mxu0 0.0
    %1243 = vmatmul.mubr.f32.gmra.mrb[0].mxu0 %v1176
    %v1244 = vpop.f32.mrb[0].mxu0
    %v1245 = vadd.f32 0.0, %v1244
    %v1246 = vpop.f32.mrb[0].mxu0
    %1247 = vdwg.mxu0
    %s1248 = scalar_lea.vmem %s7, 8
    %v1249 = vld [vmem:[%s1248] sm:$0xff]
    %v1251 = vsel %vm338, %v1172, 0
    %v1254 = vsel %vm338, %v1245, 0
    %1256 = vmatprep.subr.mxu0 0.0
    %1257 = vmatpush1.msra.mxu0 %v1249
    %1258 = vmatprep.subr.mxu0 0.0
    %1259 = vmatpush1.msra.mxu0 0.0
    %1260 = vmatprep.subr.mxu0 0.0
    %1261 = vmatpush1.msra.mxu0 0.0
    %1262 = vmatprep.subr.mxu0 0.0
    %1263 = vmatpush1.msra.mxu0 0.0
    %1264 = vmatprep.subr.mxu0 0.0
    %1265 = vmatpush1.msra.mxu0 0.0
    %1266 = vmatprep.subr.mxu0 0.0
    %1267 = vmatpush1.msra.mxu0 0.0
    %1268 = vmatprep.subr.mxu0 0.0
    %1269 = vmatpush1.msra.mxu0 0.0
    %1270 = vmatprep.subr.mxu0 0.0
    %1271 = vmatpush1.msra.mxu0 0.0
    %1272 = vmatprep.subr.mxu0 0.0
    %1273 = vmatpush1.msra.mxu0 0.0
    %1274 = vmatprep.subr.mxu0 0.0
    %1275 = vmatpush1.msra.mxu0 0.0
    %1276 = vmatprep.subr.mxu0 0.0
    %1277 = vmatpush1.msra.mxu0 0.0
    %1278 = vmatprep.subr.mxu0 0.0
    %1279 = vmatpush1.msra.mxu0 0.0
    %1280 = vmatprep.subr.mxu0 0.0
    %1281 = vmatpush1.msra.mxu0 0.0
    %1282 = vmatprep.subr.mxu0 0.0
    %1283 = vmatpush1.msra.mxu0 0.0
    %1284 = vmatprep.subr.mxu0 0.0
    %1285 = vmatpush1.msra.mxu0 0.0
    %1286 = vmatprep.subr.mxu0 0.0
    %1287 = vmatpush1.msra.mxu0 0.0
    %1288 = vmatprep.subr.mxu0 0.0
    %1289 = vmatpush1.msra.mxu0 0.0
    %1290 = vmatprep.subr.mxu0 0.0
    %1291 = vmatpush1.msra.mxu0 0.0
    %1292 = vmatprep.subr.mxu0 0.0
    %1293 = vmatpush1.msra.mxu0 0.0
    %1294 = vmatprep.subr.mxu0 0.0
    %1295 = vmatpush1.msra.mxu0 0.0
    %1296 = vmatprep.subr.mxu0 0.0
    %1297 = vmatpush1.msra.mxu0 0.0
    %1298 = vmatprep.subr.mxu0 0.0
    %1299 = vmatpush1.msra.mxu0 0.0
    %1300 = vmatprep.subr.mxu0 0.0
    %1301 = vmatpush1.msra.mxu0 0.0
    %1302 = vmatprep.subr.mxu0 0.0
    %1303 = vmatpush1.msra.mxu0 0.0
    %1304 = vmatprep.subr.mxu0 0.0
    %1305 = vmatpush1.msra.mxu0 0.0
    %1306 = vmatprep.subr.mxu0 0.0
    %1307 = vmatpush1.msra.mxu0 0.0
    %1308 = vmatprep.subr.mxu0 0.0
    %1309 = vmatpush1.msra.mxu0 0.0
    %1310 = vmatprep.subr.mxu0 0.0
    %1311 = vmatpush1.msra.mxu0 0.0
    %1312 = vmatprep.subr.mxu0 0.0
    %1313 = vmatpush1.msra.mxu0 0.0
    %1314 = vmatprep.subr.mxu0 0.0
    %1315 = vmatpush1.msra.mxu0 0.0
    %1316 = vmatprep.subr.mxu0 0.0
    %1317 = vmatpush1.msra.mxu0 0.0
    %1318 = vmatprep.subr.mxu0 0.0
    %1319 = vmatpush1.msra.mxu0 0.0
    %1320 = vmatprep.mubr.f32.mxu0 0.0
    %1321 = vmatmul.mubr.f32.gmra.mrb[0].mxu0 %v1251
    %v1322 = vpop.f32.mrb[0].mxu0
    %v1323 = vadd.f32 0.0, %v1322
    %v1324 = vpop.f32.mrb[0].mxu0
    %1325 = vmatprep.mubr.f32.mxu0 0.0
    %1326 = vmatmul.mubr.f32.gmra.mrb[0].mxu0 %v1254
    %v1327 = vpop.f32.mrb[0].mxu0
    %v1328 = vadd.f32 0.0, %v1327
    %v1329 = vpop.f32.mrb[0].mxu0
    %1330 = vdwg.mxu0
    %v1332 = vsel %vm338, %v585, 0
    %v1335 = vsel %vm338, %v658, 0
    %1337 = vmatprep.subr.mxu0 0.0
    %1338 = vmatpush1.msra.mxu0 %v661
    %1339 = vmatprep.subr.mxu0 0.0
    %1340 = vmatpush1.msra.mxu0 0.0
    %1341 = vmatprep.subr.mxu0 0.0
    %1342 = vmatpush1.msra.mxu0 0.0
    %1343 = vmatprep.subr.mxu0 0.0
    %1344 = vmatpush1.msra.mxu0 0.0
    %1345 = vmatprep.subr.mxu0 0.0
    %1346 = vmatpush1.msra.mxu0 0.0
    %1347 = vmatprep.subr.mxu0 0.0
    %1348 = vmatpush1.msra.mxu0 0.0
    %1349 = vmatprep.subr.mxu0 0.0
    %1350 = vmatpush1.msra.mxu0 0.0
    %1351 = vmatprep.subr.mxu0 0.0
    %1352 = vmatpush1.msra.mxu0 0.0
    %1353 = vmatprep.subr.mxu0 0.0
    %1354 = vmatpush1.msra.mxu0 0.0
    %1355 = vmatprep.subr.mxu0 0.0
    %1356 = vmatpush1.msra.mxu0 0.0
    %1357 = vmatprep.subr.mxu0 0.0
    %1358 = vmatpush1.msra.mxu0 0.0
    %1359 = vmatprep.subr.mxu0 0.0
    %1360 = vmatpush1.msra.mxu0 0.0
    %1361 = vmatprep.subr.mxu0 0.0
    %1362 = vmatpush1.msra.mxu0 0.0
    %1363 = vmatprep.subr.mxu0 0.0
    %1364 = vmatpush1.msra.mxu0 0.0
    %1365 = vmatprep.subr.mxu0 0.0
    %1366 = vmatpush1.msra.mxu0 0.0
    %1367 = vmatprep.subr.mxu0 0.0
    %1368 = vmatpush1.msra.mxu0 0.0
    %1369 = vmatprep.subr.mxu0 0.0
    %1370 = vmatpush1.msra.mxu0 0.0
    %1371 = vmatprep.subr.mxu0 0.0
    %1372 = vmatpush1.msra.mxu0 0.0
    %1373 = vmatprep.subr.mxu0 0.0
    %1374 = vmatpush1.msra.mxu0 0.0
    %1375 = vmatprep.subr.mxu0 0.0
    %1376 = vmatpush1.msra.mxu0 0.0
    %1377 = vmatprep.subr.mxu0 0.0
    %1378 = vmatpush1.msra.mxu0 0.0
    %1379 = vmatprep.subr.mxu0 0.0
    %1380 = vmatpush1.msra.mxu0 0.0
    %1381 = vmatprep.subr.mxu0 0.0
    %1382 = vmatpush1.msra.mxu0 0.0
    %1383 = vmatprep.subr.mxu0 0.0
    %1384 = vmatpush1.msra.mxu0 0.0
    %1385 = vmatprep.subr.mxu0 0.0
    %1386 = vmatpush1.msra.mxu0 0.0
    %1387 = vmatprep.subr.mxu0 0.0
    %1388 = vmatpush1.msra.mxu0 0.0
    %1389 = vmatprep.subr.mxu0 0.0
    %1390 = vmatpush1.msra.mxu0 0.0
    %1391 = vmatprep.subr.mxu0 0.0
    %1392 = vmatpush1.msra.mxu0 0.0
    %1393 = vmatprep.subr.mxu0 0.0
    %1394 = vmatpush1.msra.mxu0 0.0
    %1395 = vmatprep.subr.mxu0 0.0
    %1396 = vmatpush1.msra.mxu0 0.0
    %1397 = vmatprep.subr.mxu0 0.0
    %1398 = vmatpush1.msra.mxu0 0.0
    %1399 = vmatprep.subr.mxu0 0.0
    %1400 = vmatpush1.msra.mxu0 0.0
    %1401 = vmatprep.mubr.f32.mxu0 0.0
    %1402 = vmatmul.mubr.f32.gmra.mrb[0].mxu0 %v1332
    %v1403 = vpop.f32.mrb[0].mxu0
    %v1404 = vadd.f32 %v1323, %v1403
    %v1405 = vpop.f32.mrb[0].mxu0
    %1406 = vmatprep.mubr.f32.mxu0 0.0
    %1407 = vmatmul.mubr.f32.gmra.mrb[0].mxu0 %v1335
    %v1408 = vpop.f32.mrb[0].mxu0
    %v1409 = vadd.f32 %v1328, %v1408
    %v1410 = vpop.f32.mrb[0].mxu0
    %1411 = vdwg.mxu0
    %s1412 = scalar_lea.vmem %s1, 64
    %v1413 = vld [vmem:[%s1412] sm:$0xff]
    %v1414 = vld [vmem:[%s1412 + $0x8] sm:$0xff]
    %v1415 = vld [vmem:[%s1412 + $0x10] sm:$0xff]
    %v1416 = vld [vmem:[%s1412 + $0x18] sm:$0xff]
    %s1417 = scalar_lea.vmem %s2, 64
    %v1418 = vld [vmem:[%s1417] sm:$0xff]
    %v1419 = vld [vmem:[%s1417 + $0x8] sm:$0xff]
    %v1420 = vld [vmem:[%s1417 + $0x10] sm:$0xff]
    %v1421 = vld [vmem:[%s1417 + $0x18] sm:$0xff]
    %s1422 = scalar_lea.vmem %s3, 64
    %v1423 = vld [vmem:[%s1422] sm:$0xff]
    %v1424 = vld [vmem:[%s1422 + $0x8] sm:$0xff]
    %v1425 = vld [vmem:[%s1422 + $0x10] sm:$0xff]
    %v1426 = vld [vmem:[%s1422 + $0x18] sm:$0xff]
    %s1427 = scalar_lea.vmem %s4, 2
    %v1428 = vld [vmem:[%s1427] sm:$0x1]
    %s1429 = scalar_lea.vmem %s5, 2
    %v1430 = vld [vmem:[%s1429] sm:$0x1]
    %s1431 = scalar_lea.vmem %s6, 2
    %v1432 = vld [vmem:[%s1431] sm:$0x1]
    %v1434 = vlaneseq
    %v1435 = vshrl.u32 %v1434, 7
    %v1436 = vsub.s32 0, %v1435
    %v1437 = vrot.slane %v1428, %v1436
    %1439 = vmatprep.subr.mxu0 0.0
    %1440 = vmatpush1.msra.mxu0 %v1413
    %1441 = vmatprep.subr.mxu0 0.0
    %1442 = vmatpush1.msra.mxu0 %v1414
    %1443 = vmatprep.subr.mxu0 0.0
    %1444 = vmatpush1.msra.mxu0 %v1415
    %1445 = vmatprep.subr.mxu0 0.0
    %1446 = vmatpush1.msra.mxu0 %v1416
    %1447 = vmatprep.subr.mxu0 0.0
    %1448 = vmatpush1.msra.mxu0 0.0
    %1449 = vmatprep.subr.mxu0 0.0
    %1450 = vmatpush1.msra.mxu0 0.0
    %1451 = vmatprep.subr.mxu0 0.0
    %1452 = vmatpush1.msra.mxu0 0.0
    %1453 = vmatprep.subr.mxu0 0.0
    %1454 = vmatpush1.msra.mxu0 0.0
    %1455 = vmatprep.subr.mxu0 0.0
    %1456 = vmatpush1.msra.mxu0 0.0
    %1457 = vmatprep.subr.mxu0 0.0
    %1458 = vmatpush1.msra.mxu0 0.0
    %1459 = vmatprep.subr.mxu0 0.0
    %1460 = vmatpush1.msra.mxu0 0.0
    %1461 = vmatprep.subr.mxu0 0.0
    %1462 = vmatpush1.msra.mxu0 0.0
    %1463 = vmatprep.subr.mxu0 0.0
    %1464 = vmatpush1.msra.mxu0 0.0
    %1465 = vmatprep.subr.mxu0 0.0
    %1466 = vmatpush1.msra.mxu0 0.0
    %1467 = vmatprep.subr.mxu0 0.0
    %1468 = vmatpush1.msra.mxu0 0.0
    %1469 = vmatprep.subr.mxu0 0.0
    %1470 = vmatpush1.msra.mxu0 0.0
    %1471 = vmatprep.subr.mxu0 0.0
    %1472 = vmatpush1.msra.mxu0 0.0
    %1473 = vmatprep.subr.mxu0 0.0
    %1474 = vmatpush1.msra.mxu0 0.0
    %1475 = vmatprep.subr.mxu0 0.0
    %1476 = vmatpush1.msra.mxu0 0.0
    %1477 = vmatprep.subr.mxu0 0.0
    %1478 = vmatpush1.msra.mxu0 0.0
    %1479 = vmatprep.subr.mxu0 0.0
    %1480 = vmatpush1.msra.mxu0 0.0
    %1481 = vmatprep.subr.mxu0 0.0
    %1482 = vmatpush1.msra.mxu0 0.0
    %1483 = vmatprep.subr.mxu0 0.0
    %1484 = vmatpush1.msra.mxu0 0.0
    %1485 = vmatprep.subr.mxu0 0.0
    %1486 = vmatpush1.msra.mxu0 0.0
    %1487 = vmatprep.subr.mxu0 0.0
    %1488 = vmatpush1.msra.mxu0 0.0
    %1489 = vmatprep.subr.mxu0 0.0
    %1490 = vmatpush1.msra.mxu0 0.0
    %1491 = vmatprep.subr.mxu0 0.0
    %1492 = vmatpush1.msra.mxu0 0.0
    %1493 = vmatprep.subr.mxu0 0.0
    %1494 = vmatpush1.msra.mxu0 0.0
    %1495 = vmatprep.subr.mxu0 0.0
    %1496 = vmatpush1.msra.mxu0 0.0
    %1497 = vmatprep.subr.mxu0 0.0
    %1498 = vmatpush1.msra.mxu0 0.0
    %1499 = vmatprep.subr.mxu0 0.0
    %1500 = vmatpush1.msra.mxu0 0.0
    %1501 = vmatprep.subr.mxu0 0.0
    %1502 = vmatpush1.msra.mxu0 0.0
    %1503 = vmatprep.mubr.f32.mxu0 0.0
    %1504 = vmatmul.mubr.f32.gmra.mrb[0].mxu0 %v96
    %v1505 = vpop.f32.mrb[0].mxu0
    %v1506 = vadd.f32 %v1437, %v1505
    %v1507 = vpop.f32.mrb[0].mxu0
    %1508 = vmatprep.mubr.f32.mxu0 0.0
    %1509 = vmatmul.mubr.f32.gmra.mrb[0].mxu0 %v99
    %v1510 = vpop.f32.mrb[0].mxu0
    %v1511 = vadd.f32 %v1437, %v1510
    %v1512 = vpop.f32.mrb[0].mxu0
    %1513 = vdwg.mxu0
    %v1515 = vlaneseq
    %v1516 = vshrl.u32 %v1515, 7
    %v1517 = vsub.s32 0, %v1516
    %v1518 = vrot.slane %v1430, %v1517
    %1520 = vmatprep.subr.mxu0 0.0
    %1521 = vmatpush1.msra.mxu0 %v1418
    %1522 = vmatprep.subr.mxu0 0.0
    %1523 = vmatpush1.msra.mxu0 %v1419
    %1524 = vmatprep.subr.mxu0 0.0
    %1525 = vmatpush1.msra.mxu0 %v1420
    %1526 = vmatprep.subr.mxu0 0.0
    %1527 = vmatpush1.msra.mxu0 %v1421
    %1528 = vmatprep.subr.mxu0 0.0
    %1529 = vmatpush1.msra.mxu0 0.0
    %1530 = vmatprep.subr.mxu0 0.0
    %1531 = vmatpush1.msra.mxu0 0.0
    %1532 = vmatprep.subr.mxu0 0.0
    %1533 = vmatpush1.msra.mxu0 0.0
    %1534 = vmatprep.subr.mxu0 0.0
    %1535 = vmatpush1.msra.mxu0 0.0
    %1536 = vmatprep.subr.mxu0 0.0
    %1537 = vmatpush1.msra.mxu0 0.0
    %1538 = vmatprep.subr.mxu0 0.0
    %1539 = vmatpush1.msra.mxu0 0.0
    %1540 = vmatprep.subr.mxu0 0.0
    %1541 = vmatpush1.msra.mxu0 0.0
    %1542 = vmatprep.subr.mxu0 0.0
    %1543 = vmatpush1.msra.mxu0 0.0
    %1544 = vmatprep.subr.mxu0 0.0
    %1545 = vmatpush1.msra.mxu0 0.0
    %1546 = vmatprep.subr.mxu0 0.0
    %1547 = vmatpush1.msra.mxu0 0.0
    %1548 = vmatprep.subr.mxu0 0.0
    %1549 = vmatpush1.msra.mxu0 0.0
    %1550 = vmatprep.subr.mxu0 0.0
    %1551 = vmatpush1.msra.mxu0 0.0
    %1552 = vmatprep.subr.mxu0 0.0
    %1553 = vmatpush1.msra.mxu0 0.0
    %1554 = vmatprep.subr.mxu0 0.0
    %1555 = vmatpush1.msra.mxu0 0.0
    %1556 = vmatprep.subr.mxu0 0.0
    %1557 = vmatpush1.msra.mxu0 0.0
    %1558 = vmatprep.subr.mxu0 0.0
    %1559 = vmatpush1.msra.mxu0 0.0
    %1560 = vmatprep.subr.mxu0 0.0
    %1561 = vmatpush1.msra.mxu0 0.0
    %1562 = vmatprep.subr.mxu0 0.0
    %1563 = vmatpush1.msra.mxu0 0.0
    %1564 = vmatprep.subr.mxu0 0.0
    %1565 = vmatpush1.msra.mxu0 0.0
    %1566 = vmatprep.subr.mxu0 0.0
    %1567 = vmatpush1.msra.mxu0 0.0
    %1568 = vmatprep.subr.mxu0 0.0
    %1569 = vmatpush1.msra.mxu0 0.0
    %1570 = vmatprep.subr.mxu0 0.0
    %1571 = vmatpush1.msra.mxu0 0.0
    %1572 = vmatprep.subr.mxu0 0.0
    %1573 = vmatpush1.msra.mxu0 0.0
    %1574 = vmatprep.subr.mxu0 0.0
    %1575 = vmatpush1.msra.mxu0 0.0
    %1576 = vmatprep.subr.mxu0 0.0
    %1577 = vmatpush1.msra.mxu0 0.0
    %1578 = vmatprep.subr.mxu0 0.0
    %1579 = vmatpush1.msra.mxu0 0.0
    %1580 = vmatprep.subr.mxu0 0.0
    %1581 = vmatpush1.msra.mxu0 0.0
    %1582 = vmatprep.subr.mxu0 0.0
    %1583 = vmatpush1.msra.mxu0 0.0
    %1584 = vmatprep.mubr.f32.mxu0 0.0
    %1585 = vmatmul.mubr.f32.gmra.mrb[0].mxu0 %v96
    %v1586 = vpop.f32.mrb[0].mxu0
    %v1587 = vadd.f32 %v1518, %v1586
    %v1588 = vpop.f32.mrb[0].mxu0
    %1589 = vmatprep.mubr.f32.mxu0 0.0
    %1590 = vmatmul.mubr.f32.gmra.mrb[0].mxu0 %v99
    %v1591 = vpop.f32.mrb[0].mxu0
    %v1592 = vadd.f32 %v1518, %v1591
    %v1593 = vpop.f32.mrb[0].mxu0
    %1594 = vdwg.mxu0
    %v1596 = vlaneseq
    %v1597 = vshrl.u32 %v1596, 7
    %v1598 = vsub.s32 0, %v1597
    %v1599 = vrot.slane %v1432, %v1598
    %1601 = vmatprep.subr.mxu0 0.0
    %1602 = vmatpush1.msra.mxu0 %v1423
    %1603 = vmatprep.subr.mxu0 0.0
    %1604 = vmatpush1.msra.mxu0 %v1424
    %1605 = vmatprep.subr.mxu0 0.0
    %1606 = vmatpush1.msra.mxu0 %v1425
    %1607 = vmatprep.subr.mxu0 0.0
    %1608 = vmatpush1.msra.mxu0 %v1426
    %1609 = vmatprep.subr.mxu0 0.0
    %1610 = vmatpush1.msra.mxu0 0.0
    %1611 = vmatprep.subr.mxu0 0.0
    %1612 = vmatpush1.msra.mxu0 0.0
    %1613 = vmatprep.subr.mxu0 0.0
    %1614 = vmatpush1.msra.mxu0 0.0
    %1615 = vmatprep.subr.mxu0 0.0
    %1616 = vmatpush1.msra.mxu0 0.0
    %1617 = vmatprep.subr.mxu0 0.0
    %1618 = vmatpush1.msra.mxu0 0.0
    %1619 = vmatprep.subr.mxu0 0.0
    %1620 = vmatpush1.msra.mxu0 0.0
    %1621 = vmatprep.subr.mxu0 0.0
    %1622 = vmatpush1.msra.mxu0 0.0
    %1623 = vmatprep.subr.mxu0 0.0
    %1624 = vmatpush1.msra.mxu0 0.0
    %1625 = vmatprep.subr.mxu0 0.0
    %1626 = vmatpush1.msra.mxu0 0.0
    %1627 = vmatprep.subr.mxu0 0.0
    %1628 = vmatpush1.msra.mxu0 0.0
    %1629 = vmatprep.subr.mxu0 0.0
    %1630 = vmatpush1.msra.mxu0 0.0
    %1631 = vmatprep.subr.mxu0 0.0
    %1632 = vmatpush1.msra.mxu0 0.0
    %1633 = vmatprep.subr.mxu0 0.0
    %1634 = vmatpush1.msra.mxu0 0.0
    %1635 = vmatprep.subr.mxu0 0.0
    %1636 = vmatpush1.msra.mxu0 0.0
    %1637 = vmatprep.subr.mxu0 0.0
    %1638 = vmatpush1.msra.mxu0 0.0
    %1639 = vmatprep.subr.mxu0 0.0
    %1640 = vmatpush1.msra.mxu0 0.0
    %1641 = vmatprep.subr.mxu0 0.0
    %1642 = vmatpush1.msra.mxu0 0.0
    %1643 = vmatprep.subr.mxu0 0.0
    %1644 = vmatpush1.msra.mxu0 0.0
    %1645 = vmatprep.subr.mxu0 0.0
    %1646 = vmatpush1.msra.mxu0 0.0
    %1647 = vmatprep.subr.mxu0 0.0
    %1648 = vmatpush1.msra.mxu0 0.0
    %1649 = vmatprep.subr.mxu0 0.0
    %1650 = vmatpush1.msra.mxu0 0.0
    %1651 = vmatprep.subr.mxu0 0.0
    %1652 = vmatpush1.msra.mxu0 0.0
    %1653 = vmatprep.subr.mxu0 0.0
    %1654 = vmatpush1.msra.mxu0 0.0
    %1655 = vmatprep.subr.mxu0 0.0
    %1656 = vmatpush1.msra.mxu0 0.0
    %1657 = vmatprep.subr.mxu0 0.0
    %1658 = vmatpush1.msra.mxu0 0.0
    %1659 = vmatprep.subr.mxu0 0.0
    %1660 = vmatpush1.msra.mxu0 0.0
    %1661 = vmatprep.subr.mxu0 0.0
    %1662 = vmatpush1.msra.mxu0 0.0
    %1663 = vmatprep.subr.mxu0 0.0
    %1664 = vmatpush1.msra.mxu0 0.0
    %1665 = vmatprep.mubr.f32.mxu0 0.0
    %1666 = vmatmul.mubr.f32.gmra.mrb[0].mxu0 %v96
    %v1667 = vpop.f32.mrb[0].mxu0
    %v1668 = vadd.f32 %v1599, %v1667
    %v1669 = vpop.f32.mrb[0].mxu0
    %1670 = vmatprep.mubr.f32.mxu0 0.0
    %1671 = vmatmul.mubr.f32.gmra.mrb[0].mxu0 %v99
    %v1672 = vpop.f32.mrb[0].mxu0
    %v1673 = vadd.f32 %v1599, %v1672
    %v1674 = vpop.f32.mrb[0].mxu0
    %1675 = vdwg.mxu0
    %v1677 = vsel %vm338, %v1506, 0
    %v1680 = vsel %vm338, %v1587, 0
    %1682 = vmatprep.subr.mxu0 0.0
    %1683 = vmatpush1.xpose.msra.mxu0 %v1680
    %1684 = vmatprep.subr.mxu0 0.0
    %1685 = vmatpush1.xpose.msra.mxu0 0.0
    %1686 = vmatprep.subr.mxu0 0.0
    %1687 = vmatpush1.xpose.msra.mxu0 0.0
    %1688 = vmatprep.subr.mxu0 0.0
    %1689 = vmatpush1.xpose.msra.mxu0 0.0
    %1690 = vmatprep.subr.mxu0 0.0
    %1691 = vmatpush1.xpose.msra.mxu0 0.0
    %1692 = vmatprep.subr.mxu0 0.0
    %1693 = vmatpush1.xpose.msra.mxu0 0.0
    %1694 = vmatprep.subr.mxu0 0.0
    %1695 = vmatpush1.xpose.msra.mxu0 0.0
    %1696 = vmatprep.subr.mxu0 0.0
    %1697 = vmatpush1.xpose.msra.mxu0 0.0
    %1698 = vmatprep.subr.mxu0 0.0
    %1699 = vmatpush1.xpose.msra.mxu0 0.0
    %1700 = vmatprep.subr.mxu0 0.0
    %1701 = vmatpush1.xpose.msra.mxu0 0.0
    %1702 = vmatprep.subr.mxu0 0.0
    %1703 = vmatpush1.xpose.msra.mxu0 0.0
    %1704 = vmatprep.subr.mxu0 0.0
    %1705 = vmatpush1.xpose.msra.mxu0 0.0
    %1706 = vmatprep.subr.mxu0 0.0
    %1707 = vmatpush1.xpose.msra.mxu0 0.0
    %1708 = vmatprep.subr.mxu0 0.0
    %1709 = vmatpush1.xpose.msra.mxu0 0.0
    %1710 = vmatprep.subr.mxu0 0.0
    %1711 = vmatpush1.xpose.msra.mxu0 0.0
    %1712 = vmatprep.subr.mxu0 0.0
    %1713 = vmatpush1.xpose.msra.mxu0 0.0
    %1714 = vmatprep.subr.mxu0 0.0
    %1715 = vmatpush1.xpose.msra.mxu0 0.0
    %1716 = vmatprep.subr.mxu0 0.0
    %1717 = vmatpush1.xpose.msra.mxu0 0.0
    %1718 = vmatprep.subr.mxu0 0.0
    %1719 = vmatpush1.xpose.msra.mxu0 0.0
    %1720 = vmatprep.subr.mxu0 0.0
    %1721 = vmatpush1.xpose.msra.mxu0 0.0
    %1722 = vmatprep.subr.mxu0 0.0
    %1723 = vmatpush1.xpose.msra.mxu0 0.0
    %1724 = vmatprep.subr.mxu0 0.0
    %1725 = vmatpush1.xpose.msra.mxu0 0.0
    %1726 = vmatprep.subr.mxu0 0.0
    %1727 = vmatpush1.xpose.msra.mxu0 0.0
    %1728 = vmatprep.subr.mxu0 0.0
    %1729 = vmatpush1.xpose.msra.mxu0 0.0
    %1730 = vmatprep.subr.mxu0 0.0
    %1731 = vmatpush1.xpose.msra.mxu0 0.0
    %1732 = vmatprep.subr.mxu0 0.0
    %1733 = vmatpush1.xpose.msra.mxu0 0.0
    %1734 = vmatprep.subr.mxu0 0.0
    %1735 = vmatpush1.xpose.msra.mxu0 0.0
    %1736 = vmatprep.subr.mxu0 0.0
    %1737 = vmatpush1.xpose.msra.mxu0 0.0
    %1738 = vmatprep.subr.mxu0 0.0
    %1739 = vmatpush1.xpose.msra.mxu0 0.0
    %1740 = vmatprep.subr.mxu0 0.0
    %1741 = vmatpush1.xpose.msra.mxu0 0.0
    %1742 = vmatprep.subr.mxu0 0.0
    %1743 = vmatpush1.xpose.msra.mxu0 0.0
    %1744 = vmatprep.subr.mxu0 0.0
    %1745 = vmatpush1.xpose.msra.mxu0 0.0
    %1746 = vmatprep.mubr.f32.mxu0 0.0
    %1747 = vmatmul.mubr.f32.gmra.mrb[0].mxu0 %v1677
    %v1748 = vpop.f32.mrb[0].mxu0
    %v1749 = vadd.f32 0.0, %v1748
    %v1750 = vpop.f32.mrb[0].mxu0
    %1751 = vdwg.mxu0
    %v1753 = vsel %vm338, %v1511, 0
    %v1756 = vsel %vm338, %v1592, 0
    %1758 = vmatprep.subr.mxu0 0.0
    %1759 = vmatpush1.xpose.msra.mxu0 %v1756
    %1760 = vmatprep.subr.mxu0 0.0
    %1761 = vmatpush1.xpose.msra.mxu0 0.0
    %1762 = vmatprep.subr.mxu0 0.0
    %1763 = vmatpush1.xpose.msra.mxu0 0.0
    %1764 = vmatprep.subr.mxu0 0.0
    %1765 = vmatpush1.xpose.msra.mxu0 0.0
    %1766 = vmatprep.subr.mxu0 0.0
    %1767 = vmatpush1.xpose.msra.mxu0 0.0
    %1768 = vmatprep.subr.mxu0 0.0
    %1769 = vmatpush1.xpose.msra.mxu0 0.0
    %1770 = vmatprep.subr.mxu0 0.0
    %1771 = vmatpush1.xpose.msra.mxu0 0.0
    %1772 = vmatprep.subr.mxu0 0.0
    %1773 = vmatpush1.xpose.msra.mxu0 0.0
    %1774 = vmatprep.subr.mxu0 0.0
    %1775 = vmatpush1.xpose.msra.mxu0 0.0
    %1776 = vmatprep.subr.mxu0 0.0
    %1777 = vmatpush1.xpose.msra.mxu0 0.0
    %1778 = vmatprep.subr.mxu0 0.0
    %1779 = vmatpush1.xpose.msra.mxu0 0.0
    %1780 = vmatprep.subr.mxu0 0.0
    %1781 = vmatpush1.xpose.msra.mxu0 0.0
    %1782 = vmatprep.subr.mxu0 0.0
    %1783 = vmatpush1.xpose.msra.mxu0 0.0
    %1784 = vmatprep.subr.mxu0 0.0
    %1785 = vmatpush1.xpose.msra.mxu0 0.0
    %1786 = vmatprep.subr.mxu0 0.0
    %1787 = vmatpush1.xpose.msra.mxu0 0.0
    %1788 = vmatprep.subr.mxu0 0.0
    %1789 = vmatpush1.xpose.msra.mxu0 0.0
    %1790 = vmatprep.subr.mxu0 0.0
    %1791 = vmatpush1.xpose.msra.mxu0 0.0
    %1792 = vmatprep.subr.mxu0 0.0
    %1793 = vmatpush1.xpose.msra.mxu0 0.0
    %1794 = vmatprep.subr.mxu0 0.0
    %1795 = vmatpush1.xpose.msra.mxu0 0.0
    %1796 = vmatprep.subr.mxu0 0.0
    %1797 = vmatpush1.xpose.msra.mxu0 0.0
    %1798 = vmatprep.subr.mxu0 0.0
    %1799 = vmatpush1.xpose.msra.mxu0 0.0
    %1800 = vmatprep.subr.mxu0 0.0
    %1801 = vmatpush1.xpose.msra.mxu0 0.0
    %1802 = vmatprep.subr.mxu0 0.0
    %1803 = vmatpush1.xpose.msra.mxu0 0.0
    %1804 = vmatprep.subr.mxu0 0.0
    %1805 = vmatpush1.xpose.msra.mxu0 0.0
    %1806 = vmatprep.subr.mxu0 0.0
    %1807 = vmatpush1.xpose.msra.mxu0 0.0
    %1808 = vmatprep.subr.mxu0 0.0
    %1809 = vmatpush1.xpose.msra.mxu0 0.0
    %1810 = vmatprep.subr.mxu0 0.0
    %1811 = vmatpush1.xpose.msra.mxu0 0.0
    %1812 = vmatprep.subr.mxu0 0.0
    %1813 = vmatpush1.xpose.msra.mxu0 0.0
    %1814 = vmatprep.subr.mxu0 0.0
    %1815 = vmatpush1.xpose.msra.mxu0 0.0
    %1816 = vmatprep.subr.mxu0 0.0
    %1817 = vmatpush1.xpose.msra.mxu0 0.0
    %1818 = vmatprep.subr.mxu0 0.0
    %1819 = vmatpush1.xpose.msra.mxu0 0.0
    %1820 = vmatprep.subr.mxu0 0.0
    %1821 = vmatpush1.xpose.msra.mxu0 0.0
    %1822 = vmatprep.mubr.f32.mxu0 0.0
    %1823 = vmatmul.mubr.f32.gmra.mrb[0].mxu0 %v1753
    %v1824 = vpop.f32.mrb[0].mxu0
    %v1825 = vadd.f32 0.0, %v1824
    %v1826 = vpop.f32.mrb[0].mxu0
    %1827 = vdwg.mxu0
    %v1828 = vmul.f32 %v1749, 0.35355338
    %v1829 = vmul.f32 %v1825, 0.35355338
    %v1830 = vsel %vm338, %v1828, -inf
    %1831 = vmax.xlane.f32.xlu0 %v1830
    %v1832 = vpop.xlane.xlu0 %1831
    %v1833 = vsel %vm338, %v1829, -inf
    %1834 = vmax.xlane.f32.xlu0 %v1833
    %v1835 = vpop.xlane.xlu0 %1834
    %v1836 = vsub.f32 %v1828, %v1832
    %v1837 = vsub.f32 %v1829, %v1835
    %v1838 = vmul.f32 %v1836, 1.442695
    %v1839 = vpow.pop %v1838
    %v1840 = vmul.f32 %v1837, 1.442695
    %v1841 = vpow.pop %v1840
    %v1842 = vsel %vm338, %v1839, 0.0
    %1843 = vadd.xlane.f32.xlu0 %v1842
    %v1844 = vpop.xlane.xlu0 %1843
    %v1845 = vsel %vm338, %v1841, 0.0
    %1846 = vadd.xlane.f32.xlu0 %v1845
    %v1847 = vpop.xlane.xlu0 %1846
    %v1848 = vrcp.pop %v1844
    %v1849 = vrcp.pop %v1847
    %v1850 = vmul.f32 %v1839, %v1848
    %v1851 = vmul.f32 %v1841, %v1849
    %v1853 = vsel %vm338, %v1850, 0
    %1855 = vmatprep.subr.mxu0 0.0
    %1856 = vmatpush1.msra.mxu0 %v1668
    %1857 = vmatprep.subr.mxu0 0.0
    %1858 = vmatpush1.msra.mxu0 0.0
    %1859 = vmatprep.subr.mxu0 0.0
    %1860 = vmatpush1.msra.mxu0 0.0
    %1861 = vmatprep.subr.mxu0 0.0
    %1862 = vmatpush1.msra.mxu0 0.0
    %1863 = vmatprep.subr.mxu0 0.0
    %1864 = vmatpush1.msra.mxu0 0.0
    %1865 = vmatprep.subr.mxu0 0.0
    %1866 = vmatpush1.msra.mxu0 0.0
    %1867 = vmatprep.subr.mxu0 0.0
    %1868 = vmatpush1.msra.mxu0 0.0
    %1869 = vmatprep.subr.mxu0 0.0
    %1870 = vmatpush1.msra.mxu0 0.0
    %1871 = vmatprep.subr.mxu0 0.0
    %1872 = vmatpush1.msra.mxu0 0.0
    %1873 = vmatprep.subr.mxu0 0.0
    %1874 = vmatpush1.msra.mxu0 0.0
    %1875 = vmatprep.subr.mxu0 0.0
    %1876 = vmatpush1.msra.mxu0 0.0
    %1877 = vmatprep.subr.mxu0 0.0
    %1878 = vmatpush1.msra.mxu0 0.0
    %1879 = vmatprep.subr.mxu0 0.0
    %1880 = vmatpush1.msra.mxu0 0.0
    %1881 = vmatprep.subr.mxu0 0.0
    %1882 = vmatpush1.msra.mxu0 0.0
    %1883 = vmatprep.subr.mxu0 0.0
    %1884 = vmatpush1.msra.mxu0 0.0
    %1885 = vmatprep.subr.mxu0 0.0
    %1886 = vmatpush1.msra.mxu0 0.0
    %1887 = vmatprep.subr.mxu0 0.0
    %1888 = vmatpush1.msra.mxu0 0.0
    %1889 = vmatprep.subr.mxu0 0.0
    %1890 = vmatpush1.msra.mxu0 0.0
    %1891 = vmatprep.subr.mxu0 0.0
    %1892 = vmatpush1.msra.mxu0 0.0
    %1893 = vmatprep.subr.mxu0 0.0
    %1894 = vmatpush1.msra.mxu0 0.0
    %1895 = vmatprep.subr.mxu0 0.0
    %1896 = vmatpush1.msra.mxu0 0.0
    %1897 = vmatprep.subr.mxu0 0.0
    %1898 = vmatpush1.msra.mxu0 0.0
    %1899 = vmatprep.subr.mxu0 0.0
    %1900 = vmatpush1.msra.mxu0 0.0
    %1901 = vmatprep.subr.mxu0 0.0
    %1902 = vmatpush1.msra.mxu0 0.0
    %1903 = vmatprep.subr.mxu0 0.0
    %1904 = vmatpush1.msra.mxu0 0.0
    %1905 = vmatprep.subr.mxu0 0.0
    %1906 = vmatpush1.msra.mxu0 0.0
    %1907 = vmatprep.subr.mxu0 0.0
    %1908 = vmatpush1.msra.mxu0 0.0
    %1909 = vmatprep.subr.mxu0 0.0
    %1910 = vmatpush1.msra.mxu0 0.0
    %1911 = vmatprep.subr.mxu0 0.0
    %1912 = vmatpush1.msra.mxu0 0.0
    %1913 = vmatprep.subr.mxu0 0.0
    %1914 = vmatpush1.msra.mxu0 0.0
    %1915 = vmatprep.subr.mxu0 0.0
    %1916 = vmatpush1.msra.mxu0 0.0
    %1917 = vmatprep.subr.mxu0 0.0
    %1918 = vmatpush1.msra.mxu0 0.0
    %1919 = vmatprep.mubr.f32.mxu0 0.0
    %1920 = vmatmul.mubr.f32.gmra.mrb[0].mxu0 %v1853
    %v1921 = vpop.f32.mrb[0].mxu0
    %v1922 = vadd.f32 0.0, %v1921
    %v1923 = vpop.f32.mrb[0].mxu0
    %1924 = vdwg.mxu0
    %v1926 = vsel %vm338, %v1851, 0
    %1928 = vmatprep.subr.mxu0 0.0
    %1929 = vmatpush1.msra.mxu0 %v1673
    %1930 = vmatprep.subr.mxu0 0.0
    %1931 = vmatpush1.msra.mxu0 0.0
    %1932 = vmatprep.subr.mxu0 0.0
    %1933 = vmatpush1.msra.mxu0 0.0
    %1934 = vmatprep.subr.mxu0 0.0
    %1935 = vmatpush1.msra.mxu0 0.0
    %1936 = vmatprep.subr.mxu0 0.0
    %1937 = vmatpush1.msra.mxu0 0.0
    %1938 = vmatprep.subr.mxu0 0.0
    %1939 = vmatpush1.msra.mxu0 0.0
    %1940 = vmatprep.subr.mxu0 0.0
    %1941 = vmatpush1.msra.mxu0 0.0
    %1942 = vmatprep.subr.mxu0 0.0
    %1943 = vmatpush1.msra.mxu0 0.0
    %1944 = vmatprep.subr.mxu0 0.0
    %1945 = vmatpush1.msra.mxu0 0.0
    %1946 = vmatprep.subr.mxu0 0.0
    %1947 = vmatpush1.msra.mxu0 0.0
    %1948 = vmatprep.subr.mxu0 0.0
    %1949 = vmatpush1.msra.mxu0 0.0
    %1950 = vmatprep.subr.mxu0 0.0
    %1951 = vmatpush1.msra.mxu0 0.0
    %1952 = vmatprep.subr.mxu0 0.0
    %1953 = vmatpush1.msra.mxu0 0.0
    %1954 = vmatprep.subr.mxu0 0.0
    %1955 = vmatpush1.msra.mxu0 0.0
    %1956 = vmatprep.subr.mxu0 0.0
    %1957 = vmatpush1.msra.mxu0 0.0
    %1958 = vmatprep.subr.mxu0 0.0
    %1959 = vmatpush1.msra.mxu0 0.0
    %1960 = vmatprep.subr.mxu0 0.0
    %1961 = vmatpush1.msra.mxu0 0.0
    %1962 = vmatprep.subr.mxu0 0.0
    %1963 = vmatpush1.msra.mxu0 0.0
    %1964 = vmatprep.subr.mxu0 0.0
    %1965 = vmatpush1.msra.mxu0 0.0
    %1966 = vmatprep.subr.mxu0 0.0
    %1967 = vmatpush1.msra.mxu0 0.0
    %1968 = vmatprep.subr.mxu0 0.0
    %1969 = vmatpush1.msra.mxu0 0.0
    %1970 = vmatprep.subr.mxu0 0.0
    %1971 = vmatpush1.msra.mxu0 0.0
    %1972 = vmatprep.subr.mxu0 0.0
    %1973 = vmatpush1.msra.mxu0 0.0
    %1974 = vmatprep.subr.mxu0 0.0
    %1975 = vmatpush1.msra.mxu0 0.0
    %1976 = vmatprep.subr.mxu0 0.0
    %1977 = vmatpush1.msra.mxu0 0.0
    %1978 = vmatprep.subr.mxu0 0.0
    %1979 = vmatpush1.msra.mxu0 0.0
    %1980 = vmatprep.subr.mxu0 0.0
    %1981 = vmatpush1.msra.mxu0 0.0
    %1982 = vmatprep.subr.mxu0 0.0
    %1983 = vmatpush1.msra.mxu0 0.0
    %1984 = vmatprep.subr.mxu0 0.0
    %1985 = vmatpush1.msra.mxu0 0.0
    %1986 = vmatprep.subr.mxu0 0.0
    %1987 = vmatpush1.msra.mxu0 0.0
    %1988 = vmatprep.subr.mxu0 0.0
    %1989 = vmatpush1.msra.mxu0 0.0
    %1990 = vmatprep.subr.mxu0 0.0
    %1991 = vmatpush1.msra.mxu0 0.0
    %1992 = vmatprep.mubr.f32.mxu0 0.0
    %1993 = vmatmul.mubr.f32.gmra.mrb[0].mxu0 %v1926
    %v1994 = vpop.f32.mrb[0].mxu0
    %v1995 = vadd.f32 0.0, %v1994
    %v1996 = vpop.f32.mrb[0].mxu0
    %1997 = vdwg.mxu0
    %s1998 = scalar_lea.vmem %s7, 16
    %v1999 = vld [vmem:[%s1998] sm:$0xff]
    %v2001 = vsel %vm338, %v1922, 0
    %v2004 = vsel %vm338, %v1995, 0
    %2006 = vmatprep.subr.mxu0 0.0
    %2007 = vmatpush1.msra.mxu0 %v1999
    %2008 = vmatprep.subr.mxu0 0.0
    %2009 = vmatpush1.msra.mxu0 0.0
    %2010 = vmatprep.subr.mxu0 0.0
    %2011 = vmatpush1.msra.mxu0 0.0
    %2012 = vmatprep.subr.mxu0 0.0
    %2013 = vmatpush1.msra.mxu0 0.0
    %2014 = vmatprep.subr.mxu0 0.0
    %2015 = vmatpush1.msra.mxu0 0.0
    %2016 = vmatprep.subr.mxu0 0.0
    %2017 = vmatpush1.msra.mxu0 0.0
    %2018 = vmatprep.subr.mxu0 0.0
    %2019 = vmatpush1.msra.mxu0 0.0
    %2020 = vmatprep.subr.mxu0 0.0
    %2021 = vmatpush1.msra.mxu0 0.0
    %2022 = vmatprep.subr.mxu0 0.0
    %2023 = vmatpush1.msra.mxu0 0.0
    %2024 = vmatprep.subr.mxu0 0.0
    %2025 = vmatpush1.msra.mxu0 0.0
    %2026 = vmatprep.subr.mxu0 0.0
    %2027 = vmatpush1.msra.mxu0 0.0
    %2028 = vmatprep.subr.mxu0 0.0
    %2029 = vmatpush1.msra.mxu0 0.0
    %2030 = vmatprep.subr.mxu0 0.0
    %2031 = vmatpush1.msra.mxu0 0.0
    %2032 = vmatprep.subr.mxu0 0.0
    %2033 = vmatpush1.msra.mxu0 0.0
    %2034 = vmatprep.subr.mxu0 0.0
    %2035 = vmatpush1.msra.mxu0 0.0
    %2036 = vmatprep.subr.mxu0 0.0
    %2037 = vmatpush1.msra.mxu0 0.0
    %2038 = vmatprep.subr.mxu0 0.0
    %2039 = vmatpush1.msra.mxu0 0.0
    %2040 = vmatprep.subr.mxu0 0.0
    %2041 = vmatpush1.msra.mxu0 0.0
    %2042 = vmatprep.subr.mxu0 0.0
    %2043 = vmatpush1.msra.mxu0 0.0
    %2044 = vmatprep.subr.mxu0 0.0
    %2045 = vmatpush1.msra.mxu0 0.0
    %2046 = vmatprep.subr.mxu0 0.0
    %2047 = vmatpush1.msra.mxu0 0.0
    %2048 = vmatprep.subr.mxu0 0.0
    %2049 = vmatpush1.msra.mxu0 0.0
    %2050 = vmatprep.subr.mxu0 0.0
    %2051 = vmatpush1.msra.mxu0 0.0
    %2052 = vmatprep.subr.mxu0 0.0
    %2053 = vmatpush1.msra.mxu0 0.0
    %2054 = vmatprep.subr.mxu0 0.0
    %2055 = vmatpush1.msra.mxu0 0.0
    %2056 = vmatprep.subr.mxu0 0.0
    %2057 = vmatpush1.msra.mxu0 0.0
    %2058 = vmatprep.subr.mxu0 0.0
    %2059 = vmatpush1.msra.mxu0 0.0
    %2060 = vmatprep.subr.mxu0 0.0
    %2061 = vmatpush1.msra.mxu0 0.0
    %2062 = vmatprep.subr.mxu0 0.0
    %2063 = vmatpush1.msra.mxu0 0.0
    %2064 = vmatprep.subr.mxu0 0.0
    %2065 = vmatpush1.msra.mxu0 0.0
    %2066 = vmatprep.subr.mxu0 0.0
    %2067 = vmatpush1.msra.mxu0 0.0
    %2068 = vmatprep.subr.mxu0 0.0
    %2069 = vmatpush1.msra.mxu0 0.0
    %2070 = vmatprep.mubr.f32.mxu0 0.0
    %2071 = vmatmul.mubr.f32.gmra.mrb[0].mxu0 %v2001
    %v2072 = vpop.f32.mrb[0].mxu0
    %v2073 = vadd.f32 0.0, %v2072
    %v2074 = vpop.f32.mrb[0].mxu0
    %2075 = vmatprep.mubr.f32.mxu0 0.0
    %2076 = vmatmul.mubr.f32.gmra.mrb[0].mxu0 %v2004
    %v2077 = vpop.f32.mrb[0].mxu0
    %v2078 = vadd.f32 0.0, %v2077
    %v2079 = vpop.f32.mrb[0].mxu0
    %2080 = vdwg.mxu0
    %v2081 = vadd.f32 %v1404, %v2073
    %v2082 = vadd.f32 %v1409, %v2078
    %s2083 = scalar_lea.vmem %s1, 96
    %v2084 = vld [vmem:[%s2083] sm:$0xff]
    %v2085 = vld [vmem:[%s2083 + $0x8] sm:$0xff]
    %v2086 = vld [vmem:[%s2083 + $0x10] sm:$0xff]
    %v2087 = vld [vmem:[%s2083 + $0x18] sm:$0xff]
    %s2088 = scalar_lea.vmem %s2, 96
    %v2089 = vld [vmem:[%s2088] sm:$0xff]
    %v2090 = vld [vmem:[%s2088 + $0x8] sm:$0xff]
    %v2091 = vld [vmem:[%s2088 + $0x10] sm:$0xff]
    %v2092 = vld [vmem:[%s2088 + $0x18] sm:$0xff]
    %s2093 = scalar_lea.vmem %s3, 96
    %v2094 = vld [vmem:[%s2093] sm:$0xff]
    %v2095 = vld [vmem:[%s2093 + $0x8] sm:$0xff]
    %v2096 = vld [vmem:[%s2093 + $0x10] sm:$0xff]
    %v2097 = vld [vmem:[%s2093 + $0x18] sm:$0xff]
    %s2098 = scalar_lea.vmem %s4, 3
    %v2099 = vld [vmem:[%s2098] sm:$0x1]
    %s2100 = scalar_lea.vmem %s5, 3
    %v2101 = vld [vmem:[%s2100] sm:$0x1]
    %s2102 = scalar_lea.vmem %s6, 3
    %v2103 = vld [vmem:[%s2102] sm:$0x1]
    %v2105 = vlaneseq
    %v2106 = vshrl.u32 %v2105, 7
    %v2107 = vsub.s32 0, %v2106
    %v2108 = vrot.slane %v2099, %v2107
    %2110 = vmatprep.subr.mxu0 0.0
    %2111 = vmatpush1.msra.mxu0 %v2084
    %2112 = vmatprep.subr.mxu0 0.0
    %2113 = vmatpush1.msra.mxu0 %v2085
    %2114 = vmatprep.subr.mxu0 0.0
    %2115 = vmatpush1.msra.mxu0 %v2086
    %2116 = vmatprep.subr.mxu0 0.0
    %2117 = vmatpush1.msra.mxu0 %v2087
    %2118 = vmatprep.subr.mxu0 0.0
    %2119 = vmatpush1.msra.mxu0 0.0
    %2120 = vmatprep.subr.mxu0 0.0
    %2121 = vmatpush1.msra.mxu0 0.0
    %2122 = vmatprep.subr.mxu0 0.0
    %2123 = vmatpush1.msra.mxu0 0.0
    %2124 = vmatprep.subr.mxu0 0.0
    %2125 = vmatpush1.msra.mxu0 0.0
    %2126 = vmatprep.subr.mxu0 0.0
    %2127 = vmatpush1.msra.mxu0 0.0
    %2128 = vmatprep.subr.mxu0 0.0
    %2129 = vmatpush1.msra.mxu0 0.0
    %2130 = vmatprep.subr.mxu0 0.0
    %2131 = vmatpush1.msra.mxu0 0.0
    %2132 = vmatprep.subr.mxu0 0.0
    %2133 = vmatpush1.msra.mxu0 0.0
    %2134 = vmatprep.subr.mxu0 0.0
    %2135 = vmatpush1.msra.mxu0 0.0
    %2136 = vmatprep.subr.mxu0 0.0
    %2137 = vmatpush1.msra.mxu0 0.0
    %2138 = vmatprep.subr.mxu0 0.0
    %2139 = vmatpush1.msra.mxu0 0.0
    %2140 = vmatprep.subr.mxu0 0.0
    %2141 = vmatpush1.msra.mxu0 0.0
    %2142 = vmatprep.subr.mxu0 0.0
    %2143 = vmatpush1.msra.mxu0 0.0
    %2144 = vmatprep.subr.mxu0 0.0
    %2145 = vmatpush1.msra.mxu0 0.0
    %2146 = vmatprep.subr.mxu0 0.0
    %2147 = vmatpush1.msra.mxu0 0.0
    %2148 = vmatprep.subr.mxu0 0.0
    %2149 = vmatpush1.msra.mxu0 0.0
    %2150 = vmatprep.subr.mxu0 0.0
    %2151 = vmatpush1.msra.mxu0 0.0
    %2152 = vmatprep.subr.mxu0 0.0
    %2153 = vmatpush1.msra.mxu0 0.0
    %2154 = vmatprep.subr.mxu0 0.0
    %2155 = vmatpush1.msra.mxu0 0.0
    %2156 = vmatprep.subr.mxu0 0.0
    %2157 = vmatpush1.msra.mxu0 0.0
    %2158 = vmatprep.subr.mxu0 0.0
    %2159 = vmatpush1.msra.mxu0 0.0
    %2160 = vmatprep.subr.mxu0 0.0
    %2161 = vmatpush1.msra.mxu0 0.0
    %2162 = vmatprep.subr.mxu0 0.0
    %2163 = vmatpush1.msra.mxu0 0.0
    %2164 = vmatprep.subr.mxu0 0.0
    %2165 = vmatpush1.msra.mxu0 0.0
    %2166 = vmatprep.subr.mxu0 0.0
    %2167 = vmatpush1.msra.mxu0 0.0
    %2168 = vmatprep.subr.mxu0 0.0
    %2169 = vmatpush1.msra.mxu0 0.0
    %2170 = vmatprep.subr.mxu0 0.0
    %2171 = vmatpush1.msra.mxu0 0.0
    %2172 = vmatprep.subr.mxu0 0.0
    %2173 = vmatpush1.msra.mxu0 0.0
    %2174 = vmatprep.mubr.f32.mxu0 0.0
    %2175 = vmatmul.mubr.f32.gmra.mrb[0].mxu0 %v96
    %v2176 = vpop.f32.mrb[0].mxu0
    %v2177 = vadd.f32 %v2108, %v2176
    %v2178 = vpop.f32.mrb[0].mxu0
    %2179 = vmatprep.mubr.f32.mxu0 0.0
    %2180 = vmatmul.mubr.f32.gmra.mrb[0].mxu0 %v99
    %v2181 = vpop.f32.mrb[0].mxu0
    %v2182 = vadd.f32 %v2108, %v2181
    %v2183 = vpop.f32.mrb[0].mxu0
    %2184 = vdwg.mxu0
    %v2186 = vlaneseq
    %v2187 = vshrl.u32 %v2186, 7
    %v2188 = vsub.s32 0, %v2187
    %v2189 = vrot.slane %v2101, %v2188
    %2191 = vmatprep.subr.mxu0 0.0
    %2192 = vmatpush1.msra.mxu0 %v2089
    %2193 = vmatprep.subr.mxu0 0.0
    %2194 = vmatpush1.msra.mxu0 %v2090
    %2195 = vmatprep.subr.mxu0 0.0
    %2196 = vmatpush1.msra.mxu0 %v2091
    %2197 = vmatprep.subr.mxu0 0.0
    %2198 = vmatpush1.msra.mxu0 %v2092
    %2199 = vmatprep.subr.mxu0 0.0
    %2200 = vmatpush1.msra.mxu0 0.0
    %2201 = vmatprep.subr.mxu0 0.0
    %2202 = vmatpush1.msra.mxu0 0.0
    %2203 = vmatprep.subr.mxu0 0.0
    %2204 = vmatpush1.msra.mxu0 0.0
    %2205 = vmatprep.subr.mxu0 0.0
    %2206 = vmatpush1.msra.mxu0 0.0
    %2207 = vmatprep.subr.mxu0 0.0
    %2208 = vmatpush1.msra.mxu0 0.0
    %2209 = vmatprep.subr.mxu0 0.0
    %2210 = vmatpush1.msra.mxu0 0.0
    %2211 = vmatprep.subr.mxu0 0.0
    %2212 = vmatpush1.msra.mxu0 0.0
    %2213 = vmatprep.subr.mxu0 0.0
    %2214 = vmatpush1.msra.mxu0 0.0
    %2215 = vmatprep.subr.mxu0 0.0
    %2216 = vmatpush1.msra.mxu0 0.0
    %2217 = vmatprep.subr.mxu0 0.0
    %2218 = vmatpush1.msra.mxu0 0.0
    %2219 = vmatprep.subr.mxu0 0.0
    %2220 = vmatpush1.msra.mxu0 0.0
    %2221 = vmatprep.subr.mxu0 0.0
    %2222 = vmatpush1.msra.mxu0 0.0
    %2223 = vmatprep.subr.mxu0 0.0
    %2224 = vmatpush1.msra.mxu0 0.0
    %2225 = vmatprep.subr.mxu0 0.0
    %2226 = vmatpush1.msra.mxu0 0.0
    %2227 = vmatprep.subr.mxu0 0.0
    %2228 = vmatpush1.msra.mxu0 0.0
    %2229 = vmatprep.subr.mxu0 0.0
    %2230 = vmatpush1.msra.mxu0 0.0
    %2231 = vmatprep.subr.mxu0 0.0
    %2232 = vmatpush1.msra.mxu0 0.0
    %2233 = vmatprep.subr.mxu0 0.0
    %2234 = vmatpush1.msra.mxu0 0.0
    %2235 = vmatprep.subr.mxu0 0.0
    %2236 = vmatpush1.msra.mxu0 0.0
    %2237 = vmatprep.subr.mxu0 0.0
    %2238 = vmatpush1.msra.mxu0 0.0
    %2239 = vmatprep.subr.mxu0 0.0
    %2240 = vmatpush1.msra.mxu0 0.0
    %2241 = vmatprep.subr.mxu0 0.0
    %2242 = vmatpush1.msra.mxu0 0.0
    %2243 = vmatprep.subr.mxu0 0.0
    %2244 = vmatpush1.msra.mxu0 0.0
    %2245 = vmatprep.subr.mxu0 0.0
    %2246 = vmatpush1.msra.mxu0 0.0
    %2247 = vmatprep.subr.mxu0 0.0
    %2248 = vmatpush1.msra.mxu0 0.0
    %2249 = vmatprep.subr.mxu0 0.0
    %2250 = vmatpush1.msra.mxu0 0.0
    %2251 = vmatprep.subr.mxu0 0.0
    %2252 = vmatpush1.msra.mxu0 0.0
    %2253 = vmatprep.subr.mxu0 0.0
    %2254 = vmatpush1.msra.mxu0 0.0
    %2255 = vmatprep.mubr.f32.mxu0 0.0
    %2256 = vmatmul.mubr.f32.gmra.mrb[0].mxu0 %v96
    %v2257 = vpop.f32.mrb[0].mxu0
    %v2258 = vadd.f32 %v2189, %v2257
    %v2259 = vpop.f32.mrb[0].mxu0
    %2260 = vmatprep.mubr.f32.mxu0 0.0
    %2261 = vmatmul.mubr.f32.gmra.mrb[0].mxu0 %v99
    %v2262 = vpop.f32.mrb[0].mxu0
    %v2263 = vadd.f32 %v2189, %v2262
    %v2264 = vpop.f32.mrb[0].mxu0
    %2265 = vdwg.mxu0
    %v2267 = vlaneseq
    %v2268 = vshrl.u32 %v2267, 7
    %v2269 = vsub.s32 0, %v2268
    %v2270 = vrot.slane %v2103, %v2269
    %2272 = vmatprep.subr.mxu0 0.0
    %2273 = vmatpush1.msra.mxu0 %v2094
    %2274 = vmatprep.subr.mxu0 0.0
    %2275 = vmatpush1.msra.mxu0 %v2095
    %2276 = vmatprep.subr.mxu0 0.0
    %2277 = vmatpush1.msra.mxu0 %v2096
    %2278 = vmatprep.subr.mxu0 0.0
    %2279 = vmatpush1.msra.mxu0 %v2097
    %2280 = vmatprep.subr.mxu0 0.0
    %2281 = vmatpush1.msra.mxu0 0.0
    %2282 = vmatprep.subr.mxu0 0.0
    %2283 = vmatpush1.msra.mxu0 0.0
    %2284 = vmatprep.subr.mxu0 0.0
    %2285 = vmatpush1.msra.mxu0 0.0
    %2286 = vmatprep.subr.mxu0 0.0
    %2287 = vmatpush1.msra.mxu0 0.0
    %2288 = vmatprep.subr.mxu0 0.0
    %2289 = vmatpush1.msra.mxu0 0.0
    %2290 = vmatprep.subr.mxu0 0.0
    %2291 = vmatpush1.msra.mxu0 0.0
    %2292 = vmatprep.subr.mxu0 0.0
    %2293 = vmatpush1.msra.mxu0 0.0
    %2294 = vmatprep.subr.mxu0 0.0
    %2295 = vmatpush1.msra.mxu0 0.0
    %2296 = vmatprep.subr.mxu0 0.0
    %2297 = vmatpush1.msra.mxu0 0.0
    %2298 = vmatprep.subr.mxu0 0.0
    %2299 = vmatpush1.msra.mxu0 0.0
    %2300 = vmatprep.subr.mxu0 0.0
    %2301 = vmatpush1.msra.mxu0 0.0
    %2302 = vmatprep.subr.mxu0 0.0
    %2303 = vmatpush1.msra.mxu0 0.0
    %2304 = vmatprep.subr.mxu0 0.0
    %2305 = vmatpush1.msra.mxu0 0.0
    %2306 = vmatprep.subr.mxu0 0.0
    %2307 = vmatpush1.msra.mxu0 0.0
    %2308 = vmatprep.subr.mxu0 0.0
    %2309 = vmatpush1.msra.mxu0 0.0
    %2310 = vmatprep.subr.mxu0 0.0
    %2311 = vmatpush1.msra.mxu0 0.0
    %2312 = vmatprep.subr.mxu0 0.0
    %2313 = vmatpush1.msra.mxu0 0.0
    %2314 = vmatprep.subr.mxu0 0.0
    %2315 = vmatpush1.msra.mxu0 0.0
    %2316 = vmatprep.subr.mxu0 0.0
    %2317 = vmatpush1.msra.mxu0 0.0
    %2318 = vmatprep.subr.mxu0 0.0
    %2319 = vmatpush1.msra.mxu0 0.0
    %2320 = vmatprep.subr.mxu0 0.0
    %2321 = vmatpush1.msra.mxu0 0.0
    %2322 = vmatprep.subr.mxu0 0.0
    %2323 = vmatpush1.msra.mxu0 0.0
    %2324 = vmatprep.subr.mxu0 0.0
    %2325 = vmatpush1.msra.mxu0 0.0
    %2326 = vmatprep.subr.mxu0 0.0
    %2327 = vmatpush1.msra.mxu0 0.0
    %2328 = vmatprep.subr.mxu0 0.0
    %2329 = vmatpush1.msra.mxu0 0.0
    %2330 = vmatprep.subr.mxu0 0.0
    %2331 = vmatpush1.msra.mxu0 0.0
    %2332 = vmatprep.subr.mxu0 0.0
    %2333 = vmatpush1.msra.mxu0 0.0
    %2334 = vmatprep.subr.mxu0 0.0
    %2335 = vmatpush1.msra.mxu0 0.0
    %2336 = vmatprep.mubr.f32.mxu0 0.0
    %2337 = vmatmul.mubr.f32.gmra.mrb[0].mxu0 %v96
    %v2338 = vpop.f32.mrb[0].mxu0
    %v2339 = vadd.f32 %v2270, %v2338
    %v2340 = vpop.f32.mrb[0].mxu0
    %2341 = vmatprep.mubr.f32.mxu0 0.0
    %2342 = vmatmul.mubr.f32.gmra.mrb[0].mxu0 %v99
    %v2343 = vpop.f32.mrb[0].mxu0
    %v2344 = vadd.f32 %v2270, %v2343
    %v2345 = vpop.f32.mrb[0].mxu0
    %2346 = vdwg.mxu0
    %v2348 = vsel %vm338, %v2177, 0
    %v2351 = vsel %vm338, %v2258, 0
    %2353 = vmatprep.subr.mxu0 0.0
    %2354 = vmatpush1.xpose.msra.mxu0 %v2351
    %2355 = vmatprep.subr.mxu0 0.0
    %2356 = vmatpush1.xpose.msra.mxu0 0.0
    %2357 = vmatprep.subr.mxu0 0.0
    %2358 = vmatpush1.xpose.msra.mxu0 0.0
    %2359 = vmatprep.subr.mxu0 0.0
    %2360 = vmatpush1.xpose.msra.mxu0 0.0
    %2361 = vmatprep.subr.mxu0 0.0
    %2362 = vmatpush1.xpose.msra.mxu0 0.0
    %2363 = vmatprep.subr.mxu0 0.0
    %2364 = vmatpush1.xpose.msra.mxu0 0.0
    %2365 = vmatprep.subr.mxu0 0.0
    %2366 = vmatpush1.xpose.msra.mxu0 0.0
    %2367 = vmatprep.subr.mxu0 0.0
    %2368 = vmatpush1.xpose.msra.mxu0 0.0
    %2369 = vmatprep.subr.mxu0 0.0
    %2370 = vmatpush1.xpose.msra.mxu0 0.0
    %2371 = vmatprep.subr.mxu0 0.0
    %2372 = vmatpush1.xpose.msra.mxu0 0.0
    %2373 = vmatprep.subr.mxu0 0.0
    %2374 = vmatpush1.xpose.msra.mxu0 0.0
    %2375 = vmatprep.subr.mxu0 0.0
    %2376 = vmatpush1.xpose.msra.mxu0 0.0
    %2377 = vmatprep.subr.mxu0 0.0
    %2378 = vmatpush1.xpose.msra.mxu0 0.0
    %2379 = vmatprep.subr.mxu0 0.0
    %2380 = vmatpush1.xpose.msra.mxu0 0.0
    %2381 = vmatprep.subr.mxu0 0.0
    %2382 = vmatpush1.xpose.msra.mxu0 0.0
    %2383 = vmatprep.subr.mxu0 0.0
    %2384 = vmatpush1.xpose.msra.mxu0 0.0
    %2385 = vmatprep.subr.mxu0 0.0
    %2386 = vmatpush1.xpose.msra.mxu0 0.0
    %2387 = vmatprep.subr.mxu0 0.0
    %2388 = vmatpush1.xpose.msra.mxu0 0.0
    %2389 = vmatprep.subr.mxu0 0.0
    %2390 = vmatpush1.xpose.msra.mxu0 0.0
    %2391 = vmatprep.subr.mxu0 0.0
    %2392 = vmatpush1.xpose.msra.mxu0 0.0
    %2393 = vmatprep.subr.mxu0 0.0
    %2394 = vmatpush1.xpose.msra.mxu0 0.0
    %2395 = vmatprep.subr.mxu0 0.0
    %2396 = vmatpush1.xpose.msra.mxu0 0.0
    %2397 = vmatprep.subr.mxu0 0.0
    %2398 = vmatpush1.xpose.msra.mxu0 0.0
    %2399 = vmatprep.subr.mxu0 0.0
    %2400 = vmatpush1.xpose.msra.mxu0 0.0
    %2401 = vmatprep.subr.mxu0 0.0
    %2402 = vmatpush1.xpose.msra.mxu0 0.0
    %2403 = vmatprep.subr.mxu0 0.0
    %2404 = vmatpush1.xpose.msra.mxu0 0.0
    %2405 = vmatprep.subr.mxu0 0.0
    %2406 = vmatpush1.xpose.msra.mxu0 0.0
    %2407 = vmatprep.subr.mxu0 0.0
    %2408 = vmatpush1.xpose.msra.mxu0 0.0
    %2409 = vmatprep.subr.mxu0 0.0
    %2410 = vmatpush1.xpose.msra.mxu0 0.0
    %2411 = vmatprep.subr.mxu0 0.0
    %2412 = vmatpush1.xpose.msra.mxu0 0.0
    %2413 = vmatprep.subr.mxu0 0.0
    %2414 = vmatpush1.xpose.msra.mxu0 0.0
    %2415 = vmatprep.subr.mxu0 0.0
    %2416 = vmatpush1.xpose.msra.mxu0 0.0
    %2417 = vmatprep.mubr.f32.mxu0 0.0
    %2418 = vmatmul.mubr.f32.gmra.mrb[0].mxu0 %v2348
    %v2419 = vpop.f32.mrb[0].mxu0
    %v2420 = vadd.f32 0.0, %v2419
    %v2421 = vpop.f32.mrb[0].mxu0
    %2422 = vdwg.mxu0
    %v2424 = vsel %vm338, %v2182, 0
    %v2427 = vsel %vm338, %v2263, 0
    %2429 = vmatprep.subr.mxu0 0.0
    %2430 = vmatpush1.xpose.msra.mxu0 %v2427
    %2431 = vmatprep.subr.mxu0 0.0
    %2432 = vmatpush1.xpose.msra.mxu0 0.0
    %2433 = vmatprep.subr.mxu0 0.0
    %2434 = vmatpush1.xpose.msra.mxu0 0.0
    %2435 = vmatprep.subr.mxu0 0.0
    %2436 = vmatpush1.xpose.msra.mxu0 0.0
    %2437 = vmatprep.subr.mxu0 0.0
    %2438 = vmatpush1.xpose.msra.mxu0 0.0
    %2439 = vmatprep.subr.mxu0 0.0
    %2440 = vmatpush1.xpose.msra.mxu0 0.0
    %2441 = vmatprep.subr.mxu0 0.0
    %2442 = vmatpush1.xpose.msra.mxu0 0.0
    %2443 = vmatprep.subr.mxu0 0.0
    %2444 = vmatpush1.xpose.msra.mxu0 0.0
    %2445 = vmatprep.subr.mxu0 0.0
    %2446 = vmatpush1.xpose.msra.mxu0 0.0
    %2447 = vmatprep.subr.mxu0 0.0
    %2448 = vmatpush1.xpose.msra.mxu0 0.0
    %2449 = vmatprep.subr.mxu0 0.0
    %2450 = vmatpush1.xpose.msra.mxu0 0.0
    %2451 = vmatprep.subr.mxu0 0.0
    %2452 = vmatpush1.xpose.msra.mxu0 0.0
    %2453 = vmatprep.subr.mxu0 0.0
    %2454 = vmatpush1.xpose.msra.mxu0 0.0
    %2455 = vmatprep.subr.mxu0 0.0
    %2456 = vmatpush1.xpose.msra.mxu0 0.0
    %2457 = vmatprep.subr.mxu0 0.0
    %2458 = vmatpush1.xpose.msra.mxu0 0.0
    %2459 = vmatprep.subr.mxu0 0.0
    %2460 = vmatpush1.xpose.msra.mxu0 0.0
    %2461 = vmatprep.subr.mxu0 0.0
    %2462 = vmatpush1.xpose.msra.mxu0 0.0
    %2463 = vmatprep.subr.mxu0 0.0
    %2464 = vmatpush1.xpose.msra.mxu0 0.0
    %2465 = vmatprep.subr.mxu0 0.0
    %2466 = vmatpush1.xpose.msra.mxu0 0.0
    %2467 = vmatprep.subr.mxu0 0.0
    %2468 = vmatpush1.xpose.msra.mxu0 0.0
    %2469 = vmatprep.subr.mxu0 0.0
    %2470 = vmatpush1.xpose.msra.mxu0 0.0
    %2471 = vmatprep.subr.mxu0 0.0
    %2472 = vmatpush1.xpose.msra.mxu0 0.0
    %2473 = vmatprep.subr.mxu0 0.0
    %2474 = vmatpush1.xpose.msra.mxu0 0.0
    %2475 = vmatprep.subr.mxu0 0.0
    %2476 = vmatpush1.xpose.msra.mxu0 0.0
    %2477 = vmatprep.subr.mxu0 0.0
    %2478 = vmatpush1.xpose.msra.mxu0 0.0
    %2479 = vmatprep.subr.mxu0 0.0
    %2480 = vmatpush1.xpose.msra.mxu0 0.0
    %2481 = vmatprep.subr.mxu0 0.0
    %2482 = vmatpush1.xpose.msra.mxu0 0.0
    %2483 = vmatprep.subr.mxu0 0.0
    %2484 = vmatpush1.xpose.msra.mxu0 0.0
    %2485 = vmatprep.subr.mxu0 0.0
    %2486 = vmatpush1.xpose.msra.mxu0 0.0
    %2487 = vmatprep.subr.mxu0 0.0
    %2488 = vmatpush1.xpose.msra.mxu0 0.0
    %2489 = vmatprep.subr.mxu0 0.0
    %2490 = vmatpush1.xpose.msra.mxu0 0.0
    %2491 = vmatprep.subr.mxu0 0.0
    %2492 = vmatpush1.xpose.msra.mxu0 0.0
    %2493 = vmatprep.mubr.f32.mxu0 0.0
    %2494 = vmatmul.mubr.f32.gmra.mrb[0].mxu0 %v2424
    %v2495 = vpop.f32.mrb[0].mxu0
    %v2496 = vadd.f32 0.0, %v2495
    %v2497 = vpop.f32.mrb[0].mxu0
    %2498 = vdwg.mxu0
    %v2499 = vmul.f32 %v2420, 0.35355338
    %v2500 = vmul.f32 %v2496, 0.35355338
    %v2501 = vsel %vm338, %v2499, -inf
    %2502 = vmax.xlane.f32.xlu0 %v2501
    %v2503 = vpop.xlane.xlu0 %2502
    %v2504 = vsel %vm338, %v2500, -inf
    %2505 = vmax.xlane.f32.xlu0 %v2504
    %v2506 = vpop.xlane.xlu0 %2505
    %v2507 = vsub.f32 %v2499, %v2503
    %v2508 = vsub.f32 %v2500, %v2506
    %v2509 = vmul.f32 %v2507, 1.442695
    %v2510 = vpow.pop %v2509
    %v2511 = vmul.f32 %v2508, 1.442695
    %v2512 = vpow.pop %v2511
    %v2513 = vsel %vm338, %v2510, 0.0
    %2514 = vadd.xlane.f32.xlu0 %v2513
    %v2515 = vpop.xlane.xlu0 %2514
    %v2516 = vsel %vm338, %v2512, 0.0
    %2517 = vadd.xlane.f32.xlu0 %v2516
    %v2518 = vpop.xlane.xlu0 %2517
    %v2519 = vrcp.pop %v2515
    %v2520 = vrcp.pop %v2518
    %v2521 = vmul.f32 %v2510, %v2519
    %v2522 = vmul.f32 %v2512, %v2520
    %v2524 = vsel %vm338, %v2521, 0
    %2526 = vmatprep.subr.mxu0 0.0
    %2527 = vmatpush1.msra.mxu0 %v2339
    %2528 = vmatprep.subr.mxu0 0.0
    %2529 = vmatpush1.msra.mxu0 0.0
    %2530 = vmatprep.subr.mxu0 0.0
    %2531 = vmatpush1.msra.mxu0 0.0
    %2532 = vmatprep.subr.mxu0 0.0
    %2533 = vmatpush1.msra.mxu0 0.0
    %2534 = vmatprep.subr.mxu0 0.0
    %2535 = vmatpush1.msra.mxu0 0.0
    %2536 = vmatprep.subr.mxu0 0.0
    %2537 = vmatpush1.msra.mxu0 0.0
    %2538 = vmatprep.subr.mxu0 0.0
    %2539 = vmatpush1.msra.mxu0 0.0
    %2540 = vmatprep.subr.mxu0 0.0
    %2541 = vmatpush1.msra.mxu0 0.0
    %2542 = vmatprep.subr.mxu0 0.0
    %2543 = vmatpush1.msra.mxu0 0.0
    %2544 = vmatprep.subr.mxu0 0.0
    %2545 = vmatpush1.msra.mxu0 0.0
    %2546 = vmatprep.subr.mxu0 0.0
    %2547 = vmatpush1.msra.mxu0 0.0
    %2548 = vmatprep.subr.mxu0 0.0
    %2549 = vmatpush1.msra.mxu0 0.0
    %2550 = vmatprep.subr.mxu0 0.0
    %2551 = vmatpush1.msra.mxu0 0.0
    %2552 = vmatprep.subr.mxu0 0.0
    %2553 = vmatpush1.msra.mxu0 0.0
    %2554 = vmatprep.subr.mxu0 0.0
    %2555 = vmatpush1.msra.mxu0 0.0
    %2556 = vmatprep.subr.mxu0 0.0
    %2557 = vmatpush1.msra.mxu0 0.0
    %2558 = vmatprep.subr.mxu0 0.0
    %2559 = vmatpush1.msra.mxu0 0.0
    %2560 = vmatprep.subr.mxu0 0.0
    %2561 = vmatpush1.msra.mxu0 0.0
    %2562 = vmatprep.subr.mxu0 0.0
    %2563 = vmatpush1.msra.mxu0 0.0
    %2564 = vmatprep.subr.mxu0 0.0
    %2565 = vmatpush1.msra.mxu0 0.0
    %2566 = vmatprep.subr.mxu0 0.0
    %2567 = vmatpush1.msra.mxu0 0.0
    %2568 = vmatprep.subr.mxu0 0.0
    %2569 = vmatpush1.msra.mxu0 0.0
    %2570 = vmatprep.subr.mxu0 0.0
    %2571 = vmatpush1.msra.mxu0 0.0
    %2572 = vmatprep.subr.mxu0 0.0
    %2573 = vmatpush1.msra.mxu0 0.0
    %2574 = vmatprep.subr.mxu0 0.0
    %2575 = vmatpush1.msra.mxu0 0.0
    %2576 = vmatprep.subr.mxu0 0.0
    %2577 = vmatpush1.msra.mxu0 0.0
    %2578 = vmatprep.subr.mxu0 0.0
    %2579 = vmatpush1.msra.mxu0 0.0
    %2580 = vmatprep.subr.mxu0 0.0
    %2581 = vmatpush1.msra.mxu0 0.0
    %2582 = vmatprep.subr.mxu0 0.0
    %2583 = vmatpush1.msra.mxu0 0.0
    %2584 = vmatprep.subr.mxu0 0.0
    %2585 = vmatpush1.msra.mxu0 0.0
    %2586 = vmatprep.subr.mxu0 0.0
    %2587 = vmatpush1.msra.mxu0 0.0
    %2588 = vmatprep.subr.mxu0 0.0
    %2589 = vmatpush1.msra.mxu0 0.0
    %2590 = vmatprep.mubr.f32.mxu0 0.0
    %2591 = vmatmul.mubr.f32.gmra.mrb[0].mxu0 %v2524
    %v2592 = vpop.f32.mrb[0].mxu0
    %v2593 = vadd.f32 0.0, %v2592
    %v2594 = vpop.f32.mrb[0].mxu0
    %2595 = vdwg.mxu0
    %v2597 = vsel %vm338, %v2522, 0
    %2599 = vmatprep.subr.mxu0 0.0
    %2600 = vmatpush1.msra.mxu0 %v2344
    %2601 = vmatprep.subr.mxu0 0.0
    %2602 = vmatpush1.msra.mxu0 0.0
    %2603 = vmatprep.subr.mxu0 0.0
    %2604 = vmatpush1.msra.mxu0 0.0
    %2605 = vmatprep.subr.mxu0 0.0
    %2606 = vmatpush1.msra.mxu0 0.0
    %2607 = vmatprep.subr.mxu0 0.0
    %2608 = vmatpush1.msra.mxu0 0.0
    %2609 = vmatprep.subr.mxu0 0.0
    %2610 = vmatpush1.msra.mxu0 0.0
    %2611 = vmatprep.subr.mxu0 0.0
    %2612 = vmatpush1.msra.mxu0 0.0
    %2613 = vmatprep.subr.mxu0 0.0
    %2614 = vmatpush1.msra.mxu0 0.0
    %2615 = vmatprep.subr.mxu0 0.0
    %2616 = vmatpush1.msra.mxu0 0.0
    %2617 = vmatprep.subr.mxu0 0.0
    %2618 = vmatpush1.msra.mxu0 0.0
    %2619 = vmatprep.subr.mxu0 0.0
    %2620 = vmatpush1.msra.mxu0 0.0
    %2621 = vmatprep.subr.mxu0 0.0
    %2622 = vmatpush1.msra.mxu0 0.0
    %2623 = vmatprep.subr.mxu0 0.0
    %2624 = vmatpush1.msra.mxu0 0.0
    %2625 = vmatprep.subr.mxu0 0.0
    %2626 = vmatpush1.msra.mxu0 0.0
    %2627 = vmatprep.subr.mxu0 0.0
    %2628 = vmatpush1.msra.mxu0 0.0
    %2629 = vmatprep.subr.mxu0 0.0
    %2630 = vmatpush1.msra.mxu0 0.0
    %2631 = vmatprep.subr.mxu0 0.0
    %2632 = vmatpush1.msra.mxu0 0.0
    %2633 = vmatprep.subr.mxu0 0.0
    %2634 = vmatpush1.msra.mxu0 0.0
    %2635 = vmatprep.subr.mxu0 0.0
    %2636 = vmatpush1.msra.mxu0 0.0
    %2637 = vmatprep.subr.mxu0 0.0
    %2638 = vmatpush1.msra.mxu0 0.0
    %2639 = vmatprep.subr.mxu0 0.0
    %2640 = vmatpush1.msra.mxu0 0.0
    %2641 = vmatprep.subr.mxu0 0.0
    %2642 = vmatpush1.msra.mxu0 0.0
    %2643 = vmatprep.subr.mxu0 0.0
    %2644 = vmatpush1.msra.mxu0 0.0
    %2645 = vmatprep.subr.mxu0 0.0
    %2646 = vmatpush1.msra.mxu0 0.0
    %2647 = vmatprep.subr.mxu0 0.0
    %2648 = vmatpush1.msra.mxu0 0.0
    %2649 = vmatprep.subr.mxu0 0.0
    %2650 = vmatpush1.msra.mxu0 0.0
    %2651 = vmatprep.subr.mxu0 0.0
    %2652 = vmatpush1.msra.mxu0 0.0
    %2653 = vmatprep.subr.mxu0 0.0
    %2654 = vmatpush1.msra.mxu0 0.0
    %2655 = vmatprep.subr.mxu0 0.0
    %2656 = vmatpush1.msra.mxu0 0.0
    %2657 = vmatprep.subr.mxu0 0.0
    %2658 = vmatpush1.msra.mxu0 0.0
    %2659 = vmatprep.subr.mxu0 0.0
    %2660 = vmatpush1.msra.mxu0 0.0
    %2661 = vmatprep.subr.mxu0 0.0
    %2662 = vmatpush1.msra.mxu0 0.0
    %2663 = vmatprep.mubr.f32.mxu0 0.0
    %2664 = vmatmul.mubr.f32.gmra.mrb[0].mxu0 %v2597
    %v2665 = vpop.f32.mrb[0].mxu0
    %v2666 = vadd.f32 0.0, %v2665
    %v2667 = vpop.f32.mrb[0].mxu0
    %2668 = vdwg.mxu0
    %s2669 = scalar_lea.vmem %s7, 24
    %v2670 = vld [vmem:[%s2669] sm:$0xff]
    %v2672 = vsel %vm338, %v2593, 0
    %v2675 = vsel %vm338, %v2666, 0
    %2677 = vmatprep.subr.mxu0 0.0
    %2678 = vmatpush1.msra.mxu0 %v2670
    %2679 = vmatprep.subr.mxu0 0.0
    %2680 = vmatpush1.msra.mxu0 0.0
    %2681 = vmatprep.subr.mxu0 0.0
    %2682 = vmatpush1.msra.mxu0 0.0
    %2683 = vmatprep.subr.mxu0 0.0
    %2684 = vmatpush1.msra.mxu0 0.0
    %2685 = vmatprep.subr.mxu0 0.0
    %2686 = vmatpush1.msra.mxu0 0.0
    %2687 = vmatprep.subr.mxu0 0.0
    %2688 = vmatpush1.msra.mxu0 0.0
    %2689 = vmatprep.subr.mxu0 0.0
    %2690 = vmatpush1.msra.mxu0 0.0
    %2691 = vmatprep.subr.mxu0 0.0
    %2692 = vmatpush1.msra.mxu0 0.0
    %2693 = vmatprep.subr.mxu0 0.0
    %2694 = vmatpush1.msra.mxu0 0.0
    %2695 = vmatprep.subr.mxu0 0.0
    %2696 = vmatpush1.msra.mxu0 0.0
    %2697 = vmatprep.subr.mxu0 0.0
    %2698 = vmatpush1.msra.mxu0 0.0
    %2699 = vmatprep.subr.mxu0 0.0
    %2700 = vmatpush1.msra.mxu0 0.0
    %2701 = vmatprep.subr.mxu0 0.0
    %2702 = vmatpush1.msra.mxu0 0.0
    %2703 = vmatprep.subr.mxu0 0.0
    %2704 = vmatpush1.msra.mxu0 0.0
    %2705 = vmatprep.subr.mxu0 0.0
    %2706 = vmatpush1.msra.mxu0 0.0
    %2707 = vmatprep.subr.mxu0 0.0
    %2708 = vmatpush1.msra.mxu0 0.0
    %2709 = vmatprep.subr.mxu0 0.0
    %2710 = vmatpush1.msra.mxu0 0.0
    %2711 = vmatprep.subr.mxu0 0.0
    %2712 = vmatpush1.msra.mxu0 0.0
    %2713 = vmatprep.subr.mxu0 0.0
    %2714 = vmatpush1.msra.mxu0 0.0
    %2715 = vmatprep.subr.mxu0 0.0
    %2716 = vmatpush1.msra.mxu0 0.0
    %2717 = vmatprep.subr.mxu0 0.0
    %2718 = vmatpush1.msra.mxu0 0.0
    %2719 = vmatprep.subr.mxu0 0.0
    %2720 = vmatpush1.msra.mxu0 0.0
    %2721 = vmatprep.subr.mxu0 0.0
    %2722 = vmatpush1.msra.mxu0 0.0
    %2723 = vmatprep.subr.mxu0 0.0
    %2724 = vmatpush1.msra.mxu0 0.0
    %2725 = vmatprep.subr.mxu0 0.0
    %2726 = vmatpush1.msra.mxu0 0.0
    %2727 = vmatprep.subr.mxu0 0.0
    %2728 = vmatpush1.msra.mxu0 0.0
    %2729 = vmatprep.subr.mxu0 0.0
    %2730 = vmatpush1.msra.mxu0 0.0
    %2731 = vmatprep.subr.mxu0 0.0
    %2732 = vmatpush1.msra.mxu0 0.0
    %2733 = vmatprep.subr.mxu0 0.0
    %2734 = vmatpush1.msra.mxu0 0.0
    %2735 = vmatprep.subr.mxu0 0.0
    %2736 = vmatpush1.msra.mxu0 0.0
    %2737 = vmatprep.subr.mxu0 0.0
    %2738 = vmatpush1.msra.mxu0 0.0
    %2739 = vmatprep.subr.mxu0 0.0
    %2740 = vmatpush1.msra.mxu0 0.0
    %2741 = vmatprep.mubr.f32.mxu0 0.0
    %2742 = vmatmul.mubr.f32.gmra.mrb[0].mxu0 %v2672
    %v2743 = vpop.f32.mrb[0].mxu0
    %v2744 = vadd.f32 0.0, %v2743
    %v2745 = vpop.f32.mrb[0].mxu0
    %2746 = vmatprep.mubr.f32.mxu0 0.0
    %2747 = vmatmul.mubr.f32.gmra.mrb[0].mxu0 %v2675
    %v2748 = vpop.f32.mrb[0].mxu0
    %v2749 = vadd.f32 0.0, %v2748
    %v2750 = vpop.f32.mrb[0].mxu0
    %2751 = vdwg.mxu0
    %v2752 = vadd.f32 %v2081, %v2744
    %v2753 = vadd.f32 %v2082, %v2749
    %v2754 = vld [vmem:[%s8] sm:$0x1]
    %v2756 = vlaneseq
    %v2757 = vshrl.u32 %v2756, 7
    %v2758 = vsub.s32 0, %v2757
    %v2759 = vrot.slane %v2754, %v2758
    %v2761 = vadd.f32 %v2752, %v2759
    %v2762 = vadd.f32 %v2753, %v2759
    %v2763 = vadd.f32 %v71, %v2761
    %v2764 = vadd.f32 %v72, %v2762
    %v2765 = vld [vmem:[%s9] sm:$0x1]
    %v2766 = vld [vmem:[%s10] sm:$0x1]
    %v2767 = vsel %vm94, %v2763, 0.0
    %2768 = vadd.xlane.f32.xlu0 %v2767
    %v2769 = vpop.xlane.xlu0 %2768
    %v2770 = vsel %vm94, %v2764, 0.0
    %2771 = vadd.xlane.f32.xlu0 %v2770
    %v2772 = vpop.xlane.xlu0 %2771
    %v2773 = vrcp.pop 32.0
    %v2774 = vmul.f32 %v2769, %v2773
    %v2775 = vmul.f32 %v2772, %v2773
    %v2776 = vsub.f32 %v2763, %v2774
    %v2777 = vsub.f32 %v2764, %v2775
    %v2778 = vmul.f32 %v2776, %v2776
    %v2779 = vmul.f32 %v2777, %v2777
    %v2780 = vsel %vm94, %v2778, 0.0
    %2781 = vadd.xlane.f32.xlu0 %v2780
    %v2782 = vpop.xlane.xlu0 %2781
    %v2783 = vsel %vm94, %v2779, 0.0
    %2784 = vadd.xlane.f32.xlu0 %v2783
    %v2785 = vpop.xlane.xlu0 %2784
    %v2786 = vmul.f32 %v2782, %v2773
    %v2787 = vmul.f32 %v2785, %v2773
    %v2788 = vadd.f32 %v2786, 1e-05
    %v2789 = vadd.f32 %v2787, 1e-05
    %v2790 = vrsqrt.pop %v2788
    %v2791 = vrsqrt.pop %v2789
    %v2792 = vmul.f32 %v2776, %v2790
    %v2793 = vmul.f32 %v2777, %v2791
    %v2795 = vlaneseq
    %v2796 = vshrl.u32 %v2795, 7
    %v2797 = vsub.s32 0, %v2796
    %v2798 = vrot.slane %v2765, %v2797
    %v2800 = vmul.f32 %v2792, %v2798
    %v2801 = vmul.f32 %v2793, %v2798
    %v2803 = vlaneseq
    %v2804 = vshrl.u32 %v2803, 7
    %v2805 = vsub.s32 0, %v2804
    %v2806 = vrot.slane %v2766, %v2805
    %v2808 = vadd.f32 %v2800, %v2806
    %v2809 = vadd.f32 %v2801, %v2806
    %v2810 = vld [vmem:[%s11] sm:$0xff]
    %v2811 = vld [vmem:[%s11 + $0x8] sm:$0xff]
    %v2812 = vld [vmem:[%s11 + $0x10] sm:$0xff]
    %v2813 = vld [vmem:[%s11 + $0x18] sm:$0xff]
    %v2814 = vld [vmem:[%s12] sm:$0x1]
    %v2816 = vlaneseq
    %v2817 = vshrl.u32 %v2816, 7
    %v2818 = vsub.s32 0, %v2817
    %v2819 = vrot.slane %v2814, %v2818
    %v2822 = vsel %vm94, %v2808, 0
    %v2825 = vsel %vm94, %v2809, 0
    %2827 = vmatprep.subr.mxu0 0.0
    %2828 = vmatpush1.msra.mxu0 %v2810
    %2829 = vmatprep.subr.mxu0 0.0
    %2830 = vmatpush1.msra.mxu0 %v2811
    %2831 = vmatprep.subr.mxu0 0.0
    %2832 = vmatpush1.msra.mxu0 %v2812
    %2833 = vmatprep.subr.mxu0 0.0
    %2834 = vmatpush1.msra.mxu0 %v2813
    %2835 = vmatprep.subr.mxu0 0.0
    %2836 = vmatpush1.msra.mxu0 0.0
    %2837 = vmatprep.subr.mxu0 0.0
    %2838 = vmatpush1.msra.mxu0 0.0
    %2839 = vmatprep.subr.mxu0 0.0
    %2840 = vmatpush1.msra.mxu0 0.0
    %2841 = vmatprep.subr.mxu0 0.0
    %2842 = vmatpush1.msra.mxu0 0.0
    %2843 = vmatprep.subr.mxu0 0.0
    %2844 = vmatpush1.msra.mxu0 0.0
    %2845 = vmatprep.subr.mxu0 0.0
    %2846 = vmatpush1.msra.mxu0 0.0
    %2847 = vmatprep.subr.mxu0 0.0
    %2848 = vmatpush1.msra.mxu0 0.0
    %2849 = vmatprep.subr.mxu0 0.0
    %2850 = vmatpush1.msra.mxu0 0.0
    %2851 = vmatprep.subr.mxu0 0.0
    %2852 = vmatpush1.msra.mxu0 0.0
    %2853 = vmatprep.subr.mxu0 0.0
    %2854 = vmatpush1.msra.mxu0 0.0
    %2855 = vmatprep.subr.mxu0 0.0
    %2856 = vmatpush1.msra.mxu0 0.0
    %2857 = vmatprep.subr.mxu0 0.0
    %2858 = vmatpush1.msra.mxu0 0.0
    %2859 = vmatprep.subr.mxu0 0.0
    %2860 = vmatpush1.msra.mxu0 0.0
    %2861 = vmatprep.subr.mxu0 0.0
    %2862 = vmatpush1.msra.mxu0 0.0
    %2863 = vmatprep.subr.mxu0 0.0
    %2864 = vmatpush1.msra.mxu0 0.0
    %2865 = vmatprep.subr.mxu0 0.0
    %2866 = vmatpush1.msra.mxu0 0.0
    %2867 = vmatprep.subr.mxu0 0.0
    %2868 = vmatpush1.msra.mxu0 0.0
    %2869 = vmatprep.subr.mxu0 0.0
    %2870 = vmatpush1.msra.mxu0 0.0
    %2871 = vmatprep.subr.mxu0 0.0
    %2872 = vmatpush1.msra.mxu0 0.0
    %2873 = vmatprep.subr.mxu0 0.0
    %2874 = vmatpush1.msra.mxu0 0.0
    %2875 = vmatprep.subr.mxu0 0.0
    %2876 = vmatpush1.msra.mxu0 0.0
    %2877 = vmatprep.subr.mxu0 0.0
    %2878 = vmatpush1.msra.mxu0 0.0
    %2879 = vmatprep.subr.mxu0 0.0
    %2880 = vmatpush1.msra.mxu0 0.0
    %2881 = vmatprep.subr.mxu0 0.0
    %2882 = vmatpush1.msra.mxu0 0.0
    %2883 = vmatprep.subr.mxu0 0.0
    %2884 = vmatpush1.msra.mxu0 0.0
    %2885 = vmatprep.subr.mxu0 0.0
    %2886 = vmatpush1.msra.mxu0 0.0
    %2887 = vmatprep.subr.mxu0 0.0
    %2888 = vmatpush1.msra.mxu0 0.0
    %2889 = vmatprep.subr.mxu0 0.0
    %2890 = vmatpush1.msra.mxu0 0.0
    %2891 = vmatprep.mubr.f32.mxu0 0.0
    %2892 = vmatmul.mubr.f32.gmra.mrb[0].mxu0 %v2822
    %v2893 = vpop.f32.mrb[0].mxu0
    %v2894 = vadd.f32 %v2819, %v2893
    %v2895 = vpop.f32.mrb[0].mxu0
    %2896 = vmatprep.mubr.f32.mxu0 0.0
    %2897 = vmatmul.mubr.f32.gmra.mrb[0].mxu0 %v2825
    %v2898 = vpop.f32.mrb[0].mxu0
    %v2899 = vadd.f32 %v2819, %v2898
    %v2900 = vpop.f32.mrb[0].mxu0
    %2901 = vdwg.mxu0
    %v2902 = vmax.f32 %v2894, 0.0
    %v2903 = vmax.f32 %v2899, 0.0
    %v2904 = vld [vmem:[%s13] sm:$0xff]
    %v2905 = vld [vmem:[%s13 + $0x8] sm:$0xff]
    %v2906 = vld [vmem:[%s13 + $0x10] sm:$0xff]
    %v2907 = vld [vmem:[%s13 + $0x18] sm:$0xff]
    %v2908 = vld [vmem:[%s13 + $0x20] sm:$0xff]
    %v2909 = vld [vmem:[%s13 + $0x28] sm:$0xff]
    %v2910 = vld [vmem:[%s13 + $0x30] sm:$0xff]
    %v2911 = vld [vmem:[%s13 + $0x38] sm:$0xff]
    %v2912 = vld [vmem:[%s14] sm:$0x1]
    %v2914 = vlaneseq
    %v2915 = vshrl.u32 %v2914, 7
    %v2916 = vsub.s32 0, %v2915
    %v2917 = vrot.slane %v2912, %v2916
    %vm2919 = vcmask 523264
    %v2921 = vsel %vm2919, %v2902, 0
    %v2924 = vsel %vm2919, %v2903, 0
    %2926 = vmatprep.subr.mxu0 0.0
    %2927 = vmatpush1.msra.mxu0 %v2904
    %2928 = vmatprep.subr.mxu0 0.0
    %2929 = vmatpush1.msra.mxu0 %v2905
    %2930 = vmatprep.subr.mxu0 0.0
    %2931 = vmatpush1.msra.mxu0 %v2906
    %2932 = vmatprep.subr.mxu0 0.0
    %2933 = vmatpush1.msra.mxu0 %v2907
    %2934 = vmatprep.subr.mxu0 0.0
    %2935 = vmatpush1.msra.mxu0 %v2908
    %2936 = vmatprep.subr.mxu0 0.0
    %2937 = vmatpush1.msra.mxu0 %v2909
    %2938 = vmatprep.subr.mxu0 0.0
    %2939 = vmatpush1.msra.mxu0 %v2910
    %2940 = vmatprep.subr.mxu0 0.0
    %2941 = vmatpush1.msra.mxu0 %v2911
    %2942 = vmatprep.subr.mxu0 0.0
    %2943 = vmatpush1.msra.mxu0 0.0
    %2944 = vmatprep.subr.mxu0 0.0
    %2945 = vmatpush1.msra.mxu0 0.0
    %2946 = vmatprep.subr.mxu0 0.0
    %2947 = vmatpush1.msra.mxu0 0.0
    %2948 = vmatprep.subr.mxu0 0.0
    %2949 = vmatpush1.msra.mxu0 0.0
    %2950 = vmatprep.subr.mxu0 0.0
    %2951 = vmatpush1.msra.mxu0 0.0
    %2952 = vmatprep.subr.mxu0 0.0
    %2953 = vmatpush1.msra.mxu0 0.0
    %2954 = vmatprep.subr.mxu0 0.0
    %2955 = vmatpush1.msra.mxu0 0.0
    %2956 = vmatprep.subr.mxu0 0.0
    %2957 = vmatpush1.msra.mxu0 0.0
    %2958 = vmatprep.subr.mxu0 0.0
    %2959 = vmatpush1.msra.mxu0 0.0
    %2960 = vmatprep.subr.mxu0 0.0
    %2961 = vmatpush1.msra.mxu0 0.0
    %2962 = vmatprep.subr.mxu0 0.0
    %2963 = vmatpush1.msra.mxu0 0.0
    %2964 = vmatprep.subr.mxu0 0.0
    %2965 = vmatpush1.msra.mxu0 0.0
    %2966 = vmatprep.subr.mxu0 0.0
    %2967 = vmatpush1.msra.mxu0 0.0
    %2968 = vmatprep.subr.mxu0 0.0
    %2969 = vmatpush1.msra.mxu0 0.0
    %2970 = vmatprep.subr.mxu0 0.0
    %2971 = vmatpush1.msra.mxu0 0.0
    %2972 = vmatprep.subr.mxu0 0.0
    %2973 = vmatpush1.msra.mxu0 0.0
    %2974 = vmatprep.subr.mxu0 0.0
    %2975 = vmatpush1.msra.mxu0 0.0
    %2976 = vmatprep.subr.mxu0 0.0
    %2977 = vmatpush1.msra.mxu0 0.0
    %2978 = vmatprep.subr.mxu0 0.0
    %2979 = vmatpush1.msra.mxu0 0.0
    %2980 = vmatprep.subr.mxu0 0.0
    %2981 = vmatpush1.msra.mxu0 0.0
    %2982 = vmatprep.subr.mxu0 0.0
    %2983 = vmatpush1.msra.mxu0 0.0
    %2984 = vmatprep.subr.mxu0 0.0
    %2985 = vmatpush1.msra.mxu0 0.0
    %2986 = vmatprep.subr.mxu0 0.0
    %2987 = vmatpush1.msra.mxu0 0.0
    %2988 = vmatprep.subr.mxu0 0.0
    %2989 = vmatpush1.msra.mxu0 0.0
    %2990 = vmatprep.mubr.f32.mxu0 0.0
    %2991 = vmatmul.mubr.f32.gmra.mrb[0].mxu0 %v2921
    %v2992 = vpop.f32.mrb[0].mxu0
    %v2993 = vadd.f32 %v2917, %v2992
    %v2994 = vpop.f32.mrb[0].mxu0
    %2995 = vmatprep.mubr.f32.mxu0 0.0
    %2996 = vmatmul.mubr.f32.gmra.mrb[0].mxu0 %v2924
    %v2997 = vpop.f32.mrb[0].mxu0
    %v2998 = vadd.f32 %v2917, %v2997
    %v2999 = vpop.f32.mrb[0].mxu0
    %3000 = vdwg.mxu0
    %v3001 = vadd.f32 %v2808, %v2993
    %v3002 = vadd.f32 %v2809, %v2998
    %v3003 = vld [vmem:[%s15] sm:$0x1]
    %v3004 = vld [vmem:[%s16] sm:$0x1]
    %v3005 = vsel %vm94, %v3001, 0.0
    %3006 = vadd.xlane.f32.xlu0 %v3005
    %v3007 = vpop.xlane.xlu0 %3006
    %v3008 = vsel %vm94, %v3002, 0.0
    %3009 = vadd.xlane.f32.xlu0 %v3008
    %v3010 = vpop.xlane.xlu0 %3009
    %v3011 = vmul.f32 %v3007, %v2773
    %v3012 = vmul.f32 %v3010, %v2773
    %v3013 = vsub.f32 %v3001, %v3011
    %v3014 = vsub.f32 %v3002, %v3012
    %v3015 = vmul.f32 %v3013, %v3013
    %v3016 = vmul.f32 %v3014, %v3014
    %v3017 = vsel %vm94, %v3015, 0.0
    %3018 = vadd.xlane.f32.xlu0 %v3017
    %v3019 = vpop.xlane.xlu0 %3018
    %v3020 = vsel %vm94, %v3016, 0.0
    %3021 = vadd.xlane.f32.xlu0 %v3020
    %v3022 = vpop.xlane.xlu0 %3021
    %v3023 = vmul.f32 %v3019, %v2773
    %v3024 = vmul.f32 %v3022, %v2773
    %v3025 = vadd.f32 %v3023, 1e-05
    %v3026 = vadd.f32 %v3024, 1e-05
    %v3027 = vrsqrt.pop %v3025
    %v3028 = vrsqrt.pop %v3026
    %v3029 = vmul.f32 %v3013, %v3027
    %v3030 = vmul.f32 %v3014, %v3028
    %v3032 = vlaneseq
    %v3033 = vshrl.u32 %v3032, 7
    %v3034 = vsub.s32 0, %v3033
    %v3035 = vrot.slane %v3003, %v3034
    %v3037 = vmul.f32 %v3029, %v3035
    %v3038 = vmul.f32 %v3030, %v3035
    %v3040 = vlaneseq
    %v3041 = vshrl.u32 %v3040, 7
    %v3042 = vsub.s32 0, %v3041
    %v3043 = vrot.slane %v3004, %v3042
    %v3045 = vadd.f32 %v3037, %v3043
    %v3046 = vadd.f32 %v3038, %v3043
    %v3047 = vld [vmem:[%s17] sm:$0xff]
    %v3048 = vld [vmem:[%s17 + $0x8] sm:$0xff]
    %v3049 = vld [vmem:[%s17 + $0x10] sm:$0xff]
    %v3050 = vld [vmem:[%s17 + $0x18] sm:$0xff]
    %v3051 = vld [vmem:[%s18] sm:$0x1]
    %v3053 = vlaneseq
    %v3054 = vshrl.u32 %v3053, 7
    %v3055 = vsub.s32 0, %v3054
    %v3056 = vrot.slane %v3051, %v3055
    %v3059 = vsel %vm94, %v3045, 0
    %v3062 = vsel %vm94, %v3046, 0
    %3064 = vmatprep.subr.mxu0 0.0
    %3065 = vmatpush1.msra.mxu0 %v3047
    %3066 = vmatprep.subr.mxu0 0.0
    %3067 = vmatpush1.msra.mxu0 %v3048
    %3068 = vmatprep.subr.mxu0 0.0
    %3069 = vmatpush1.msra.mxu0 %v3049
    %3070 = vmatprep.subr.mxu0 0.0
    %3071 = vmatpush1.msra.mxu0 %v3050
    %3072 = vmatprep.subr.mxu0 0.0
    %3073 = vmatpush1.msra.mxu0 0.0
    %3074 = vmatprep.subr.mxu0 0.0
    %3075 = vmatpush1.msra.mxu0 0.0
    %3076 = vmatprep.subr.mxu0 0.0
    %3077 = vmatpush1.msra.mxu0 0.0
    %3078 = vmatprep.subr.mxu0 0.0
    %3079 = vmatpush1.msra.mxu0 0.0
    %3080 = vmatprep.subr.mxu0 0.0
    %3081 = vmatpush1.msra.mxu0 0.0
    %3082 = vmatprep.subr.mxu0 0.0
    %3083 = vmatpush1.msra.mxu0 0.0
    %3084 = vmatprep.subr.mxu0 0.0
    %3085 = vmatpush1.msra.mxu0 0.0
    %3086 = vmatprep.subr.mxu0 0.0
    %3087 = vmatpush1.msra.mxu0 0.0
    %3088 = vmatprep.subr.mxu0 0.0
    %3089 = vmatpush1.msra.mxu0 0.0
    %3090 = vmatprep.subr.mxu0 0.0
    %3091 = vmatpush1.msra.mxu0 0.0
    %3092 = vmatprep.subr.mxu0 0.0
    %3093 = vmatpush1.msra.mxu0 0.0
    %3094 = vmatprep.subr.mxu0 0.0
    %3095 = vmatpush1.msra.mxu0 0.0
    %3096 = vmatprep.subr.mxu0 0.0
    %3097 = vmatpush1.msra.mxu0 0.0
    %3098 = vmatprep.subr.mxu0 0.0
    %3099 = vmatpush1.msra.mxu0 0.0
    %3100 = vmatprep.subr.mxu0 0.0
    %3101 = vmatpush1.msra.mxu0 0.0
    %3102 = vmatprep.subr.mxu0 0.0
    %3103 = vmatpush1.msra.mxu0 0.0
    %3104 = vmatprep.subr.mxu0 0.0
    %3105 = vmatpush1.msra.mxu0 0.0
    %3106 = vmatprep.subr.mxu0 0.0
    %3107 = vmatpush1.msra.mxu0 0.0
    %3108 = vmatprep.subr.mxu0 0.0
    %3109 = vmatpush1.msra.mxu0 0.0
    %3110 = vmatprep.subr.mxu0 0.0
    %3111 = vmatpush1.msra.mxu0 0.0
    %3112 = vmatprep.subr.mxu0 0.0
    %3113 = vmatpush1.msra.mxu0 0.0
    %3114 = vmatprep.subr.mxu0 0.0
    %3115 = vmatpush1.msra.mxu0 0.0
    %3116 = vmatprep.subr.mxu0 0.0
    %3117 = vmatpush1.msra.mxu0 0.0
    %3118 = vmatprep.subr.mxu0 0.0
    %3119 = vmatpush1.msra.mxu0 0.0
    %3120 = vmatprep.subr.mxu0 0.0
    %3121 = vmatpush1.msra.mxu0 0.0
    %3122 = vmatprep.subr.mxu0 0.0
    %3123 = vmatpush1.msra.mxu0 0.0
    %3124 = vmatprep.subr.mxu0 0.0
    %3125 = vmatpush1.msra.mxu0 0.0
    %3126 = vmatprep.subr.mxu0 0.0
    %3127 = vmatpush1.msra.mxu0 0.0
    %3128 = vmatprep.mubr.f32.mxu0 0.0
    %3129 = vmatmul.mubr.f32.gmra.mrb[0].mxu0 %v3059
    %v3130 = vpop.f32.mrb[0].mxu0
    %v3131 = vadd.f32 %v3056, %v3130
    %v3132 = vpop.f32.mrb[0].mxu0
    %3133 = vmatprep.mubr.f32.mxu0 0.0
    %3134 = vmatmul.mubr.f32.gmra.mrb[0].mxu0 %v3062
    %v3135 = vpop.f32.mrb[0].mxu0
    %v3136 = vadd.f32 %v3056, %v3135
    %v3137 = vpop.f32.mrb[0].mxu0
    %3138 = vdwg.mxu0
    %v3139 = vtanh.pop %v3131
    %v3140 = vtanh.pop %v3136
    %v3141 = vld [vmem:[%s19] sm:$0xff]
    %v3142 = vld [vmem:[%s19 + $0x8] sm:$0xff]
    %v3143 = vld [vmem:[%s19 + $0x10] sm:$0xff]
    %v3144 = vld [vmem:[%s19 + $0x18] sm:$0xff]
    %v3145 = vld [vmem:[#allocation2] sm:$0x1]
    %v3147 = vlaneseq
    %v3148 = vshrl.u32 %v3147, 7
    %v3149 = vsub.s32 0, %v3148
    %v3150 = vrot.slane %v3145, %v3149
    %v3153 = vsel %vm94, %v3139, 0
    %v3156 = vsel %vm94, %v3140, 0
    %3158 = vmatprep.subr.mxu0 0.0
    %3159 = vmatpush1.msra.mxu0 %v3141
    %3160 = vmatprep.subr.mxu0 0.0
    %3161 = vmatpush1.msra.mxu0 %v3142
    %3162 = vmatprep.subr.mxu0 0.0
    %3163 = vmatpush1.msra.mxu0 %v3143
    %3164 = vmatprep.subr.mxu0 0.0
    %3165 = vmatpush1.msra.mxu0 %v3144
    %3166 = vmatprep.subr.mxu0 0.0
    %3167 = vmatpush1.msra.mxu0 0.0
    %3168 = vmatprep.subr.mxu0 0.0
    %3169 = vmatpush1.msra.mxu0 0.0
    %3170 = vmatprep.subr.mxu0 0.0
    %3171 = vmatpush1.msra.mxu0 0.0
    %3172 = vmatprep.subr.mxu0 0.0
    %3173 = vmatpush1.msra.mxu0 0.0
    %3174 = vmatprep.subr.mxu0 0.0
    %3175 = vmatpush1.msra.mxu0 0.0
    %3176 = vmatprep.subr.mxu0 0.0
    %3177 = vmatpush1.msra.mxu0 0.0
    %3178 = vmatprep.subr.mxu0 0.0
    %3179 = vmatpush1.msra.mxu0 0.0
    %3180 = vmatprep.subr.mxu0 0.0
    %3181 = vmatpush1.msra.mxu0 0.0
    %3182 = vmatprep.subr.mxu0 0.0
    %3183 = vmatpush1.msra.mxu0 0.0
    %3184 = vmatprep.subr.mxu0 0.0
    %3185 = vmatpush1.msra.mxu0 0.0
    %3186 = vmatprep.subr.mxu0 0.0
    %3187 = vmatpush1.msra.mxu0 0.0
    %3188 = vmatprep.subr.mxu0 0.0
    %3189 = vmatpush1.msra.mxu0 0.0
    %3190 = vmatprep.subr.mxu0 0.0
    %3191 = vmatpush1.msra.mxu0 0.0
    %3192 = vmatprep.subr.mxu0 0.0
    %3193 = vmatpush1.msra.mxu0 0.0
    %3194 = vmatprep.subr.mxu0 0.0
    %3195 = vmatpush1.msra.mxu0 0.0
    %3196 = vmatprep.subr.mxu0 0.0
    %3197 = vmatpush1.msra.mxu0 0.0
    %3198 = vmatprep.subr.mxu0 0.0
    %3199 = vmatpush1.msra.mxu0 0.0
    %3200 = vmatprep.subr.mxu0 0.0
    %3201 = vmatpush1.msra.mxu0 0.0
    %3202 = vmatprep.subr.mxu0 0.0
    %3203 = vmatpush1.msra.mxu0 0.0
    %3204 = vmatprep.subr.mxu0 0.0
    %3205 = vmatpush1.msra.mxu0 0.0
    %3206 = vmatprep.subr.mxu0 0.0
    %3207 = vmatpush1.msra.mxu0 0.0
    %3208 = vmatprep.subr.mxu0 0.0
    %3209 = vmatpush1.msra.mxu0 0.0
    %3210 = vmatprep.subr.mxu0 0.0
    %3211 = vmatpush1.msra.mxu0 0.0
    %3212 = vmatprep.subr.mxu0 0.0
    %3213 = vmatpush1.msra.mxu0 0.0
    %3214 = vmatprep.subr.mxu0 0.0
    %3215 = vmatpush1.msra.mxu0 0.0
    %3216 = vmatprep.subr.mxu0 0.0
    %3217 = vmatpush1.msra.mxu0 0.0
    %3218 = vmatprep.subr.mxu0 0.0
    %3219 = vmatpush1.msra.mxu0 0.0
    %3220 = vmatprep.subr.mxu0 0.0
    %3221 = vmatpush1.msra.mxu0 0.0
    %3222 = vmatprep.mubr.f32.mxu0 0.0
    %3223 = vmatmul.mubr.f32.gmra.mrb[0].mxu0 %v3153
    %v3224 = vpop.f32.mrb[0].mxu0
    %v3225 = vadd.f32 %v3150, %v3224
    %v3226 = vpop.f32.mrb[0].mxu0
    %3227 = vmatprep.mubr.f32.mxu0 0.0
    %3228 = vmatmul.mubr.f32.gmra.mrb[0].mxu0 %v3156
    %v3229 = vpop.f32.mrb[0].mxu0
    %v3230 = vadd.f32 %v3150, %v3229
    %v3231 = vpop.f32.mrb[0].mxu0
    %3232 = vdwg.mxu0
    %vm3233 = vcmask 7168
    %v3234 = vsel %vm3233, %v3225, -inf
    %v3235 = vrot.slane %v3234, 4
    %v3236 = vmax.f32 %v3234, %v3235
    %v3237 = vrot.slane %v3236, 2
    %v3238 = vmax.f32 %v3236, %v3237
    %v3239 = vrot.slane %v3238, 1
    %v3240 = vmax.f32 %v3238, %v3239
    %v3241 = vsel %vm3233, %v3230, -inf
    %v3242 = vrot.slane %v3241, 4
    %v3243 = vmax.f32 %v3241, %v3242
    %v3244 = vrot.slane %v3243, 2
    %v3245 = vmax.f32 %v3243, %v3244
    %v3246 = vrot.slane %v3245, 1
    %v3247 = vmax.f32 %v3245, %v3246
    %v3248 = vsub.f32 %v3225, %v3240
    %v3249 = vsub.f32 %v3230, %v3247
    %v3250 = vmul.f32 %v3248, 1.442695
    %v3251 = vpow.pop %v3250
    %v3252 = vmul.f32 %v3249, 1.442695
    %v3253 = vpow.pop %v3252
    %v3254 = vsel %vm3233, %v3251, 0.0
    %v3255 = vrot.slane %v3254, 4
    %v3256 = vadd.f32 %v3254, %v3255
    %v3257 = vrot.slane %v3256, 2
    %v3258 = vadd.f32 %v3256, %v3257
    %v3259 = vrot.slane %v3258, 1
    %v3260 = vadd.f32 %v3258, %v3259
    %v3261 = vsel %vm3233, %v3253, 0.0
    %v3262 = vrot.slane %v3261, 4
    %v3263 = vadd.f32 %v3261, %v3262
    %v3264 = vrot.slane %v3263, 2
    %v3265 = vadd.f32 %v3263, %v3264
    %v3266 = vrot.slane %v3265, 1
    %v3267 = vadd.f32 %v3265, %v3266
    %v3268 = vrcp.pop %v3260
    %v3269 = vrcp.pop %v3267
    %v3270 = vmul.f32 %v3251, %v3268
    %v3271 = vmul.f32 %v3253, %v3269
    %3273 = vset.pattern.permute.xlu0 0
    %3274 = vperm.xlu0 %3273, %v3270
    %v3275 = vpop.permute.xlu0 %3274
    %3278 = vset.pattern.permute.xlu0 0
    %3279 = vperm.xlu0 %3278, %v3271
    %v3280 = vpop.permute.xlu0 %3279
    %v3282 = vmul.f32 %v3275, %v3045
    %v3283 = vmul.f32 %v3280, %v3046
    %v3284 = vsel %vm94, %v3282, 0.0
    %v3285 = vrot.slane %v3284, 4
    %v3286 = vadd.f32 %v3284, %v3285
    %v3287 = vrot.slane %v3286, 2
    %v3288 = vadd.f32 %v3286, %v3287
    %v3289 = vrot.slane %v3288, 1
    %v3290 = vadd.f32 %v3288, %v3289
    %v3291 = vsel %vm94, %v3283, 0.0
    %v3292 = vrot.slane %v3291, 4
    %v3293 = vadd.f32 %v3291, %v3292
    %v3294 = vrot.slane %v3293, 2
    %v3295 = vadd.f32 %v3293, %v3294
    %v3296 = vrot.slane %v3295, 1
    %v3297 = vadd.f32 %v3295, %v3296
    %vm3300 = vcmask 1041409
    %v3301 = vsel %vm3300, %v3297, %v3290
    %vm3303 = vcmask 254976
    %3304 = vst.msk [vmem:[#allocation3] sm:$0x3] %vm3303, %v3301
    // Predicated region
    $region86: #{tpu_custom_call.1} parent=1 // pred_check
      _
    $region87: #{tpu_custom_call.1} parent=1 // pred_check_branch
      %3306 = sbr.rel (0) target = $region89
    $region88: #{tpu_custom_call.1} parent=1 // pred_region
      %s3308 = ssub.s32 32, 32
      %3309 = vsyncadd [#allocation4], %s3308
      %s3311 = sshll.u32 [#allocation3], 4
      %s3312 = int_to_ptr.vmem [resolvable:$true] %s3311
      %3314 = dma.vmem_to_hbm [thread:$0]  %s3312, 32, %s21, [#allocation4]
    $region89: #{tpu_custom_call.1} parent=1 // pred_fallthru
      _
    // Predicated region
    $region90: #{tpu_custom_call.1} parent=1 // pred_check
      _
    $region91: #{tpu_custom_call.1} parent=1 // pred_check_branch
      %3316 = sbr.rel (0) target = $region93
    $region92: #{tpu_custom_call.1} parent=1 // pred_region
      %3317 = dma.done [#allocation4], 32
    $region93: #{tpu_custom_call.1} parent=1 // pred_fallthru
      _
    %3318 = vsyncpa [#allocation4], 1

</llo_original>
